<compile_context>
chip_gen: v7x
topology: tpu7x:2x2x1
jax: 0.10.0
libtpu: 0.0.40
codegen_flags: <defaults>
</compile_context>

<pallas_src>
import functools

import jax
import jax.numpy as jnp
from jax.experimental import pallas as pl
from jax.experimental.pallas import tpu as pltpu

INPUT_SIZE = 28
HIDDEN = 64
NUM_CLASSES = 10
LANE = 128  # lane-dense padded width for the output head


def lstm_kernel(x_ref, wih_ref, whh_ref, b_ref, wout_ref, bout_ref, out_ref,
                *, batch, seq_len):
    H = HIDDEN

    # ---- Prologue (off the serial path) -----------------------------------
    # Input projection for ALL timesteps in one MXU call; bias added once.
    # x_ref: (T*B, F), wih_ref: (F, 4H)  ->  xproj: (T*B, 4H)
    xproj = (jnp.dot(x_ref[...], wih_ref[...],
                     preferred_element_type=jnp.float32)
             + b_ref[...])
    whh = whh_ref[...]  # (H, 4H), loaded once

    h = jnp.zeros((batch, H), jnp.float32)
    c = jnp.zeros((batch, H), jnp.float32)

    # ---- Serial recurrence, fully unrolled (static trip count) ------------
    for t in range(seq_len):
        # Only the recurrent matmul sits on the critical path now.
        gates = (xproj[t * batch:(t + 1) * batch, :]
                 + jnp.dot(h, whh, preferred_element_type=jnp.float32))
        i_g = jax.nn.sigmoid(gates[:, 0 * H:1 * H])
        f_g = jax.nn.sigmoid(gates[:, 1 * H:2 * H])
        g_g = jnp.tanh(gates[:, 2 * H:3 * H])
        o_g = jax.nn.sigmoid(gates[:, 3 * H:4 * H])
        c = f_g * c + i_g * g_g
        h = o_g * jnp.tanh(c)

    # ---- Classifier head (lane-dense, 128-wide padded) ---------------------
    logits = (jnp.dot(h, wout_ref[...], preferred_element_type=jnp.float32)
              + bout_ref[...])
    out_ref[...] = logits.astype(out_ref.dtype)


@jax.jit
def lstm_forward(x, w_ih, w_hh, b_ih, b_hh, w_out, b_out):
    """x: (B, T, 28) batch-first, like the PyTorch module.  Returns (B, 10)."""
    B, T, F = x.shape
    assert F == INPUT_SIZE

    # Flatten time-major so the kernel prologue is a single (T*B, F) @ (F, 4H)
    # matmul and each timestep is a contiguous (B, 4H) row block.
    x2d = jnp.transpose(x, (1, 0, 2)).reshape(T * B, F)

    wih_t = w_ih.T                                   # (F, 4H)
    whh_t = w_hh.T                                   # (H, 4H)
    b = (b_ih + b_hh).reshape(1, 4 * HIDDEN)         # (1, 4H)

    # Zero-pad the output head to a lane-dense 128-wide store.
    wout_p = jnp.zeros((HIDDEN, LANE), jnp.float32).at[:, :NUM_CLASSES].set(w_out.T)
    bout_p = jnp.zeros((1, LANE), jnp.float32).at[:, :NUM_CLASSES].set(b_out)

    vmem = pltpu.MemorySpace.VMEM
    out_p = pl.pallas_call(
        functools.partial(lstm_kernel, batch=B, seq_len=T),
        out_shape=jax.ShapeDtypeStruct((B, LANE), jnp.float32),
        in_specs=[
            pl.BlockSpec(memory_space=vmem),   # x2d      (T*B, F)
            pl.BlockSpec(memory_space=vmem),   # W_ih^T   (F, 4H)
            pl.BlockSpec(memory_space=vmem),   # W_hh^T   (H, 4H)
            pl.BlockSpec(memory_space=vmem),   # bias     (1, 4H)
            pl.BlockSpec(memory_space=vmem),   # W_out^T  (H, 128)
            pl.BlockSpec(memory_space=vmem),   # b_out    (1, 128)
        ],
        out_specs=pl.BlockSpec(memory_space=vmem),
    )(x2d, wih_t, whh_t, b, wout_p, bout_p)

    return out_p[:, :NUM_CLASSES]


def lstm_reference(x, w_ih, w_hh, b_ih, b_hh, w_out, b_out):
    """Pure-JAX reference matching torch.nn.LSTM semantics."""
    B, T, _ = x.shape
    H = HIDDEN

    def step(carry, x_t):
        h, c = carry
        gates = x_t @ w_ih.T + b_ih + h @ w_hh.T + b_hh
        i = jax.nn.sigmoid(gates[:, 0 * H:1 * H])
        f = jax.nn.sigmoid(gates[:, 1 * H:2 * H])
        g = jnp.tanh(gates[:, 2 * H:3 * H])
        o = jax.nn.sigmoid(gates[:, 3 * H:4 * H])
        c = f * c + i * g
        h = o * jnp.tanh(c)
        return (h, c), None

    h0 = jnp.zeros((B, H), jnp.float32)
    c0 = jnp.zeros((B, H), jnp.float32)
    (h_last, _), _ = jax.lax.scan(step, (h0, c0), jnp.transpose(x, (1, 0, 2)))
    return h_last @ w_out.T + b_out


if __name__ == "__main__":
    key = jax.random.PRNGKey(0)
    B, T = 2, 28  # MNIST: 28 rows of 28 pixels

    ks = jax.random.split(key, 8)
    bound = 1.0 / jnp.sqrt(HIDDEN)  # PyTorch default LSTM/Linear init scale
    x = jax.random.normal(ks[0], (B, T, INPUT_SIZE), jnp.float32)
    w_ih = jax.random.uniform(ks[1], (4 * HIDDEN, INPUT_SIZE), jnp.float32, -bound, bound)
    w_hh = jax.random.uniform(ks[2], (4 * HIDDEN, HIDDEN), jnp.float32, -bound, bound)
    b_ih = jax.random.uniform(ks[3], (4 * HIDDEN,), jnp.float32, -bound, bound)
    b_hh = jax.random.uniform(ks[4], (4 * HIDDEN,), jnp.float32, -bound, bound)
    w_out = jax.random.uniform(ks[5], (NUM_CLASSES, HIDDEN), jnp.float32, -bound, bound)
    b_out = jax.random.uniform(ks[6], (NUM_CLASSES,), jnp.float32, -bound, bound)

    out = lstm_forward(x, w_ih, w_hh, b_ih, b_hh, w_out, b_out)
    out = jax.block_until_ready(out)

    ref = lstm_reference(x, w_ih, w_hh, b_ih, b_hh, w_out, b_out)
    assert out.shape == (B, NUM_CLASSES)
    assert jnp.allclose(out, ref, atol=1e-4, rtol=1e-5), "mismatch vs reference"

    print("KERNEL_OK")
</pallas_src>

<mosaic_0001>
module attributes {stable_mosaic.version = 11 : i64} {
  func.func @lstm_kernel(%arg0: memref<56x28xf32, #tpu.memory_space<vmem>>, %arg1: memref<28x256xf32, #tpu.memory_space<vmem>>, %arg2: memref<64x256xf32, #tpu.memory_space<vmem>>, %arg3: memref<1x256xf32, #tpu.memory_space<vmem>>, %arg4: memref<64x128xf32, #tpu.memory_space<vmem>>, %arg5: memref<1x128xf32, #tpu.memory_space<vmem>>, %arg6: memref<2x128xf32, #tpu.memory_space<vmem>>) attributes {dimension_semantics = [], scalar_prefetch = 0 : i64, scratch_operands = 0 : i64, tpu.core_type = #tpu.core_type<tc>} {
    %c0 = arith.constant 0 : index
    %c0_0 = arith.constant 0 : index
    %0 = vector.load %arg0[%c0, %c0_0] : memref<56x28xf32, #tpu.memory_space<vmem>>, vector<56x28xf32>
    %c0_1 = arith.constant 0 : index
    %c0_2 = arith.constant 0 : index
    %1 = vector.load %arg1[%c0_1, %c0_2] : memref<28x256xf32, #tpu.memory_space<vmem>>, vector<28x256xf32>
    %cst = arith.constant dense<0.000000e+00> : vector<56x256xf32>
    %2 = tpu.matmul %0, %1, %cst {dimension_numbers = #tpu.dot_dimension_numbers<[1], [0], [0], [1], [0, 0, 1, 1], [], []>} : vector<56x28xf32>, vector<28x256xf32>, vector<56x256xf32> -> vector<56x256xf32>
    %c0_3 = arith.constant 0 : index
    %c0_4 = arith.constant 0 : index
    %3 = vector.load %arg3[%c0_3, %c0_4] : memref<1x256xf32, #tpu.memory_space<vmem>>, vector<1x256xf32>
    %4 = vector.broadcast %3 : vector<1x256xf32> to vector<56x256xf32>
    %5 = arith.addf %2, %4 : vector<56x256xf32>
    %c0_5 = arith.constant 0 : index
    %c0_6 = arith.constant 0 : index
    %6 = vector.load %arg2[%c0_5, %c0_6] : memref<64x256xf32, #tpu.memory_space<vmem>>, vector<64x256xf32>
    %cst_7 = arith.constant 0.000000e+00 : f32
    %7 = vector.broadcast %cst_7 : f32 to vector<2x64xf32>
    %cst_8 = arith.constant 0.000000e+00 : f32
    %8 = vector.broadcast %cst_8 : f32 to vector<2x64xf32>
    %9 = vector.extract_strided_slice %5 {offsets = [0, 0], sizes = [2, 256], strides = [1, 1]} : vector<56x256xf32> to vector<2x256xf32>
    %cst_9 = arith.constant dense<0.000000e+00> : vector<2x256xf32>
    %10 = tpu.matmul %7, %6, %cst_9 {dimension_numbers = #tpu.dot_dimension_numbers<[1], [0], [0], [1], [0, 0, 1, 1], [], []>} : vector<2x64xf32>, vector<64x256xf32>, vector<2x256xf32> -> vector<2x256xf32>
    %11 = arith.addf %9, %10 : vector<2x256xf32>
    %12 = vector.extract_strided_slice %11 {offsets = [0, 0], sizes = [2, 64], strides = [1, 1]} : vector<2x256xf32> to vector<2x64xf32>
    %13 = arith.negf %12 : vector<2x64xf32>
    %14 = math.exp %13 : vector<2x64xf32>
    %cst_10 = arith.constant 1.000000e+00 : f32
    %15 = vector.broadcast %cst_10 : f32 to vector<2x64xf32>
    %16 = arith.addf %15, %14 : vector<2x64xf32>
    %17 = arith.divf %15, %16 : vector<2x64xf32>
    %18 = vector.extract_strided_slice %11 {offsets = [0, 64], sizes = [2, 64], strides = [1, 1]} : vector<2x256xf32> to vector<2x64xf32>
    %19 = arith.negf %18 : vector<2x64xf32>
    %20 = math.exp %19 : vector<2x64xf32>
    %cst_11 = arith.constant 1.000000e+00 : f32
    %21 = vector.broadcast %cst_11 : f32 to vector<2x64xf32>
    %22 = arith.addf %21, %20 : vector<2x64xf32>
    %23 = arith.divf %21, %22 : vector<2x64xf32>
    %24 = vector.extract_strided_slice %11 {offsets = [0, 128], sizes = [2, 64], strides = [1, 1]} : vector<2x256xf32> to vector<2x64xf32>
    %25 = math.tanh %24 : vector<2x64xf32>
    %26 = vector.extract_strided_slice %11 {offsets = [0, 192], sizes = [2, 64], strides = [1, 1]} : vector<2x256xf32> to vector<2x64xf32>
    %27 = arith.negf %26 : vector<2x64xf32>
    %28 = math.exp %27 : vector<2x64xf32>
    %cst_12 = arith.constant 1.000000e+00 : f32
    %29 = vector.broadcast %cst_12 : f32 to vector<2x64xf32>
    %30 = arith.addf %29, %28 : vector<2x64xf32>
    %31 = arith.divf %29, %30 : vector<2x64xf32>
    %32 = arith.mulf %23, %8 : vector<2x64xf32>
    %33 = arith.mulf %17, %25 : vector<2x64xf32>
    %34 = arith.addf %32, %33 : vector<2x64xf32>
    %35 = math.tanh %34 : vector<2x64xf32>
    %36 = arith.mulf %31, %35 : vector<2x64xf32>
    %37 = vector.extract_strided_slice %5 {offsets = [2, 0], sizes = [2, 256], strides = [1, 1]} : vector<56x256xf32> to vector<2x256xf32>
    %cst_13 = arith.constant dense<0.000000e+00> : vector<2x256xf32>
    %38 = tpu.matmul %36, %6, %cst_13 {dimension_numbers = #tpu.dot_dimension_numbers<[1], [0], [0], [1], [0, 0, 1, 1], [], []>} : vector<2x64xf32>, vector<64x256xf32>, vector<2x256xf32> -> vector<2x256xf32>
    %39 = arith.addf %37, %38 : vector<2x256xf32>
    %40 = vector.extract_strided_slice %39 {offsets = [0, 0], sizes = [2, 64], strides = [1, 1]} : vector<2x256xf32> to vector<2x64xf32>
    %41 = arith.negf %40 : vector<2x64xf32>
    %42 = math.exp %41 : vector<2x64xf32>
    %cst_14 = arith.constant 1.000000e+00 : f32
    %43 = vector.broadcast %cst_14 : f32 to vector<2x64xf32>
    %44 = arith.addf %43, %42 : vector<2x64xf32>
    %45 = arith.divf %43, %44 : vector<2x64xf32>
    %46 = vector.extract_strided_slice %39 {offsets = [0, 64], sizes = [2, 64], strides = [1, 1]} : vector<2x256xf32> to vector<2x64xf32>
    %47 = arith.negf %46 : vector<2x64xf32>
    %48 = math.exp %47 : vector<2x64xf32>
    %cst_15 = arith.constant 1.000000e+00 : f32
    %49 = vector.broadcast %cst_15 : f32 to vector<2x64xf32>
    %50 = arith.addf %49, %48 : vector<2x64xf32>
    %51 = arith.divf %49, %50 : vector<2x64xf32>
    %52 = vector.extract_strided_slice %39 {offsets = [0, 128], sizes = [2, 64], strides = [1, 1]} : vector<2x256xf32> to vector<2x64xf32>
    %53 = math.tanh %52 : vector<2x64xf32>
    %54 = vector.extract_strided_slice %39 {offsets = [0, 192], sizes = [2, 64], strides = [1, 1]} : vector<2x256xf32> to vector<2x64xf32>
    %55 = arith.negf %54 : vector<2x64xf32>
    %56 = math.exp %55 : vector<2x64xf32>
    %cst_16 = arith.constant 1.000000e+00 : f32
    %57 = vector.broadcast %cst_16 : f32 to vector<2x64xf32>
    %58 = arith.addf %57, %56 : vector<2x64xf32>
    %59 = arith.divf %57, %58 : vector<2x64xf32>
    %60 = arith.mulf %51, %34 : vector<2x64xf32>
    %61 = arith.mulf %45, %53 : vector<2x64xf32>
    %62 = arith.addf %60, %61 : vector<2x64xf32>
    %63 = math.tanh %62 : vector<2x64xf32>
    %64 = arith.mulf %59, %63 : vector<2x64xf32>
    %65 = vector.extract_strided_slice %5 {offsets = [4, 0], sizes = [2, 256], strides = [1, 1]} : vector<56x256xf32> to vector<2x256xf32>
    %cst_17 = arith.constant dense<0.000000e+00> : vector<2x256xf32>
    %66 = tpu.matmul %64, %6, %cst_17 {dimension_numbers = #tpu.dot_dimension_numbers<[1], [0], [0], [1], [0, 0, 1, 1], [], []>} : vector<2x64xf32>, vector<64x256xf32>, vector<2x256xf32> -> vector<2x256xf32>
    %67 = arith.addf %65, %66 : vector<2x256xf32>
    %68 = vector.extract_strided_slice %67 {offsets = [0, 0], sizes = [2, 64], strides = [1, 1]} : vector<2x256xf32> to vector<2x64xf32>
    %69 = arith.negf %68 : vector<2x64xf32>
    %70 = math.exp %69 : vector<2x64xf32>
    %cst_18 = arith.constant 1.000000e+00 : f32
    %71 = vector.broadcast %cst_18 : f32 to vector<2x64xf32>
    %72 = arith.addf %71, %70 : vector<2x64xf32>
    %73 = arith.divf %71, %72 : vector<2x64xf32>
    %74 = vector.extract_strided_slice %67 {offsets = [0, 64], sizes = [2, 64], strides = [1, 1]} : vector<2x256xf32> to vector<2x64xf32>
    %75 = arith.negf %74 : vector<2x64xf32>
    %76 = math.exp %75 : vector<2x64xf32>
    %cst_19 = arith.constant 1.000000e+00 : f32
    %77 = vector.broadcast %cst_19 : f32 to vector<2x64xf32>
    %78 = arith.addf %77, %76 : vector<2x64xf32>
    %79 = arith.divf %77, %78 : vector<2x64xf32>
    %80 = vector.extract_strided_slice %67 {offsets = [0, 128], sizes = [2, 64], strides = [1, 1]} : vector<2x256xf32> to vector<2x64xf32>
    %81 = math.tanh %80 : vector<2x64xf32>
    %82 = vector.extract_strided_slice %67 {offsets = [0, 192], sizes = [2, 64], strides = [1, 1]} : vector<2x256xf32> to vector<2x64xf32>
    %83 = arith.negf %82 : vector<2x64xf32>
    %84 = math.exp %83 : vector<2x64xf32>
    %cst_20 = arith.constant 1.000000e+00 : f32
    %85 = vector.broadcast %cst_20 : f32 to vector<2x64xf32>
    %86 = arith.addf %85, %84 : vector<2x64xf32>
    %87 = arith.divf %85, %86 : vector<2x64xf32>
    %88 = arith.mulf %79, %62 : vector<2x64xf32>
    %89 = arith.mulf %73, %81 : vector<2x64xf32>
    %90 = arith.addf %88, %89 : vector<2x64xf32>
    %91 = math.tanh %90 : vector<2x64xf32>
    %92 = arith.mulf %87, %91 : vector<2x64xf32>
    %93 = vector.extract_strided_slice %5 {offsets = [6, 0], sizes = [2, 256], strides = [1, 1]} : vector<56x256xf32> to vector<2x256xf32>
    %cst_21 = arith.constant dense<0.000000e+00> : vector<2x256xf32>
    %94 = tpu.matmul %92, %6, %cst_21 {dimension_numbers = #tpu.dot_dimension_numbers<[1], [0], [0], [1], [0, 0, 1, 1], [], []>} : vector<2x64xf32>, vector<64x256xf32>, vector<2x256xf32> -> vector<2x256xf32>
    %95 = arith.addf %93, %94 : vector<2x256xf32>
    %96 = vector.extract_strided_slice %95 {offsets = [0, 0], sizes = [2, 64], strides = [1, 1]} : vector<2x256xf32> to vector<2x64xf32>
    %97 = arith.negf %96 : vector<2x64xf32>
    %98 = math.exp %97 : vector<2x64xf32>
    %cst_22 = arith.constant 1.000000e+00 : f32
    %99 = vector.broadcast %cst_22 : f32 to vector<2x64xf32>
    %100 = arith.addf %99, %98 : vector<2x64xf32>
    %101 = arith.divf %99, %100 : vector<2x64xf32>
    %102 = vector.extract_strided_slice %95 {offsets = [0, 64], sizes = [2, 64], strides = [1, 1]} : vector<2x256xf32> to vector<2x64xf32>
    %103 = arith.negf %102 : vector<2x64xf32>
    %104 = math.exp %103 : vector<2x64xf32>
    %cst_23 = arith.constant 1.000000e+00 : f32
    %105 = vector.broadcast %cst_23 : f32 to vector<2x64xf32>
    %106 = arith.addf %105, %104 : vector<2x64xf32>
    %107 = arith.divf %105, %106 : vector<2x64xf32>
    %108 = vector.extract_strided_slice %95 {offsets = [0, 128], sizes = [2, 64], strides = [1, 1]} : vector<2x256xf32> to vector<2x64xf32>
    %109 = math.tanh %108 : vector<2x64xf32>
    %110 = vector.extract_strided_slice %95 {offsets = [0, 192], sizes = [2, 64], strides = [1, 1]} : vector<2x256xf32> to vector<2x64xf32>
    %111 = arith.negf %110 : vector<2x64xf32>
    %112 = math.exp %111 : vector<2x64xf32>
    %cst_24 = arith.constant 1.000000e+00 : f32
    %113 = vector.broadcast %cst_24 : f32 to vector<2x64xf32>
    %114 = arith.addf %113, %112 : vector<2x64xf32>
    %115 = arith.divf %113, %114 : vector<2x64xf32>
    %116 = arith.mulf %107, %90 : vector<2x64xf32>
    %117 = arith.mulf %101, %109 : vector<2x64xf32>
    %118 = arith.addf %116, %117 : vector<2x64xf32>
    %119 = math.tanh %118 : vector<2x64xf32>
    %120 = arith.mulf %115, %119 : vector<2x64xf32>
    %121 = vector.extract_strided_slice %5 {offsets = [8, 0], sizes = [2, 256], strides = [1, 1]} : vector<56x256xf32> to vector<2x256xf32>
    %cst_25 = arith.constant dense<0.000000e+00> : vector<2x256xf32>
    %122 = tpu.matmul %120, %6, %cst_25 {dimension_numbers = #tpu.dot_dimension_numbers<[1], [0], [0], [1], [0, 0, 1, 1], [], []>} : vector<2x64xf32>, vector<64x256xf32>, vector<2x256xf32> -> vector<2x256xf32>
    %123 = arith.addf %121, %122 : vector<2x256xf32>
    %124 = vector.extract_strided_slice %123 {offsets = [0, 0], sizes = [2, 64], strides = [1, 1]} : vector<2x256xf32> to vector<2x64xf32>
    %125 = arith.negf %124 : vector<2x64xf32>
    %126 = math.exp %125 : vector<2x64xf32>
    %cst_26 = arith.constant 1.000000e+00 : f32
    %127 = vector.broadcast %cst_26 : f32 to vector<2x64xf32>
    %128 = arith.addf %127, %126 : vector<2x64xf32>
    %129 = arith.divf %127, %128 : vector<2x64xf32>
    %130 = vector.extract_strided_slice %123 {offsets = [0, 64], sizes = [2, 64], strides = [1, 1]} : vector<2x256xf32> to vector<2x64xf32>
    %131 = arith.negf %130 : vector<2x64xf32>
    %132 = math.exp %131 : vector<2x64xf32>
    %cst_27 = arith.constant 1.000000e+00 : f32
    %133 = vector.broadcast %cst_27 : f32 to vector<2x64xf32>
    %134 = arith.addf %133, %132 : vector<2x64xf32>
    %135 = arith.divf %133, %134 : vector<2x64xf32>
    %136 = vector.extract_strided_slice %123 {offsets = [0, 128], sizes = [2, 64], strides = [1, 1]} : vector<2x256xf32> to vector<2x64xf32>
    %137 = math.tanh %136 : vector<2x64xf32>
    %138 = vector.extract_strided_slice %123 {offsets = [0, 192], sizes = [2, 64], strides = [1, 1]} : vector<2x256xf32> to vector<2x64xf32>
    %139 = arith.negf %138 : vector<2x64xf32>
    %140 = math.exp %139 : vector<2x64xf32>
    %cst_28 = arith.constant 1.000000e+00 : f32
    %141 = vector.broadcast %cst_28 : f32 to vector<2x64xf32>
    %142 = arith.addf %141, %140 : vector<2x64xf32>
    %143 = arith.divf %141, %142 : vector<2x64xf32>
    %144 = arith.mulf %135, %118 : vector<2x64xf32>
    %145 = arith.mulf %129, %137 : vector<2x64xf32>
    %146 = arith.addf %144, %145 : vector<2x64xf32>
    %147 = math.tanh %146 : vector<2x64xf32>
    %148 = arith.mulf %143, %147 : vector<2x64xf32>
    %149 = vector.extract_strided_slice %5 {offsets = [10, 0], sizes = [2, 256], strides = [1, 1]} : vector<56x256xf32> to vector<2x256xf32>
    %cst_29 = arith.constant dense<0.000000e+00> : vector<2x256xf32>
    %150 = tpu.matmul %148, %6, %cst_29 {dimension_numbers = #tpu.dot_dimension_numbers<[1], [0], [0], [1], [0, 0, 1, 1], [], []>} : vector<2x64xf32>, vector<64x256xf32>, vector<2x256xf32> -> vector<2x256xf32>
    %151 = arith.addf %149, %150 : vector<2x256xf32>
    %152 = vector.extract_strided_slice %151 {offsets = [0, 0], sizes = [2, 64], strides = [1, 1]} : vector<2x256xf32> to vector<2x64xf32>
    %153 = arith.negf %152 : vector<2x64xf32>
    %154 = math.exp %153 : vector<2x64xf32>
    %cst_30 = arith.constant 1.000000e+00 : f32
    %155 = vector.broadcast %cst_30 : f32 to vector<2x64xf32>
    %156 = arith.addf %155, %154 : vector<2x64xf32>
    %157 = arith.divf %155, %156 : vector<2x64xf32>
    %158 = vector.extract_strided_slice %151 {offsets = [0, 64], sizes = [2, 64], strides = [1, 1]} : vector<2x256xf32> to vector<2x64xf32>
    %159 = arith.negf %158 : vector<2x64xf32>
    %160 = math.exp %159 : vector<2x64xf32>
    %cst_31 = arith.constant 1.000000e+00 : f32
    %161 = vector.broadcast %cst_31 : f32 to vector<2x64xf32>
    %162 = arith.addf %161, %160 : vector<2x64xf32>
    %163 = arith.divf %161, %162 : vector<2x64xf32>
    %164 = vector.extract_strided_slice %151 {offsets = [0, 128], sizes = [2, 64], strides = [1, 1]} : vector<2x256xf32> to vector<2x64xf32>
    %165 = math.tanh %164 : vector<2x64xf32>
    %166 = vector.extract_strided_slice %151 {offsets = [0, 192], sizes = [2, 64], strides = [1, 1]} : vector<2x256xf32> to vector<2x64xf32>
    %167 = arith.negf %166 : vector<2x64xf32>
    %168 = math.exp %167 : vector<2x64xf32>
    %cst_32 = arith.constant 1.000000e+00 : f32
    %169 = vector.broadcast %cst_32 : f32 to vector<2x64xf32>
    %170 = arith.addf %169, %168 : vector<2x64xf32>
    %171 = arith.divf %169, %170 : vector<2x64xf32>
    %172 = arith.mulf %163, %146 : vector<2x64xf32>
    %173 = arith.mulf %157, %165 : vector<2x64xf32>
    %174 = arith.addf %172, %173 : vector<2x64xf32>
    %175 = math.tanh %174 : vector<2x64xf32>
    %176 = arith.mulf %171, %175 : vector<2x64xf32>
    %177 = vector.extract_strided_slice %5 {offsets = [12, 0], sizes = [2, 256], strides = [1, 1]} : vector<56x256xf32> to vector<2x256xf32>
    %cst_33 = arith.constant dense<0.000000e+00> : vector<2x256xf32>
    %178 = tpu.matmul %176, %6, %cst_33 {dimension_numbers = #tpu.dot_dimension_numbers<[1], [0], [0], [1], [0, 0, 1, 1], [], []>} : vector<2x64xf32>, vector<64x256xf32>, vector<2x256xf32> -> vector<2x256xf32>
    %179 = arith.addf %177, %178 : vector<2x256xf32>
    %180 = vector.extract_strided_slice %179 {offsets = [0, 0], sizes = [2, 64], strides = [1, 1]} : vector<2x256xf32> to vector<2x64xf32>
    %181 = arith.negf %180 : vector<2x64xf32>
    %182 = math.exp %181 : vector<2x64xf32>
    %cst_34 = arith.constant 1.000000e+00 : f32
    %183 = vector.broadcast %cst_34 : f32 to vector<2x64xf32>
    %184 = arith.addf %183, %182 : vector<2x64xf32>
    %185 = arith.divf %183, %184 : vector<2x64xf32>
    %186 = vector.extract_strided_slice %179 {offsets = [0, 64], sizes = [2, 64], strides = [1, 1]} : vector<2x256xf32> to vector<2x64xf32>
    %187 = arith.negf %186 : vector<2x64xf32>
    %188 = math.exp %187 : vector<2x64xf32>
    %cst_35 = arith.constant 1.000000e+00 : f32
    %189 = vector.broadcast %cst_35 : f32 to vector<2x64xf32>
    %190 = arith.addf %189, %188 : vector<2x64xf32>
    %191 = arith.divf %189, %190 : vector<2x64xf32>
    %192 = vector.extract_strided_slice %179 {offsets = [0, 128], sizes = [2, 64], strides = [1, 1]} : vector<2x256xf32> to vector<2x64xf32>
    %193 = math.tanh %192 : vector<2x64xf32>
    %194 = vector.extract_strided_slice %179 {offsets = [0, 192], sizes = [2, 64], strides = [1, 1]} : vector<2x256xf32> to vector<2x64xf32>
    %195 = arith.negf %194 : vector<2x64xf32>
    %196 = math.exp %195 : vector<2x64xf32>
    %cst_36 = arith.constant 1.000000e+00 : f32
    %197 = vector.broadcast %cst_36 : f32 to vector<2x64xf32>
    %198 = arith.addf %197, %196 : vector<2x64xf32>
    %199 = arith.divf %197, %198 : vector<2x64xf32>
    %200 = arith.mulf %191, %174 : vector<2x64xf32>
    %201 = arith.mulf %185, %193 : vector<2x64xf32>
    %202 = arith.addf %200, %201 : vector<2x64xf32>
    %203 = math.tanh %202 : vector<2x64xf32>
    %204 = arith.mulf %199, %203 : vector<2x64xf32>
    %205 = vector.extract_strided_slice %5 {offsets = [14, 0], sizes = [2, 256], strides = [1, 1]} : vector<56x256xf32> to vector<2x256xf32>
    %cst_37 = arith.constant dense<0.000000e+00> : vector<2x256xf32>
    %206 = tpu.matmul %204, %6, %cst_37 {dimension_numbers = #tpu.dot_dimension_numbers<[1], [0], [0], [1], [0, 0, 1, 1], [], []>} : vector<2x64xf32>, vector<64x256xf32>, vector<2x256xf32> -> vector<2x256xf32>
    %207 = arith.addf %205, %206 : vector<2x256xf32>
    %208 = vector.extract_strided_slice %207 {offsets = [0, 0], sizes = [2, 64], strides = [1, 1]} : vector<2x256xf32> to vector<2x64xf32>
    %209 = arith.negf %208 : vector<2x64xf32>
    %210 = math.exp %209 : vector<2x64xf32>
    %cst_38 = arith.constant 1.000000e+00 : f32
    %211 = vector.broadcast %cst_38 : f32 to vector<2x64xf32>
    %212 = arith.addf %211, %210 : vector<2x64xf32>
    %213 = arith.divf %211, %212 : vector<2x64xf32>
    %214 = vector.extract_strided_slice %207 {offsets = [0, 64], sizes = [2, 64], strides = [1, 1]} : vector<2x256xf32> to vector<2x64xf32>
    %215 = arith.negf %214 : vector<2x64xf32>
    %216 = math.exp %215 : vector<2x64xf32>
    %cst_39 = arith.constant 1.000000e+00 : f32
    %217 = vector.broadcast %cst_39 : f32 to vector<2x64xf32>
    %218 = arith.addf %217, %216 : vector<2x64xf32>
    %219 = arith.divf %217, %218 : vector<2x64xf32>
    %220 = vector.extract_strided_slice %207 {offsets = [0, 128], sizes = [2, 64], strides = [1, 1]} : vector<2x256xf32> to vector<2x64xf32>
    %221 = math.tanh %220 : vector<2x64xf32>
    %222 = vector.extract_strided_slice %207 {offsets = [0, 192], sizes = [2, 64], strides = [1, 1]} : vector<2x256xf32> to vector<2x64xf32>
    %223 = arith.negf %222 : vector<2x64xf32>
    %224 = math.exp %223 : vector<2x64xf32>
    %cst_40 = arith.constant 1.000000e+00 : f32
    %225 = vector.broadcast %cst_40 : f32 to vector<2x64xf32>
    %226 = arith.addf %225, %224 : vector<2x64xf32>
    %227 = arith.divf %225, %226 : vector<2x64xf32>
    %228 = arith.mulf %219, %202 : vector<2x64xf32>
    %229 = arith.mulf %213, %221 : vector<2x64xf32>
    %230 = arith.addf %228, %229 : vector<2x64xf32>
    %231 = math.tanh %230 : vector<2x64xf32>
    %232 = arith.mulf %227, %231 : vector<2x64xf32>
    %233 = vector.extract_strided_slice %5 {offsets = [16, 0], sizes = [2, 256], strides = [1, 1]} : vector<56x256xf32> to vector<2x256xf32>
    %cst_41 = arith.constant dense<0.000000e+00> : vector<2x256xf32>
    %234 = tpu.matmul %232, %6, %cst_41 {dimension_numbers = #tpu.dot_dimension_numbers<[1], [0], [0], [1], [0, 0, 1, 1], [], []>} : vector<2x64xf32>, vector<64x256xf32>, vector<2x256xf32> -> vector<2x256xf32>
    %235 = arith.addf %233, %234 : vector<2x256xf32>
    %236 = vector.extract_strided_slice %235 {offsets = [0, 0], sizes = [2, 64], strides = [1, 1]} : vector<2x256xf32> to vector<2x64xf32>
    %237 = arith.negf %236 : vector<2x64xf32>
    %238 = math.exp %237 : vector<2x64xf32>
    %cst_42 = arith.constant 1.000000e+00 : f32
    %239 = vector.broadcast %cst_42 : f32 to vector<2x64xf32>
    %240 = arith.addf %239, %238 : vector<2x64xf32>
    %241 = arith.divf %239, %240 : vector<2x64xf32>
    %242 = vector.extract_strided_slice %235 {offsets = [0, 64], sizes = [2, 64], strides = [1, 1]} : vector<2x256xf32> to vector<2x64xf32>
    %243 = arith.negf %242 : vector<2x64xf32>
    %244 = math.exp %243 : vector<2x64xf32>
    %cst_43 = arith.constant 1.000000e+00 : f32
    %245 = vector.broadcast %cst_43 : f32 to vector<2x64xf32>
    %246 = arith.addf %245, %244 : vector<2x64xf32>
    %247 = arith.divf %245, %246 : vector<2x64xf32>
    %248 = vector.extract_strided_slice %235 {offsets = [0, 128], sizes = [2, 64], strides = [1, 1]} : vector<2x256xf32> to vector<2x64xf32>
    %249 = math.tanh %248 : vector<2x64xf32>
    %250 = vector.extract_strided_slice %235 {offsets = [0, 192], sizes = [2, 64], strides = [1, 1]} : vector<2x256xf32> to vector<2x64xf32>
    %251 = arith.negf %250 : vector<2x64xf32>
    %252 = math.exp %251 : vector<2x64xf32>
    %cst_44 = arith.constant 1.000000e+00 : f32
    %253 = vector.broadcast %cst_44 : f32 to vector<2x64xf32>
    %254 = arith.addf %253, %252 : vector<2x64xf32>
    %255 = arith.divf %253, %254 : vector<2x64xf32>
    %256 = arith.mulf %247, %230 : vector<2x64xf32>
    %257 = arith.mulf %241, %249 : vector<2x64xf32>
    %258 = arith.addf %256, %257 : vector<2x64xf32>
    %259 = math.tanh %258 : vector<2x64xf32>
    %260 = arith.mulf %255, %259 : vector<2x64xf32>
    %261 = vector.extract_strided_slice %5 {offsets = [18, 0], sizes = [2, 256], strides = [1, 1]} : vector<56x256xf32> to vector<2x256xf32>
    %cst_45 = arith.constant dense<0.000000e+00> : vector<2x256xf32>
    %262 = tpu.matmul %260, %6, %cst_45 {dimension_numbers = #tpu.dot_dimension_numbers<[1], [0], [0], [1], [0, 0, 1, 1], [], []>} : vector<2x64xf32>, vector<64x256xf32>, vector<2x256xf32> -> vector<2x256xf32>
    %263 = arith.addf %261, %262 : vector<2x256xf32>
    %264 = vector.extract_strided_slice %263 {offsets = [0, 0], sizes = [2, 64], strides = [1, 1]} : vector<2x256xf32> to vector<2x64xf32>
    %265 = arith.negf %264 : vector<2x64xf32>
    %266 = math.exp %265 : vector<2x64xf32>
    %cst_46 = arith.constant 1.000000e+00 : f32
    %267 = vector.broadcast %cst_46 : f32 to vector<2x64xf32>
    %268 = arith.addf %267, %266 : vector<2x64xf32>
    %269 = arith.divf %267, %268 : vector<2x64xf32>
    %270 = vector.extract_strided_slice %263 {offsets = [0, 64], sizes = [2, 64], strides = [1, 1]} : vector<2x256xf32> to vector<2x64xf32>
    %271 = arith.negf %270 : vector<2x64xf32>
    %272 = math.exp %271 : vector<2x64xf32>
    %cst_47 = arith.constant 1.000000e+00 : f32
    %273 = vector.broadcast %cst_47 : f32 to vector<2x64xf32>
    %274 = arith.addf %273, %272 : vector<2x64xf32>
    %275 = arith.divf %273, %274 : vector<2x64xf32>
    %276 = vector.extract_strided_slice %263 {offsets = [0, 128], sizes = [2, 64], strides = [1, 1]} : vector<2x256xf32> to vector<2x64xf32>
    %277 = math.tanh %276 : vector<2x64xf32>
    %278 = vector.extract_strided_slice %263 {offsets = [0, 192], sizes = [2, 64], strides = [1, 1]} : vector<2x256xf32> to vector<2x64xf32>
    %279 = arith.negf %278 : vector<2x64xf32>
    %280 = math.exp %279 : vector<2x64xf32>
    %cst_48 = arith.constant 1.000000e+00 : f32
    %281 = vector.broadcast %cst_48 : f32 to vector<2x64xf32>
    %282 = arith.addf %281, %280 : vector<2x64xf32>
    %283 = arith.divf %281, %282 : vector<2x64xf32>
    %284 = arith.mulf %275, %258 : vector<2x64xf32>
    %285 = arith.mulf %269, %277 : vector<2x64xf32>
    %286 = arith.addf %284, %285 : vector<2x64xf32>
    %287 = math.tanh %286 : vector<2x64xf32>
    %288 = arith.mulf %283, %287 : vector<2x64xf32>
    %289 = vector.extract_strided_slice %5 {offsets = [20, 0], sizes = [2, 256], strides = [1, 1]} : vector<56x256xf32> to vector<2x256xf32>
    %cst_49 = arith.constant dense<0.000000e+00> : vector<2x256xf32>
    %290 = tpu.matmul %288, %6, %cst_49 {dimension_numbers = #tpu.dot_dimension_numbers<[1], [0], [0], [1], [0, 0, 1, 1], [], []>} : vector<2x64xf32>, vector<64x256xf32>, vector<2x256xf32> -> vector<2x256xf32>
    %291 = arith.addf %289, %290 : vector<2x256xf32>
    %292 = vector.extract_strided_slice %291 {offsets = [0, 0], sizes = [2, 64], strides = [1, 1]} : vector<2x256xf32> to vector<2x64xf32>
    %293 = arith.negf %292 : vector<2x64xf32>
    %294 = math.exp %293 : vector<2x64xf32>
    %cst_50 = arith.constant 1.000000e+00 : f32
    %295 = vector.broadcast %cst_50 : f32 to vector<2x64xf32>
    %296 = arith.addf %295, %294 : vector<2x64xf32>
    %297 = arith.divf %295, %296 : vector<2x64xf32>
    %298 = vector.extract_strided_slice %291 {offsets = [0, 64], sizes = [2, 64], strides = [1, 1]} : vector<2x256xf32> to vector<2x64xf32>
    %299 = arith.negf %298 : vector<2x64xf32>
    %300 = math.exp %299 : vector<2x64xf32>
    %cst_51 = arith.constant 1.000000e+00 : f32
    %301 = vector.broadcast %cst_51 : f32 to vector<2x64xf32>
    %302 = arith.addf %301, %300 : vector<2x64xf32>
    %303 = arith.divf %301, %302 : vector<2x64xf32>
    %304 = vector.extract_strided_slice %291 {offsets = [0, 128], sizes = [2, 64], strides = [1, 1]} : vector<2x256xf32> to vector<2x64xf32>
    %305 = math.tanh %304 : vector<2x64xf32>
    %306 = vector.extract_strided_slice %291 {offsets = [0, 192], sizes = [2, 64], strides = [1, 1]} : vector<2x256xf32> to vector<2x64xf32>
    %307 = arith.negf %306 : vector<2x64xf32>
    %308 = math.exp %307 : vector<2x64xf32>
    %cst_52 = arith.constant 1.000000e+00 : f32
    %309 = vector.broadcast %cst_52 : f32 to vector<2x64xf32>
    %310 = arith.addf %309, %308 : vector<2x64xf32>
    %311 = arith.divf %309, %310 : vector<2x64xf32>
    %312 = arith.mulf %303, %286 : vector<2x64xf32>
    %313 = arith.mulf %297, %305 : vector<2x64xf32>
    %314 = arith.addf %312, %313 : vector<2x64xf32>
    %315 = math.tanh %314 : vector<2x64xf32>
    %316 = arith.mulf %311, %315 : vector<2x64xf32>
    %317 = vector.extract_strided_slice %5 {offsets = [22, 0], sizes = [2, 256], strides = [1, 1]} : vector<56x256xf32> to vector<2x256xf32>
    %cst_53 = arith.constant dense<0.000000e+00> : vector<2x256xf32>
    %318 = tpu.matmul %316, %6, %cst_53 {dimension_numbers = #tpu.dot_dimension_numbers<[1], [0], [0], [1], [0, 0, 1, 1], [], []>} : vector<2x64xf32>, vector<64x256xf32>, vector<2x256xf32> -> vector<2x256xf32>
    %319 = arith.addf %317, %318 : vector<2x256xf32>
    %320 = vector.extract_strided_slice %319 {offsets = [0, 0], sizes = [2, 64], strides = [1, 1]} : vector<2x256xf32> to vector<2x64xf32>
    %321 = arith.negf %320 : vector<2x64xf32>
    %322 = math.exp %321 : vector<2x64xf32>
    %cst_54 = arith.constant 1.000000e+00 : f32
    %323 = vector.broadcast %cst_54 : f32 to vector<2x64xf32>
    %324 = arith.addf %323, %322 : vector<2x64xf32>
    %325 = arith.divf %323, %324 : vector<2x64xf32>
    %326 = vector.extract_strided_slice %319 {offsets = [0, 64], sizes = [2, 64], strides = [1, 1]} : vector<2x256xf32> to vector<2x64xf32>
    %327 = arith.negf %326 : vector<2x64xf32>
    %328 = math.exp %327 : vector<2x64xf32>
    %cst_55 = arith.constant 1.000000e+00 : f32
    %329 = vector.broadcast %cst_55 : f32 to vector<2x64xf32>
    %330 = arith.addf %329, %328 : vector<2x64xf32>
    %331 = arith.divf %329, %330 : vector<2x64xf32>
    %332 = vector.extract_strided_slice %319 {offsets = [0, 128], sizes = [2, 64], strides = [1, 1]} : vector<2x256xf32> to vector<2x64xf32>
    %333 = math.tanh %332 : vector<2x64xf32>
    %334 = vector.extract_strided_slice %319 {offsets = [0, 192], sizes = [2, 64], strides = [1, 1]} : vector<2x256xf32> to vector<2x64xf32>
    %335 = arith.negf %334 : vector<2x64xf32>
    %336 = math.exp %335 : vector<2x64xf32>
    %cst_56 = arith.constant 1.000000e+00 : f32
    %337 = vector.broadcast %cst_56 : f32 to vector<2x64xf32>
    %338 = arith.addf %337, %336 : vector<2x64xf32>
    %339 = arith.divf %337, %338 : vector<2x64xf32>
    %340 = arith.mulf %331, %314 : vector<2x64xf32>
    %341 = arith.mulf %325, %333 : vector<2x64xf32>
    %342 = arith.addf %340, %341 : vector<2x64xf32>
    %343 = math.tanh %342 : vector<2x64xf32>
    %344 = arith.mulf %339, %343 : vector<2x64xf32>
    %345 = vector.extract_strided_slice %5 {offsets = [24, 0], sizes = [2, 256], strides = [1, 1]} : vector<56x256xf32> to vector<2x256xf32>
    %cst_57 = arith.constant dense<0.000000e+00> : vector<2x256xf32>
    %346 = tpu.matmul %344, %6, %cst_57 {dimension_numbers = #tpu.dot_dimension_numbers<[1], [0], [0], [1], [0, 0, 1, 1], [], []>} : vector<2x64xf32>, vector<64x256xf32>, vector<2x256xf32> -> vector<2x256xf32>
    %347 = arith.addf %345, %346 : vector<2x256xf32>
    %348 = vector.extract_strided_slice %347 {offsets = [0, 0], sizes = [2, 64], strides = [1, 1]} : vector<2x256xf32> to vector<2x64xf32>
    %349 = arith.negf %348 : vector<2x64xf32>
    %350 = math.exp %349 : vector<2x64xf32>
    %cst_58 = arith.constant 1.000000e+00 : f32
    %351 = vector.broadcast %cst_58 : f32 to vector<2x64xf32>
    %352 = arith.addf %351, %350 : vector<2x64xf32>
    %353 = arith.divf %351, %352 : vector<2x64xf32>
    %354 = vector.extract_strided_slice %347 {offsets = [0, 64], sizes = [2, 64], strides = [1, 1]} : vector<2x256xf32> to vector<2x64xf32>
    %355 = arith.negf %354 : vector<2x64xf32>
    %356 = math.exp %355 : vector<2x64xf32>
    %cst_59 = arith.constant 1.000000e+00 : f32
    %357 = vector.broadcast %cst_59 : f32 to vector<2x64xf32>
    %358 = arith.addf %357, %356 : vector<2x64xf32>
    %359 = arith.divf %357, %358 : vector<2x64xf32>
    %360 = vector.extract_strided_slice %347 {offsets = [0, 128], sizes = [2, 64], strides = [1, 1]} : vector<2x256xf32> to vector<2x64xf32>
    %361 = math.tanh %360 : vector<2x64xf32>
    %362 = vector.extract_strided_slice %347 {offsets = [0, 192], sizes = [2, 64], strides = [1, 1]} : vector<2x256xf32> to vector<2x64xf32>
    %363 = arith.negf %362 : vector<2x64xf32>
    %364 = math.exp %363 : vector<2x64xf32>
    %cst_60 = arith.constant 1.000000e+00 : f32
    %365 = vector.broadcast %cst_60 : f32 to vector<2x64xf32>
    %366 = arith.addf %365, %364 : vector<2x64xf32>
    %367 = arith.divf %365, %366 : vector<2x64xf32>
    %368 = arith.mulf %359, %342 : vector<2x64xf32>
    %369 = arith.mulf %353, %361 : vector<2x64xf32>
    %370 = arith.addf %368, %369 : vector<2x64xf32>
    %371 = math.tanh %370 : vector<2x64xf32>
    %372 = arith.mulf %367, %371 : vector<2x64xf32>
    %373 = vector.extract_strided_slice %5 {offsets = [26, 0], sizes = [2, 256], strides = [1, 1]} : vector<56x256xf32> to vector<2x256xf32>
    %cst_61 = arith.constant dense<0.000000e+00> : vector<2x256xf32>
    %374 = tpu.matmul %372, %6, %cst_61 {dimension_numbers = #tpu.dot_dimension_numbers<[1], [0], [0], [1], [0, 0, 1, 1], [], []>} : vector<2x64xf32>, vector<64x256xf32>, vector<2x256xf32> -> vector<2x256xf32>
    %375 = arith.addf %373, %374 : vector<2x256xf32>
    %376 = vector.extract_strided_slice %375 {offsets = [0, 0], sizes = [2, 64], strides = [1, 1]} : vector<2x256xf32> to vector<2x64xf32>
    %377 = arith.negf %376 : vector<2x64xf32>
    %378 = math.exp %377 : vector<2x64xf32>
    %cst_62 = arith.constant 1.000000e+00 : f32
    %379 = vector.broadcast %cst_62 : f32 to vector<2x64xf32>
    %380 = arith.addf %379, %378 : vector<2x64xf32>
    %381 = arith.divf %379, %380 : vector<2x64xf32>
    %382 = vector.extract_strided_slice %375 {offsets = [0, 64], sizes = [2, 64], strides = [1, 1]} : vector<2x256xf32> to vector<2x64xf32>
    %383 = arith.negf %382 : vector<2x64xf32>
    %384 = math.exp %383 : vector<2x64xf32>
    %cst_63 = arith.constant 1.000000e+00 : f32
    %385 = vector.broadcast %cst_63 : f32 to vector<2x64xf32>
    %386 = arith.addf %385, %384 : vector<2x64xf32>
    %387 = arith.divf %385, %386 : vector<2x64xf32>
    %388 = vector.extract_strided_slice %375 {offsets = [0, 128], sizes = [2, 64], strides = [1, 1]} : vector<2x256xf32> to vector<2x64xf32>
    %389 = math.tanh %388 : vector<2x64xf32>
    %390 = vector.extract_strided_slice %375 {offsets = [0, 192], sizes = [2, 64], strides = [1, 1]} : vector<2x256xf32> to vector<2x64xf32>
    %391 = arith.negf %390 : vector<2x64xf32>
    %392 = math.exp %391 : vector<2x64xf32>
    %cst_64 = arith.constant 1.000000e+00 : f32
    %393 = vector.broadcast %cst_64 : f32 to vector<2x64xf32>
    %394 = arith.addf %393, %392 : vector<2x64xf32>
    %395 = arith.divf %393, %394 : vector<2x64xf32>
    %396 = arith.mulf %387, %370 : vector<2x64xf32>
    %397 = arith.mulf %381, %389 : vector<2x64xf32>
    %398 = arith.addf %396, %397 : vector<2x64xf32>
    %399 = math.tanh %398 : vector<2x64xf32>
    %400 = arith.mulf %395, %399 : vector<2x64xf32>
    %401 = vector.extract_strided_slice %5 {offsets = [28, 0], sizes = [2, 256], strides = [1, 1]} : vector<56x256xf32> to vector<2x256xf32>
    %cst_65 = arith.constant dense<0.000000e+00> : vector<2x256xf32>
    %402 = tpu.matmul %400, %6, %cst_65 {dimension_numbers = #tpu.dot_dimension_numbers<[1], [0], [0], [1], [0, 0, 1, 1], [], []>} : vector<2x64xf32>, vector<64x256xf32>, vector<2x256xf32> -> vector<2x256xf32>
    %403 = arith.addf %401, %402 : vector<2x256xf32>
    %404 = vector.extract_strided_slice %403 {offsets = [0, 0], sizes = [2, 64], strides = [1, 1]} : vector<2x256xf32> to vector<2x64xf32>
    %405 = arith.negf %404 : vector<2x64xf32>
    %406 = math.exp %405 : vector<2x64xf32>
    %cst_66 = arith.constant 1.000000e+00 : f32
    %407 = vector.broadcast %cst_66 : f32 to vector<2x64xf32>
    %408 = arith.addf %407, %406 : vector<2x64xf32>
    %409 = arith.divf %407, %408 : vector<2x64xf32>
    %410 = vector.extract_strided_slice %403 {offsets = [0, 64], sizes = [2, 64], strides = [1, 1]} : vector<2x256xf32> to vector<2x64xf32>
    %411 = arith.negf %410 : vector<2x64xf32>
    %412 = math.exp %411 : vector<2x64xf32>
    %cst_67 = arith.constant 1.000000e+00 : f32
    %413 = vector.broadcast %cst_67 : f32 to vector<2x64xf32>
    %414 = arith.addf %413, %412 : vector<2x64xf32>
    %415 = arith.divf %413, %414 : vector<2x64xf32>
    %416 = vector.extract_strided_slice %403 {offsets = [0, 128], sizes = [2, 64], strides = [1, 1]} : vector<2x256xf32> to vector<2x64xf32>
    %417 = math.tanh %416 : vector<2x64xf32>
    %418 = vector.extract_strided_slice %403 {offsets = [0, 192], sizes = [2, 64], strides = [1, 1]} : vector<2x256xf32> to vector<2x64xf32>
    %419 = arith.negf %418 : vector<2x64xf32>
    %420 = math.exp %419 : vector<2x64xf32>
    %cst_68 = arith.constant 1.000000e+00 : f32
    %421 = vector.broadcast %cst_68 : f32 to vector<2x64xf32>
    %422 = arith.addf %421, %420 : vector<2x64xf32>
    %423 = arith.divf %421, %422 : vector<2x64xf32>
    %424 = arith.mulf %415, %398 : vector<2x64xf32>
    %425 = arith.mulf %409, %417 : vector<2x64xf32>
    %426 = arith.addf %424, %425 : vector<2x64xf32>
    %427 = math.tanh %426 : vector<2x64xf32>
    %428 = arith.mulf %423, %427 : vector<2x64xf32>
    %429 = vector.extract_strided_slice %5 {offsets = [30, 0], sizes = [2, 256], strides = [1, 1]} : vector<56x256xf32> to vector<2x256xf32>
    %cst_69 = arith.constant dense<0.000000e+00> : vector<2x256xf32>
    %430 = tpu.matmul %428, %6, %cst_69 {dimension_numbers = #tpu.dot_dimension_numbers<[1], [0], [0], [1], [0, 0, 1, 1], [], []>} : vector<2x64xf32>, vector<64x256xf32>, vector<2x256xf32> -> vector<2x256xf32>
    %431 = arith.addf %429, %430 : vector<2x256xf32>
    %432 = vector.extract_strided_slice %431 {offsets = [0, 0], sizes = [2, 64], strides = [1, 1]} : vector<2x256xf32> to vector<2x64xf32>
    %433 = arith.negf %432 : vector<2x64xf32>
    %434 = math.exp %433 : vector<2x64xf32>
    %cst_70 = arith.constant 1.000000e+00 : f32
    %435 = vector.broadcast %cst_70 : f32 to vector<2x64xf32>
    %436 = arith.addf %435, %434 : vector<2x64xf32>
    %437 = arith.divf %435, %436 : vector<2x64xf32>
    %438 = vector.extract_strided_slice %431 {offsets = [0, 64], sizes = [2, 64], strides = [1, 1]} : vector<2x256xf32> to vector<2x64xf32>
    %439 = arith.negf %438 : vector<2x64xf32>
    %440 = math.exp %439 : vector<2x64xf32>
    %cst_71 = arith.constant 1.000000e+00 : f32
    %441 = vector.broadcast %cst_71 : f32 to vector<2x64xf32>
    %442 = arith.addf %441, %440 : vector<2x64xf32>
    %443 = arith.divf %441, %442 : vector<2x64xf32>
    %444 = vector.extract_strided_slice %431 {offsets = [0, 128], sizes = [2, 64], strides = [1, 1]} : vector<2x256xf32> to vector<2x64xf32>
    %445 = math.tanh %444 : vector<2x64xf32>
    %446 = vector.extract_strided_slice %431 {offsets = [0, 192], sizes = [2, 64], strides = [1, 1]} : vector<2x256xf32> to vector<2x64xf32>
    %447 = arith.negf %446 : vector<2x64xf32>
    %448 = math.exp %447 : vector<2x64xf32>
    %cst_72 = arith.constant 1.000000e+00 : f32
    %449 = vector.broadcast %cst_72 : f32 to vector<2x64xf32>
    %450 = arith.addf %449, %448 : vector<2x64xf32>
    %451 = arith.divf %449, %450 : vector<2x64xf32>
    %452 = arith.mulf %443, %426 : vector<2x64xf32>
    %453 = arith.mulf %437, %445 : vector<2x64xf32>
    %454 = arith.addf %452, %453 : vector<2x64xf32>
    %455 = math.tanh %454 : vector<2x64xf32>
    %456 = arith.mulf %451, %455 : vector<2x64xf32>
    %457 = vector.extract_strided_slice %5 {offsets = [32, 0], sizes = [2, 256], strides = [1, 1]} : vector<56x256xf32> to vector<2x256xf32>
    %cst_73 = arith.constant dense<0.000000e+00> : vector<2x256xf32>
    %458 = tpu.matmul %456, %6, %cst_73 {dimension_numbers = #tpu.dot_dimension_numbers<[1], [0], [0], [1], [0, 0, 1, 1], [], []>} : vector<2x64xf32>, vector<64x256xf32>, vector<2x256xf32> -> vector<2x256xf32>
    %459 = arith.addf %457, %458 : vector<2x256xf32>
    %460 = vector.extract_strided_slice %459 {offsets = [0, 0], sizes = [2, 64], strides = [1, 1]} : vector<2x256xf32> to vector<2x64xf32>
    %461 = arith.negf %460 : vector<2x64xf32>
    %462 = math.exp %461 : vector<2x64xf32>
    %cst_74 = arith.constant 1.000000e+00 : f32
    %463 = vector.broadcast %cst_74 : f32 to vector<2x64xf32>
    %464 = arith.addf %463, %462 : vector<2x64xf32>
    %465 = arith.divf %463, %464 : vector<2x64xf32>
    %466 = vector.extract_strided_slice %459 {offsets = [0, 64], sizes = [2, 64], strides = [1, 1]} : vector<2x256xf32> to vector<2x64xf32>
    %467 = arith.negf %466 : vector<2x64xf32>
    %468 = math.exp %467 : vector<2x64xf32>
    %cst_75 = arith.constant 1.000000e+00 : f32
    %469 = vector.broadcast %cst_75 : f32 to vector<2x64xf32>
    %470 = arith.addf %469, %468 : vector<2x64xf32>
    %471 = arith.divf %469, %470 : vector<2x64xf32>
    %472 = vector.extract_strided_slice %459 {offsets = [0, 128], sizes = [2, 64], strides = [1, 1]} : vector<2x256xf32> to vector<2x64xf32>
    %473 = math.tanh %472 : vector<2x64xf32>
    %474 = vector.extract_strided_slice %459 {offsets = [0, 192], sizes = [2, 64], strides = [1, 1]} : vector<2x256xf32> to vector<2x64xf32>
    %475 = arith.negf %474 : vector<2x64xf32>
    %476 = math.exp %475 : vector<2x64xf32>
    %cst_76 = arith.constant 1.000000e+00 : f32
    %477 = vector.broadcast %cst_76 : f32 to vector<2x64xf32>
    %478 = arith.addf %477, %476 : vector<2x64xf32>
    %479 = arith.divf %477, %478 : vector<2x64xf32>
    %480 = arith.mulf %471, %454 : vector<2x64xf32>
    %481 = arith.mulf %465, %473 : vector<2x64xf32>
    %482 = arith.addf %480, %481 : vector<2x64xf32>
    %483 = math.tanh %482 : vector<2x64xf32>
    %484 = arith.mulf %479, %483 : vector<2x64xf32>
    %485 = vector.extract_strided_slice %5 {offsets = [34, 0], sizes = [2, 256], strides = [1, 1]} : vector<56x256xf32> to vector<2x256xf32>
    %cst_77 = arith.constant dense<0.000000e+00> : vector<2x256xf32>
    %486 = tpu.matmul %484, %6, %cst_77 {dimension_numbers = #tpu.dot_dimension_numbers<[1], [0], [0], [1], [0, 0, 1, 1], [], []>} : vector<2x64xf32>, vector<64x256xf32>, vector<2x256xf32> -> vector<2x256xf32>
    %487 = arith.addf %485, %486 : vector<2x256xf32>
    %488 = vector.extract_strided_slice %487 {offsets = [0, 0], sizes = [2, 64], strides = [1, 1]} : vector<2x256xf32> to vector<2x64xf32>
    %489 = arith.negf %488 : vector<2x64xf32>
    %490 = math.exp %489 : vector<2x64xf32>
    %cst_78 = arith.constant 1.000000e+00 : f32
    %491 = vector.broadcast %cst_78 : f32 to vector<2x64xf32>
    %492 = arith.addf %491, %490 : vector<2x64xf32>
    %493 = arith.divf %491, %492 : vector<2x64xf32>
    %494 = vector.extract_strided_slice %487 {offsets = [0, 64], sizes = [2, 64], strides = [1, 1]} : vector<2x256xf32> to vector<2x64xf32>
    %495 = arith.negf %494 : vector<2x64xf32>
    %496 = math.exp %495 : vector<2x64xf32>
    %cst_79 = arith.constant 1.000000e+00 : f32
    %497 = vector.broadcast %cst_79 : f32 to vector<2x64xf32>
    %498 = arith.addf %497, %496 : vector<2x64xf32>
    %499 = arith.divf %497, %498 : vector<2x64xf32>
    %500 = vector.extract_strided_slice %487 {offsets = [0, 128], sizes = [2, 64], strides = [1, 1]} : vector<2x256xf32> to vector<2x64xf32>
    %501 = math.tanh %500 : vector<2x64xf32>
    %502 = vector.extract_strided_slice %487 {offsets = [0, 192], sizes = [2, 64], strides = [1, 1]} : vector<2x256xf32> to vector<2x64xf32>
    %503 = arith.negf %502 : vector<2x64xf32>
    %504 = math.exp %503 : vector<2x64xf32>
    %cst_80 = arith.constant 1.000000e+00 : f32
    %505 = vector.broadcast %cst_80 : f32 to vector<2x64xf32>
    %506 = arith.addf %505, %504 : vector<2x64xf32>
    %507 = arith.divf %505, %506 : vector<2x64xf32>
    %508 = arith.mulf %499, %482 : vector<2x64xf32>
    %509 = arith.mulf %493, %501 : vector<2x64xf32>
    %510 = arith.addf %508, %509 : vector<2x64xf32>
    %511 = math.tanh %510 : vector<2x64xf32>
    %512 = arith.mulf %507, %511 : vector<2x64xf32>
    %513 = vector.extract_strided_slice %5 {offsets = [36, 0], sizes = [2, 256], strides = [1, 1]} : vector<56x256xf32> to vector<2x256xf32>
    %cst_81 = arith.constant dense<0.000000e+00> : vector<2x256xf32>
    %514 = tpu.matmul %512, %6, %cst_81 {dimension_numbers = #tpu.dot_dimension_numbers<[1], [0], [0], [1], [0, 0, 1, 1], [], []>} : vector<2x64xf32>, vector<64x256xf32>, vector<2x256xf32> -> vector<2x256xf32>
    %515 = arith.addf %513, %514 : vector<2x256xf32>
    %516 = vector.extract_strided_slice %515 {offsets = [0, 0], sizes = [2, 64], strides = [1, 1]} : vector<2x256xf32> to vector<2x64xf32>
    %517 = arith.negf %516 : vector<2x64xf32>
    %518 = math.exp %517 : vector<2x64xf32>
    %cst_82 = arith.constant 1.000000e+00 : f32
    %519 = vector.broadcast %cst_82 : f32 to vector<2x64xf32>
    %520 = arith.addf %519, %518 : vector<2x64xf32>
    %521 = arith.divf %519, %520 : vector<2x64xf32>
    %522 = vector.extract_strided_slice %515 {offsets = [0, 64], sizes = [2, 64], strides = [1, 1]} : vector<2x256xf32> to vector<2x64xf32>
    %523 = arith.negf %522 : vector<2x64xf32>
    %524 = math.exp %523 : vector<2x64xf32>
    %cst_83 = arith.constant 1.000000e+00 : f32
    %525 = vector.broadcast %cst_83 : f32 to vector<2x64xf32>
    %526 = arith.addf %525, %524 : vector<2x64xf32>
    %527 = arith.divf %525, %526 : vector<2x64xf32>
    %528 = vector.extract_strided_slice %515 {offsets = [0, 128], sizes = [2, 64], strides = [1, 1]} : vector<2x256xf32> to vector<2x64xf32>
    %529 = math.tanh %528 : vector<2x64xf32>
    %530 = vector.extract_strided_slice %515 {offsets = [0, 192], sizes = [2, 64], strides = [1, 1]} : vector<2x256xf32> to vector<2x64xf32>
    %531 = arith.negf %530 : vector<2x64xf32>
    %532 = math.exp %531 : vector<2x64xf32>
    %cst_84 = arith.constant 1.000000e+00 : f32
    %533 = vector.broadcast %cst_84 : f32 to vector<2x64xf32>
    %534 = arith.addf %533, %532 : vector<2x64xf32>
    %535 = arith.divf %533, %534 : vector<2x64xf32>
    %536 = arith.mulf %527, %510 : vector<2x64xf32>
    %537 = arith.mulf %521, %529 : vector<2x64xf32>
    %538 = arith.addf %536, %537 : vector<2x64xf32>
    %539 = math.tanh %538 : vector<2x64xf32>
    %540 = arith.mulf %535, %539 : vector<2x64xf32>
    %541 = vector.extract_strided_slice %5 {offsets = [38, 0], sizes = [2, 256], strides = [1, 1]} : vector<56x256xf32> to vector<2x256xf32>
    %cst_85 = arith.constant dense<0.000000e+00> : vector<2x256xf32>
    %542 = tpu.matmul %540, %6, %cst_85 {dimension_numbers = #tpu.dot_dimension_numbers<[1], [0], [0], [1], [0, 0, 1, 1], [], []>} : vector<2x64xf32>, vector<64x256xf32>, vector<2x256xf32> -> vector<2x256xf32>
    %543 = arith.addf %541, %542 : vector<2x256xf32>
    %544 = vector.extract_strided_slice %543 {offsets = [0, 0], sizes = [2, 64], strides = [1, 1]} : vector<2x256xf32> to vector<2x64xf32>
    %545 = arith.negf %544 : vector<2x64xf32>
    %546 = math.exp %545 : vector<2x64xf32>
    %cst_86 = arith.constant 1.000000e+00 : f32
    %547 = vector.broadcast %cst_86 : f32 to vector<2x64xf32>
    %548 = arith.addf %547, %546 : vector<2x64xf32>
    %549 = arith.divf %547, %548 : vector<2x64xf32>
    %550 = vector.extract_strided_slice %543 {offsets = [0, 64], sizes = [2, 64], strides = [1, 1]} : vector<2x256xf32> to vector<2x64xf32>
    %551 = arith.negf %550 : vector<2x64xf32>
    %552 = math.exp %551 : vector<2x64xf32>
    %cst_87 = arith.constant 1.000000e+00 : f32
    %553 = vector.broadcast %cst_87 : f32 to vector<2x64xf32>
    %554 = arith.addf %553, %552 : vector<2x64xf32>
    %555 = arith.divf %553, %554 : vector<2x64xf32>
    %556 = vector.extract_strided_slice %543 {offsets = [0, 128], sizes = [2, 64], strides = [1, 1]} : vector<2x256xf32> to vector<2x64xf32>
    %557 = math.tanh %556 : vector<2x64xf32>
    %558 = vector.extract_strided_slice %543 {offsets = [0, 192], sizes = [2, 64], strides = [1, 1]} : vector<2x256xf32> to vector<2x64xf32>
    %559 = arith.negf %558 : vector<2x64xf32>
    %560 = math.exp %559 : vector<2x64xf32>
    %cst_88 = arith.constant 1.000000e+00 : f32
    %561 = vector.broadcast %cst_88 : f32 to vector<2x64xf32>
    %562 = arith.addf %561, %560 : vector<2x64xf32>
    %563 = arith.divf %561, %562 : vector<2x64xf32>
    %564 = arith.mulf %555, %538 : vector<2x64xf32>
    %565 = arith.mulf %549, %557 : vector<2x64xf32>
    %566 = arith.addf %564, %565 : vector<2x64xf32>
    %567 = math.tanh %566 : vector<2x64xf32>
    %568 = arith.mulf %563, %567 : vector<2x64xf32>
    %569 = vector.extract_strided_slice %5 {offsets = [40, 0], sizes = [2, 256], strides = [1, 1]} : vector<56x256xf32> to vector<2x256xf32>
    %cst_89 = arith.constant dense<0.000000e+00> : vector<2x256xf32>
    %570 = tpu.matmul %568, %6, %cst_89 {dimension_numbers = #tpu.dot_dimension_numbers<[1], [0], [0], [1], [0, 0, 1, 1], [], []>} : vector<2x64xf32>, vector<64x256xf32>, vector<2x256xf32> -> vector<2x256xf32>
    %571 = arith.addf %569, %570 : vector<2x256xf32>
    %572 = vector.extract_strided_slice %571 {offsets = [0, 0], sizes = [2, 64], strides = [1, 1]} : vector<2x256xf32> to vector<2x64xf32>
    %573 = arith.negf %572 : vector<2x64xf32>
    %574 = math.exp %573 : vector<2x64xf32>
    %cst_90 = arith.constant 1.000000e+00 : f32
    %575 = vector.broadcast %cst_90 : f32 to vector<2x64xf32>
    %576 = arith.addf %575, %574 : vector<2x64xf32>
    %577 = arith.divf %575, %576 : vector<2x64xf32>
    %578 = vector.extract_strided_slice %571 {offsets = [0, 64], sizes = [2, 64], strides = [1, 1]} : vector<2x256xf32> to vector<2x64xf32>
    %579 = arith.negf %578 : vector<2x64xf32>
    %580 = math.exp %579 : vector<2x64xf32>
    %cst_91 = arith.constant 1.000000e+00 : f32
    %581 = vector.broadcast %cst_91 : f32 to vector<2x64xf32>
    %582 = arith.addf %581, %580 : vector<2x64xf32>
    %583 = arith.divf %581, %582 : vector<2x64xf32>
    %584 = vector.extract_strided_slice %571 {offsets = [0, 128], sizes = [2, 64], strides = [1, 1]} : vector<2x256xf32> to vector<2x64xf32>
    %585 = math.tanh %584 : vector<2x64xf32>
    %586 = vector.extract_strided_slice %571 {offsets = [0, 192], sizes = [2, 64], strides = [1, 1]} : vector<2x256xf32> to vector<2x64xf32>
    %587 = arith.negf %586 : vector<2x64xf32>
    %588 = math.exp %587 : vector<2x64xf32>
    %cst_92 = arith.constant 1.000000e+00 : f32
    %589 = vector.broadcast %cst_92 : f32 to vector<2x64xf32>
    %590 = arith.addf %589, %588 : vector<2x64xf32>
    %591 = arith.divf %589, %590 : vector<2x64xf32>
    %592 = arith.mulf %583, %566 : vector<2x64xf32>
    %593 = arith.mulf %577, %585 : vector<2x64xf32>
    %594 = arith.addf %592, %593 : vector<2x64xf32>
    %595 = math.tanh %594 : vector<2x64xf32>
    %596 = arith.mulf %591, %595 : vector<2x64xf32>
    %597 = vector.extract_strided_slice %5 {offsets = [42, 0], sizes = [2, 256], strides = [1, 1]} : vector<56x256xf32> to vector<2x256xf32>
    %cst_93 = arith.constant dense<0.000000e+00> : vector<2x256xf32>
    %598 = tpu.matmul %596, %6, %cst_93 {dimension_numbers = #tpu.dot_dimension_numbers<[1], [0], [0], [1], [0, 0, 1, 1], [], []>} : vector<2x64xf32>, vector<64x256xf32>, vector<2x256xf32> -> vector<2x256xf32>
    %599 = arith.addf %597, %598 : vector<2x256xf32>
    %600 = vector.extract_strided_slice %599 {offsets = [0, 0], sizes = [2, 64], strides = [1, 1]} : vector<2x256xf32> to vector<2x64xf32>
    %601 = arith.negf %600 : vector<2x64xf32>
    %602 = math.exp %601 : vector<2x64xf32>
    %cst_94 = arith.constant 1.000000e+00 : f32
    %603 = vector.broadcast %cst_94 : f32 to vector<2x64xf32>
    %604 = arith.addf %603, %602 : vector<2x64xf32>
    %605 = arith.divf %603, %604 : vector<2x64xf32>
    %606 = vector.extract_strided_slice %599 {offsets = [0, 64], sizes = [2, 64], strides = [1, 1]} : vector<2x256xf32> to vector<2x64xf32>
    %607 = arith.negf %606 : vector<2x64xf32>
    %608 = math.exp %607 : vector<2x64xf32>
    %cst_95 = arith.constant 1.000000e+00 : f32
    %609 = vector.broadcast %cst_95 : f32 to vector<2x64xf32>
    %610 = arith.addf %609, %608 : vector<2x64xf32>
    %611 = arith.divf %609, %610 : vector<2x64xf32>
    %612 = vector.extract_strided_slice %599 {offsets = [0, 128], sizes = [2, 64], strides = [1, 1]} : vector<2x256xf32> to vector<2x64xf32>
    %613 = math.tanh %612 : vector<2x64xf32>
    %614 = vector.extract_strided_slice %599 {offsets = [0, 192], sizes = [2, 64], strides = [1, 1]} : vector<2x256xf32> to vector<2x64xf32>
    %615 = arith.negf %614 : vector<2x64xf32>
    %616 = math.exp %615 : vector<2x64xf32>
    %cst_96 = arith.constant 1.000000e+00 : f32
    %617 = vector.broadcast %cst_96 : f32 to vector<2x64xf32>
    %618 = arith.addf %617, %616 : vector<2x64xf32>
    %619 = arith.divf %617, %618 : vector<2x64xf32>
    %620 = arith.mulf %611, %594 : vector<2x64xf32>
    %621 = arith.mulf %605, %613 : vector<2x64xf32>
    %622 = arith.addf %620, %621 : vector<2x64xf32>
    %623 = math.tanh %622 : vector<2x64xf32>
    %624 = arith.mulf %619, %623 : vector<2x64xf32>
    %625 = vector.extract_strided_slice %5 {offsets = [44, 0], sizes = [2, 256], strides = [1, 1]} : vector<56x256xf32> to vector<2x256xf32>
    %cst_97 = arith.constant dense<0.000000e+00> : vector<2x256xf32>
    %626 = tpu.matmul %624, %6, %cst_97 {dimension_numbers = #tpu.dot_dimension_numbers<[1], [0], [0], [1], [0, 0, 1, 1], [], []>} : vector<2x64xf32>, vector<64x256xf32>, vector<2x256xf32> -> vector<2x256xf32>
    %627 = arith.addf %625, %626 : vector<2x256xf32>
    %628 = vector.extract_strided_slice %627 {offsets = [0, 0], sizes = [2, 64], strides = [1, 1]} : vector<2x256xf32> to vector<2x64xf32>
    %629 = arith.negf %628 : vector<2x64xf32>
    %630 = math.exp %629 : vector<2x64xf32>
    %cst_98 = arith.constant 1.000000e+00 : f32
    %631 = vector.broadcast %cst_98 : f32 to vector<2x64xf32>
    %632 = arith.addf %631, %630 : vector<2x64xf32>
    %633 = arith.divf %631, %632 : vector<2x64xf32>
    %634 = vector.extract_strided_slice %627 {offsets = [0, 64], sizes = [2, 64], strides = [1, 1]} : vector<2x256xf32> to vector<2x64xf32>
    %635 = arith.negf %634 : vector<2x64xf32>
    %636 = math.exp %635 : vector<2x64xf32>
    %cst_99 = arith.constant 1.000000e+00 : f32
    %637 = vector.broadcast %cst_99 : f32 to vector<2x64xf32>
    %638 = arith.addf %637, %636 : vector<2x64xf32>
    %639 = arith.divf %637, %638 : vector<2x64xf32>
    %640 = vector.extract_strided_slice %627 {offsets = [0, 128], sizes = [2, 64], strides = [1, 1]} : vector<2x256xf32> to vector<2x64xf32>
    %641 = math.tanh %640 : vector<2x64xf32>
    %642 = vector.extract_strided_slice %627 {offsets = [0, 192], sizes = [2, 64], strides = [1, 1]} : vector<2x256xf32> to vector<2x64xf32>
    %643 = arith.negf %642 : vector<2x64xf32>
    %644 = math.exp %643 : vector<2x64xf32>
    %cst_100 = arith.constant 1.000000e+00 : f32
    %645 = vector.broadcast %cst_100 : f32 to vector<2x64xf32>
    %646 = arith.addf %645, %644 : vector<2x64xf32>
    %647 = arith.divf %645, %646 : vector<2x64xf32>
    %648 = arith.mulf %639, %622 : vector<2x64xf32>
    %649 = arith.mulf %633, %641 : vector<2x64xf32>
    %650 = arith.addf %648, %649 : vector<2x64xf32>
    %651 = math.tanh %650 : vector<2x64xf32>
    %652 = arith.mulf %647, %651 : vector<2x64xf32>
    %653 = vector.extract_strided_slice %5 {offsets = [46, 0], sizes = [2, 256], strides = [1, 1]} : vector<56x256xf32> to vector<2x256xf32>
    %cst_101 = arith.constant dense<0.000000e+00> : vector<2x256xf32>
    %654 = tpu.matmul %652, %6, %cst_101 {dimension_numbers = #tpu.dot_dimension_numbers<[1], [0], [0], [1], [0, 0, 1, 1], [], []>} : vector<2x64xf32>, vector<64x256xf32>, vector<2x256xf32> -> vector<2x256xf32>
    %655 = arith.addf %653, %654 : vector<2x256xf32>
    %656 = vector.extract_strided_slice %655 {offsets = [0, 0], sizes = [2, 64], strides = [1, 1]} : vector<2x256xf32> to vector<2x64xf32>
    %657 = arith.negf %656 : vector<2x64xf32>
    %658 = math.exp %657 : vector<2x64xf32>
    %cst_102 = arith.constant 1.000000e+00 : f32
    %659 = vector.broadcast %cst_102 : f32 to vector<2x64xf32>
    %660 = arith.addf %659, %658 : vector<2x64xf32>
    %661 = arith.divf %659, %660 : vector<2x64xf32>
    %662 = vector.extract_strided_slice %655 {offsets = [0, 64], sizes = [2, 64], strides = [1, 1]} : vector<2x256xf32> to vector<2x64xf32>
    %663 = arith.negf %662 : vector<2x64xf32>
    %664 = math.exp %663 : vector<2x64xf32>
    %cst_103 = arith.constant 1.000000e+00 : f32
    %665 = vector.broadcast %cst_103 : f32 to vector<2x64xf32>
    %666 = arith.addf %665, %664 : vector<2x64xf32>
    %667 = arith.divf %665, %666 : vector<2x64xf32>
    %668 = vector.extract_strided_slice %655 {offsets = [0, 128], sizes = [2, 64], strides = [1, 1]} : vector<2x256xf32> to vector<2x64xf32>
    %669 = math.tanh %668 : vector<2x64xf32>
    %670 = vector.extract_strided_slice %655 {offsets = [0, 192], sizes = [2, 64], strides = [1, 1]} : vector<2x256xf32> to vector<2x64xf32>
    %671 = arith.negf %670 : vector<2x64xf32>
    %672 = math.exp %671 : vector<2x64xf32>
    %cst_104 = arith.constant 1.000000e+00 : f32
    %673 = vector.broadcast %cst_104 : f32 to vector<2x64xf32>
    %674 = arith.addf %673, %672 : vector<2x64xf32>
    %675 = arith.divf %673, %674 : vector<2x64xf32>
    %676 = arith.mulf %667, %650 : vector<2x64xf32>
    %677 = arith.mulf %661, %669 : vector<2x64xf32>
    %678 = arith.addf %676, %677 : vector<2x64xf32>
    %679 = math.tanh %678 : vector<2x64xf32>
    %680 = arith.mulf %675, %679 : vector<2x64xf32>
    %681 = vector.extract_strided_slice %5 {offsets = [48, 0], sizes = [2, 256], strides = [1, 1]} : vector<56x256xf32> to vector<2x256xf32>
    %cst_105 = arith.constant dense<0.000000e+00> : vector<2x256xf32>
    %682 = tpu.matmul %680, %6, %cst_105 {dimension_numbers = #tpu.dot_dimension_numbers<[1], [0], [0], [1], [0, 0, 1, 1], [], []>} : vector<2x64xf32>, vector<64x256xf32>, vector<2x256xf32> -> vector<2x256xf32>
    %683 = arith.addf %681, %682 : vector<2x256xf32>
    %684 = vector.extract_strided_slice %683 {offsets = [0, 0], sizes = [2, 64], strides = [1, 1]} : vector<2x256xf32> to vector<2x64xf32>
    %685 = arith.negf %684 : vector<2x64xf32>
    %686 = math.exp %685 : vector<2x64xf32>
    %cst_106 = arith.constant 1.000000e+00 : f32
    %687 = vector.broadcast %cst_106 : f32 to vector<2x64xf32>
    %688 = arith.addf %687, %686 : vector<2x64xf32>
    %689 = arith.divf %687, %688 : vector<2x64xf32>
    %690 = vector.extract_strided_slice %683 {offsets = [0, 64], sizes = [2, 64], strides = [1, 1]} : vector<2x256xf32> to vector<2x64xf32>
    %691 = arith.negf %690 : vector<2x64xf32>
    %692 = math.exp %691 : vector<2x64xf32>
    %cst_107 = arith.constant 1.000000e+00 : f32
    %693 = vector.broadcast %cst_107 : f32 to vector<2x64xf32>
    %694 = arith.addf %693, %692 : vector<2x64xf32>
    %695 = arith.divf %693, %694 : vector<2x64xf32>
    %696 = vector.extract_strided_slice %683 {offsets = [0, 128], sizes = [2, 64], strides = [1, 1]} : vector<2x256xf32> to vector<2x64xf32>
    %697 = math.tanh %696 : vector<2x64xf32>
    %698 = vector.extract_strided_slice %683 {offsets = [0, 192], sizes = [2, 64], strides = [1, 1]} : vector<2x256xf32> to vector<2x64xf32>
    %699 = arith.negf %698 : vector<2x64xf32>
    %700 = math.exp %699 : vector<2x64xf32>
    %cst_108 = arith.constant 1.000000e+00 : f32
    %701 = vector.broadcast %cst_108 : f32 to vector<2x64xf32>
    %702 = arith.addf %701, %700 : vector<2x64xf32>
    %703 = arith.divf %701, %702 : vector<2x64xf32>
    %704 = arith.mulf %695, %678 : vector<2x64xf32>
    %705 = arith.mulf %689, %697 : vector<2x64xf32>
    %706 = arith.addf %704, %705 : vector<2x64xf32>
    %707 = math.tanh %706 : vector<2x64xf32>
    %708 = arith.mulf %703, %707 : vector<2x64xf32>
    %709 = vector.extract_strided_slice %5 {offsets = [50, 0], sizes = [2, 256], strides = [1, 1]} : vector<56x256xf32> to vector<2x256xf32>
    %cst_109 = arith.constant dense<0.000000e+00> : vector<2x256xf32>
    %710 = tpu.matmul %708, %6, %cst_109 {dimension_numbers = #tpu.dot_dimension_numbers<[1], [0], [0], [1], [0, 0, 1, 1], [], []>} : vector<2x64xf32>, vector<64x256xf32>, vector<2x256xf32> -> vector<2x256xf32>
    %711 = arith.addf %709, %710 : vector<2x256xf32>
    %712 = vector.extract_strided_slice %711 {offsets = [0, 0], sizes = [2, 64], strides = [1, 1]} : vector<2x256xf32> to vector<2x64xf32>
    %713 = arith.negf %712 : vector<2x64xf32>
    %714 = math.exp %713 : vector<2x64xf32>
    %cst_110 = arith.constant 1.000000e+00 : f32
    %715 = vector.broadcast %cst_110 : f32 to vector<2x64xf32>
    %716 = arith.addf %715, %714 : vector<2x64xf32>
    %717 = arith.divf %715, %716 : vector<2x64xf32>
    %718 = vector.extract_strided_slice %711 {offsets = [0, 64], sizes = [2, 64], strides = [1, 1]} : vector<2x256xf32> to vector<2x64xf32>
    %719 = arith.negf %718 : vector<2x64xf32>
    %720 = math.exp %719 : vector<2x64xf32>
    %cst_111 = arith.constant 1.000000e+00 : f32
    %721 = vector.broadcast %cst_111 : f32 to vector<2x64xf32>
    %722 = arith.addf %721, %720 : vector<2x64xf32>
    %723 = arith.divf %721, %722 : vector<2x64xf32>
    %724 = vector.extract_strided_slice %711 {offsets = [0, 128], sizes = [2, 64], strides = [1, 1]} : vector<2x256xf32> to vector<2x64xf32>
    %725 = math.tanh %724 : vector<2x64xf32>
    %726 = vector.extract_strided_slice %711 {offsets = [0, 192], sizes = [2, 64], strides = [1, 1]} : vector<2x256xf32> to vector<2x64xf32>
    %727 = arith.negf %726 : vector<2x64xf32>
    %728 = math.exp %727 : vector<2x64xf32>
    %cst_112 = arith.constant 1.000000e+00 : f32
    %729 = vector.broadcast %cst_112 : f32 to vector<2x64xf32>
    %730 = arith.addf %729, %728 : vector<2x64xf32>
    %731 = arith.divf %729, %730 : vector<2x64xf32>
    %732 = arith.mulf %723, %706 : vector<2x64xf32>
    %733 = arith.mulf %717, %725 : vector<2x64xf32>
    %734 = arith.addf %732, %733 : vector<2x64xf32>
    %735 = math.tanh %734 : vector<2x64xf32>
    %736 = arith.mulf %731, %735 : vector<2x64xf32>
    %737 = vector.extract_strided_slice %5 {offsets = [52, 0], sizes = [2, 256], strides = [1, 1]} : vector<56x256xf32> to vector<2x256xf32>
    %cst_113 = arith.constant dense<0.000000e+00> : vector<2x256xf32>
    %738 = tpu.matmul %736, %6, %cst_113 {dimension_numbers = #tpu.dot_dimension_numbers<[1], [0], [0], [1], [0, 0, 1, 1], [], []>} : vector<2x64xf32>, vector<64x256xf32>, vector<2x256xf32> -> vector<2x256xf32>
    %739 = arith.addf %737, %738 : vector<2x256xf32>
    %740 = vector.extract_strided_slice %739 {offsets = [0, 0], sizes = [2, 64], strides = [1, 1]} : vector<2x256xf32> to vector<2x64xf32>
    %741 = arith.negf %740 : vector<2x64xf32>
    %742 = math.exp %741 : vector<2x64xf32>
    %cst_114 = arith.constant 1.000000e+00 : f32
    %743 = vector.broadcast %cst_114 : f32 to vector<2x64xf32>
    %744 = arith.addf %743, %742 : vector<2x64xf32>
    %745 = arith.divf %743, %744 : vector<2x64xf32>
    %746 = vector.extract_strided_slice %739 {offsets = [0, 64], sizes = [2, 64], strides = [1, 1]} : vector<2x256xf32> to vector<2x64xf32>
    %747 = arith.negf %746 : vector<2x64xf32>
    %748 = math.exp %747 : vector<2x64xf32>
    %cst_115 = arith.constant 1.000000e+00 : f32
    %749 = vector.broadcast %cst_115 : f32 to vector<2x64xf32>
    %750 = arith.addf %749, %748 : vector<2x64xf32>
    %751 = arith.divf %749, %750 : vector<2x64xf32>
    %752 = vector.extract_strided_slice %739 {offsets = [0, 128], sizes = [2, 64], strides = [1, 1]} : vector<2x256xf32> to vector<2x64xf32>
    %753 = math.tanh %752 : vector<2x64xf32>
    %754 = vector.extract_strided_slice %739 {offsets = [0, 192], sizes = [2, 64], strides = [1, 1]} : vector<2x256xf32> to vector<2x64xf32>
    %755 = arith.negf %754 : vector<2x64xf32>
    %756 = math.exp %755 : vector<2x64xf32>
    %cst_116 = arith.constant 1.000000e+00 : f32
    %757 = vector.broadcast %cst_116 : f32 to vector<2x64xf32>
    %758 = arith.addf %757, %756 : vector<2x64xf32>
    %759 = arith.divf %757, %758 : vector<2x64xf32>
    %760 = arith.mulf %751, %734 : vector<2x64xf32>
    %761 = arith.mulf %745, %753 : vector<2x64xf32>
    %762 = arith.addf %760, %761 : vector<2x64xf32>
    %763 = math.tanh %762 : vector<2x64xf32>
    %764 = arith.mulf %759, %763 : vector<2x64xf32>
    %765 = vector.extract_strided_slice %5 {offsets = [54, 0], sizes = [2, 256], strides = [1, 1]} : vector<56x256xf32> to vector<2x256xf32>
    %cst_117 = arith.constant dense<0.000000e+00> : vector<2x256xf32>
    %766 = tpu.matmul %764, %6, %cst_117 {dimension_numbers = #tpu.dot_dimension_numbers<[1], [0], [0], [1], [0, 0, 1, 1], [], []>} : vector<2x64xf32>, vector<64x256xf32>, vector<2x256xf32> -> vector<2x256xf32>
    %767 = arith.addf %765, %766 : vector<2x256xf32>
    %768 = vector.extract_strided_slice %767 {offsets = [0, 0], sizes = [2, 64], strides = [1, 1]} : vector<2x256xf32> to vector<2x64xf32>
    %769 = arith.negf %768 : vector<2x64xf32>
    %770 = math.exp %769 : vector<2x64xf32>
    %cst_118 = arith.constant 1.000000e+00 : f32
    %771 = vector.broadcast %cst_118 : f32 to vector<2x64xf32>
    %772 = arith.addf %771, %770 : vector<2x64xf32>
    %773 = arith.divf %771, %772 : vector<2x64xf32>
    %774 = vector.extract_strided_slice %767 {offsets = [0, 64], sizes = [2, 64], strides = [1, 1]} : vector<2x256xf32> to vector<2x64xf32>
    %775 = arith.negf %774 : vector<2x64xf32>
    %776 = math.exp %775 : vector<2x64xf32>
    %cst_119 = arith.constant 1.000000e+00 : f32
    %777 = vector.broadcast %cst_119 : f32 to vector<2x64xf32>
    %778 = arith.addf %777, %776 : vector<2x64xf32>
    %779 = arith.divf %777, %778 : vector<2x64xf32>
    %780 = vector.extract_strided_slice %767 {offsets = [0, 128], sizes = [2, 64], strides = [1, 1]} : vector<2x256xf32> to vector<2x64xf32>
    %781 = math.tanh %780 : vector<2x64xf32>
    %782 = vector.extract_strided_slice %767 {offsets = [0, 192], sizes = [2, 64], strides = [1, 1]} : vector<2x256xf32> to vector<2x64xf32>
    %783 = arith.negf %782 : vector<2x64xf32>
    %784 = math.exp %783 : vector<2x64xf32>
    %cst_120 = arith.constant 1.000000e+00 : f32
    %785 = vector.broadcast %cst_120 : f32 to vector<2x64xf32>
    %786 = arith.addf %785, %784 : vector<2x64xf32>
    %787 = arith.divf %785, %786 : vector<2x64xf32>
    %788 = arith.mulf %779, %762 : vector<2x64xf32>
    %789 = arith.mulf %773, %781 : vector<2x64xf32>
    %790 = arith.addf %788, %789 : vector<2x64xf32>
    %791 = math.tanh %790 : vector<2x64xf32>
    %792 = arith.mulf %787, %791 : vector<2x64xf32>
    %c0_121 = arith.constant 0 : index
    %c0_122 = arith.constant 0 : index
    %793 = vector.load %arg4[%c0_121, %c0_122] : memref<64x128xf32, #tpu.memory_space<vmem>>, vector<64x128xf32>
    %cst_123 = arith.constant dense<0.000000e+00> : vector<2x128xf32>
    %794 = tpu.matmul %792, %793, %cst_123 {dimension_numbers = #tpu.dot_dimension_numbers<[1], [0], [0], [1], [0, 0, 1, 1], [], []>} : vector<2x64xf32>, vector<64x128xf32>, vector<2x128xf32> -> vector<2x128xf32>
    %c0_124 = arith.constant 0 : index
    %c0_125 = arith.constant 0 : index
    %795 = vector.load %arg5[%c0_124, %c0_125] : memref<1x128xf32, #tpu.memory_space<vmem>>, vector<1x128xf32>
    %796 = vector.broadcast %795 : vector<1x128xf32> to vector<2x128xf32>
    %797 = arith.addf %794, %796 : vector<2x128xf32>
    %c0_126 = arith.constant 0 : index
    %c0_127 = arith.constant 0 : index
    %798 = vector.load %arg6[%c0_126, %c0_127] : memref<2x128xf32, #tpu.memory_space<vmem>>, vector<2x128xf32>
    tpu.vector_store %arg6[%c0_126, %c0_127], %797 {strides = array<i32>} : memref<2x128xf32, #tpu.memory_space<vmem>>, vector<2x128xf32>,
    return
  }
}

</mosaic_0001>

<llo_original>
// kernel: lstm_forward.1
$region0: #{lstm_forward.1}
  #allocation0 [shape = 'u32[]', space=smem, size = 0x4, offset = 0x4, fixed_abs, tag = 'smem constant byte address 0x4 - core index']
  #allocation1 [shape = 'u32[144,128]{1,0:T(1,128)}', space=vmem, size = 0x12000, scoped, tag = 'internal scratch']
  %s0 = inlined_call_operand.vmem [shape: f32[56,28], index: 0, kind: input, shape index: {}]
  %s1 = inlined_call_operand.vmem [shape: f32[28,256], index: 1, kind: input, shape index: {}]
  %s2 = inlined_call_operand.vmem [shape: f32[64,256], index: 2, kind: input, shape index: {}]
  %s3 = inlined_call_operand.vmem [shape: f32[1,256], index: 3, kind: input, shape index: {}]
  %s4 = inlined_call_operand.vmem [shape: f32[64,128], index: 4, kind: input, shape index: {}]
  %s5 = inlined_call_operand.vmem [shape: f32[1,128], index: 5, kind: input, shape index: {}]
  %s6 = inlined_call_operand.hbm [shape: f32[2,128], index: 6, kind: output, shape index: {}]
  %s7 = sld [smem:[#allocation0]]
  $region34: #{lstm_forward.1} parent=0
    _
  %s9 = ssub.s32 1, %s7
  %s10 = scalar_select 0, %s9, %s7
  $region1: #{lstm_forward.1} parent=0
    #allocation2 [shape = 'u8[1024]{0}', space=vmem, size = 0x400, scoped, tag = 'output window, operand 0, single buffered']
    #allocation3 [shape = 's32[1]{0}', space=sflag, size = 0x4, scoped, tag = 'scoped memory for lstm_forward.1']
    %11 = vsyncpa [#allocation3], 0
    // Predicated region
    $region2: #{lstm_forward.1} parent=1 // pred_check
      _
    $region3: #{lstm_forward.1} parent=1 // pred_check_branch
      %13 = sbr.rel (0) target = $region5
    $region4: #{lstm_forward.1} parent=1 // pred_region
      _
    $region5: #{lstm_forward.1} parent=1 // pred_fallthru
      _
    // Predicated region
    $region6: #{lstm_forward.1} parent=1 // pred_check
      _
    $region7: #{lstm_forward.1} parent=1 // pred_check_branch
      %15 = sbr.rel (0) target = $region9
    $region8: #{lstm_forward.1} parent=1 // pred_region
      _
    $region9: #{lstm_forward.1} parent=1 // pred_fallthru
      _
    // Predicated region
    $region10: #{lstm_forward.1} parent=1 // pred_check
      _
    $region11: #{lstm_forward.1} parent=1 // pred_check_branch
      %17 = sbr.rel (0) target = $region13
    $region12: #{lstm_forward.1} parent=1 // pred_region
      _
    $region13: #{lstm_forward.1} parent=1 // pred_fallthru
      _
    // Predicated region
    $region14: #{lstm_forward.1} parent=1 // pred_check
      _
    $region15: #{lstm_forward.1} parent=1 // pred_check_branch
      %19 = sbr.rel (0) target = $region17
    $region16: #{lstm_forward.1} parent=1 // pred_region
      _
    $region17: #{lstm_forward.1} parent=1 // pred_fallthru
      _
    // Predicated region
    $region18: #{lstm_forward.1} parent=1 // pred_check
      _
    $region19: #{lstm_forward.1} parent=1 // pred_check_branch
      %21 = sbr.rel (0) target = $region21
    $region20: #{lstm_forward.1} parent=1 // pred_region
      _
    $region21: #{lstm_forward.1} parent=1 // pred_fallthru
      _
    // Predicated region
    $region22: #{lstm_forward.1} parent=1 // pred_check
      _
    $region23: #{lstm_forward.1} parent=1 // pred_check_branch
      %23 = sbr.rel (0) target = $region25
    $region24: #{lstm_forward.1} parent=1 // pred_region
      _
    $region25: #{lstm_forward.1} parent=1 // pred_fallthru
      _
    %v24 = vld [vmem:[%s0] sm:$0xff]
    %v25 = vld [vmem:[%s0 + $0x8] sm:$0xff]
    %v26 = vld [vmem:[%s0 + $0x10] sm:$0xff]
    %v27 = vld [vmem:[%s0 + $0x18] sm:$0xff]
    %v28 = vld [vmem:[%s0 + $0x20] sm:$0xff]
    %v29 = vld [vmem:[%s0 + $0x28] sm:$0xff]
    %v30 = vld [vmem:[%s0 + $0x30] sm:$0xff]
    %v31 = vld [vmem:[%s1] sm:$0xff]
    %v32 = vld [vmem:[%s1 + $0x8] sm:$0xff]
    %v33 = vld [vmem:[%s1 + $0x10] sm:$0xff]
    %v34 = vld [vmem:[%s1 + $0x18] sm:$0xff]
    %v35 = vld [vmem:[%s1 + $0x20] sm:$0xff]
    %v36 = vld [vmem:[%s1 + $0x28] sm:$0xff]
    %v37 = vld [vmem:[%s1 + $0x30] sm:$0xf]
    %v38 = vld [vmem:[%s1 + $0x38] sm:$0xf]
    %v39 = vld [vmem:[%s3] sm:$0x3]
    %v41 = vlaneseq
    %v42 = vshrl.u32 %v41, 7
    %v43 = vsub.s32 0, %v42
    %v44 = vrot.slane %v39, %v43
    %v45 = vlaneseq
    %v46 = vshrl.u32 %v45, 7
    %v47 = vsub.s32 1, %v46
    %v48 = vrot.slane %v39, %v47
    %vm51 = vcmask 228352
    %v53 = vsel %vm51, %v24, 0
    %v56 = vsel %vm51, %v25, 0
    %v59 = vsel %vm51, %v26, 0
    %v62 = vsel %vm51, %v27, 0
    %v65 = vsel %vm51, %v28, 0
    %v68 = vsel %vm51, %v29, 0
    %v71 = vsel %vm51, %v30, 0
    %vm73 = vcmask 1043456
    %v75 = vsel %vm73, %v37, 0
    %v78 = vsel %vm73, %v38, 0
    %80 = vmatprep.subr.mxu0 %v32
    %81 = vmatpush1.msra.mxu0 %v31
    %82 = vmatprep.subr.mxu0 %v34
    %83 = vmatpush1.msra.mxu0 %v33
    %84 = vmatprep.subr.mxu0 %v36
    %85 = vmatpush1.msra.mxu0 %v35
    %86 = vmatprep.subr.mxu0 %v78
    %87 = vmatpush1.msra.mxu0 %v75
    %88 = vmatprep.subr.mxu0 0.0
    %89 = vmatpush1.msra.mxu0 0.0
    %90 = vmatprep.subr.mxu0 0.0
    %91 = vmatpush1.msra.mxu0 0.0
    %92 = vmatprep.subr.mxu0 0.0
    %93 = vmatpush1.msra.mxu0 0.0
    %94 = vmatprep.subr.mxu0 0.0
    %95 = vmatpush1.msra.mxu0 0.0
    %96 = vmatprep.subr.mxu0 0.0
    %97 = vmatpush1.msra.mxu0 0.0
    %98 = vmatprep.subr.mxu0 0.0
    %99 = vmatpush1.msra.mxu0 0.0
    %100 = vmatprep.subr.mxu0 0.0
    %101 = vmatpush1.msra.mxu0 0.0
    %102 = vmatprep.subr.mxu0 0.0
    %103 = vmatpush1.msra.mxu0 0.0
    %104 = vmatprep.subr.mxu0 0.0
    %105 = vmatpush1.msra.mxu0 0.0
    %106 = vmatprep.subr.mxu0 0.0
    %107 = vmatpush1.msra.mxu0 0.0
    %108 = vmatprep.subr.mxu0 0.0
    %109 = vmatpush1.msra.mxu0 0.0
    %110 = vmatprep.subr.mxu0 0.0
    %111 = vmatpush1.msra.mxu0 0.0
    %112 = vmatprep.subr.mxu0 0.0
    %113 = vmatpush1.msra.mxu0 0.0
    %114 = vmatprep.subr.mxu0 0.0
    %115 = vmatpush1.msra.mxu0 0.0
    %116 = vmatprep.subr.mxu0 0.0
    %117 = vmatpush1.msra.mxu0 0.0
    %118 = vmatprep.subr.mxu0 0.0
    %119 = vmatpush1.msra.mxu0 0.0
    %120 = vmatprep.subr.mxu0 0.0
    %121 = vmatpush1.msra.mxu0 0.0
    %122 = vmatprep.subr.mxu0 0.0
    %123 = vmatpush1.msra.mxu0 0.0
    %124 = vmatprep.subr.mxu0 0.0
    %125 = vmatpush1.msra.mxu0 0.0
    %126 = vmatprep.subr.mxu0 0.0
    %127 = vmatpush1.msra.mxu0 0.0
    %128 = vmatprep.subr.mxu0 0.0
    %129 = vmatpush1.msra.mxu0 0.0
    %130 = vmatprep.subr.mxu0 0.0
    %131 = vmatpush1.msra.mxu0 0.0
    %132 = vmatprep.subr.mxu0 0.0
    %133 = vmatpush1.msra.mxu0 0.0
    %134 = vmatprep.subr.mxu0 0.0
    %135 = vmatpush1.msra.mxu0 0.0
    %136 = vmatprep.subr.mxu0 0.0
    %137 = vmatpush1.msra.mxu0 0.0
    %138 = vmatprep.subr.mxu0 0.0
    %139 = vmatpush1.msra.mxu0 0.0
    %140 = vmatprep.subr.mxu0 0.0
    %141 = vmatpush1.msra.mxu0 0.0
    %142 = vmatprep.subr.mxu0 0.0
    %143 = vmatpush1.msra.mxu0 0.0
    %144 = vmatprep.mubr.f32.mxu0 0.0
    %145 = vmatmul.mubr.f32.gmra.mrb[0].mxu0 %v53
    %v146 = vpop.f32.mrb[0].mxu0
    %v147 = vadd.f32 %v44, %v146
    %v148 = vpop.f32.mrb[0].mxu0
    %v149 = vadd.f32 %v48, %v148
    %150 = vmatprep.mubr.f32.mxu0 0.0
    %151 = vmatmul.mubr.f32.gmra.mrb[0].mxu0 %v56
    %v152 = vpop.f32.mrb[0].mxu0
    %v153 = vadd.f32 %v44, %v152
    %v154 = vpop.f32.mrb[0].mxu0
    %v155 = vadd.f32 %v48, %v154
    %156 = vmatprep.mubr.f32.mxu0 0.0
    %157 = vmatmul.mubr.f32.gmra.mrb[0].mxu0 %v59
    %v158 = vpop.f32.mrb[0].mxu0
    %v159 = vadd.f32 %v44, %v158
    %v160 = vpop.f32.mrb[0].mxu0
    %v161 = vadd.f32 %v48, %v160
    %162 = vmatprep.mubr.f32.mxu0 0.0
    %163 = vmatmul.mubr.f32.gmra.mrb[0].mxu0 %v62
    %v164 = vpop.f32.mrb[0].mxu0
    %v165 = vadd.f32 %v44, %v164
    %v166 = vpop.f32.mrb[0].mxu0
    %v167 = vadd.f32 %v48, %v166
    %168 = vmatprep.mubr.f32.mxu0 0.0
    %169 = vmatmul.mubr.f32.gmra.mrb[0].mxu0 %v65
    %v170 = vpop.f32.mrb[0].mxu0
    %v171 = vadd.f32 %v44, %v170
    %v172 = vpop.f32.mrb[0].mxu0
    %v173 = vadd.f32 %v48, %v172
    %174 = vmatprep.mubr.f32.mxu0 0.0
    %175 = vmatmul.mubr.f32.gmra.mrb[0].mxu0 %v68
    %v176 = vpop.f32.mrb[0].mxu0
    %v177 = vadd.f32 %v44, %v176
    %v178 = vpop.f32.mrb[0].mxu0
    %v179 = vadd.f32 %v48, %v178
    %180 = vmatprep.mubr.f32.mxu0 0.0
    %181 = vmatmul.mubr.f32.gmra.mrb[0].mxu0 %v71
    %v182 = vpop.f32.mrb[0].mxu0
    %v183 = vadd.f32 %v44, %v182
    %v184 = vpop.f32.mrb[0].mxu0
    %v185 = vadd.f32 %v48, %v184
    %186 = vdwg.mxu0
    %v187 = vld [vmem:[%s2] sm:$0xff]
    %v188 = vld [vmem:[%s2 + $0x8] sm:$0xff]
    %v189 = vld [vmem:[%s2 + $0x10] sm:$0xff]
    %v190 = vld [vmem:[%s2 + $0x18] sm:$0xff]
    %v191 = vld [vmem:[%s2 + $0x20] sm:$0xff]
    %v192 = vld [vmem:[%s2 + $0x28] sm:$0xff]
    %v193 = vld [vmem:[%s2 + $0x30] sm:$0xff]
    %v194 = vld [vmem:[%s2 + $0x38] sm:$0xff]
    %v195 = vld [vmem:[%s2 + $0x40] sm:$0xff]
    %v196 = vld [vmem:[%s2 + $0x48] sm:$0xff]
    %v197 = vld [vmem:[%s2 + $0x50] sm:$0xff]
    %v198 = vld [vmem:[%s2 + $0x58] sm:$0xff]
    %v199 = vld [vmem:[%s2 + $0x60] sm:$0xff]
    %v200 = vld [vmem:[%s2 + $0x68] sm:$0xff]
    %v201 = vld [vmem:[%s2 + $0x70] sm:$0xff]
    %v202 = vld [vmem:[%s2 + $0x78] sm:$0xff]
    %vm203 = vcmask 523264
    %v205 = vsel %vm203, 0.0, 0
    %207 = vmatprep.subr.mxu0 %v188
    %208 = vmatpush1.msra.mxu0 %v187
    %209 = vmatprep.subr.mxu0 %v190
    %210 = vmatpush1.msra.mxu0 %v189
    %211 = vmatprep.subr.mxu0 %v192
    %212 = vmatpush1.msra.mxu0 %v191
    %213 = vmatprep.subr.mxu0 %v194
    %214 = vmatpush1.msra.mxu0 %v193
    %215 = vmatprep.subr.mxu0 %v196
    %216 = vmatpush1.msra.mxu0 %v195
    %217 = vmatprep.subr.mxu0 %v198
    %218 = vmatpush1.msra.mxu0 %v197
    %219 = vmatprep.subr.mxu0 %v200
    %220 = vmatpush1.msra.mxu0 %v199
    %221 = vmatprep.subr.mxu0 %v202
    %222 = vmatpush1.msra.mxu0 %v201
    %223 = vmatprep.subr.mxu0 0.0
    %224 = vmatpush1.msra.mxu0 0.0
    %225 = vmatprep.subr.mxu0 0.0
    %226 = vmatpush1.msra.mxu0 0.0
    %227 = vmatprep.subr.mxu0 0.0
    %228 = vmatpush1.msra.mxu0 0.0
    %229 = vmatprep.subr.mxu0 0.0
    %230 = vmatpush1.msra.mxu0 0.0
    %231 = vmatprep.subr.mxu0 0.0
    %232 = vmatpush1.msra.mxu0 0.0
    %233 = vmatprep.subr.mxu0 0.0
    %234 = vmatpush1.msra.mxu0 0.0
    %235 = vmatprep.subr.mxu0 0.0
    %236 = vmatpush1.msra.mxu0 0.0
    %237 = vmatprep.subr.mxu0 0.0
    %238 = vmatpush1.msra.mxu0 0.0
    %239 = vmatprep.subr.mxu0 0.0
    %240 = vmatpush1.msra.mxu0 0.0
    %241 = vmatprep.subr.mxu0 0.0
    %242 = vmatpush1.msra.mxu0 0.0
    %243 = vmatprep.subr.mxu0 0.0
    %244 = vmatpush1.msra.mxu0 0.0
    %245 = vmatprep.subr.mxu0 0.0
    %246 = vmatpush1.msra.mxu0 0.0
    %247 = vmatprep.subr.mxu0 0.0
    %248 = vmatpush1.msra.mxu0 0.0
    %249 = vmatprep.subr.mxu0 0.0
    %250 = vmatpush1.msra.mxu0 0.0
    %251 = vmatprep.subr.mxu0 0.0
    %252 = vmatpush1.msra.mxu0 0.0
    %253 = vmatprep.subr.mxu0 0.0
    %254 = vmatpush1.msra.mxu0 0.0
    %255 = vmatprep.subr.mxu0 0.0
    %256 = vmatpush1.msra.mxu0 0.0
    %257 = vmatprep.subr.mxu0 0.0
    %258 = vmatpush1.msra.mxu0 0.0
    %259 = vmatprep.subr.mxu0 0.0
    %260 = vmatpush1.msra.mxu0 0.0
    %261 = vmatprep.subr.mxu0 0.0
    %262 = vmatpush1.msra.mxu0 0.0
    %263 = vmatprep.subr.mxu0 0.0
    %264 = vmatpush1.msra.mxu0 0.0
    %265 = vmatprep.subr.mxu0 0.0
    %266 = vmatpush1.msra.mxu0 0.0
    %267 = vmatprep.subr.mxu0 0.0
    %268 = vmatpush1.msra.mxu0 0.0
    %269 = vmatprep.subr.mxu0 0.0
    %270 = vmatpush1.msra.mxu0 0.0
    %271 = vmatprep.mubr.f32.mxu0 0.0
    %272 = vmatmul.mubr.f32.gmra.mrb[0].mxu0 %v205
    %v273 = vpop.f32.mrb[0].mxu0
    %v274 = vadd.f32 0.0, %v273
    %v275 = vpop.f32.mrb[0].mxu0
    %v276 = vadd.f32 0.0, %v275
    %277 = vdwg.mxu0
    %v278 = vadd.f32 %v147, %v274
    %v279 = vadd.f32 %v149, %v276
    %v280 = vxor.u32 %v278, 2147483648
    %v281 = vmul.f32 %v280, 1.442695
    %v282 = vpow.pop %v281
    %v283 = vadd.f32 %v282, 1.0
    %v284 = vrcp.pop %v283
    %v285 = vmul.f32 1.0, %v284
    %v286 = vtanh.pop %v279
    %v287 = vxor.u32 %v279, 2147483648
    %v288 = vmul.f32 %v287, 1.442695
    %v289 = vpow.pop %v288
    %v290 = vadd.f32 %v289, 1.0
    %v291 = vrcp.pop %v290
    %v292 = vmul.f32 1.0, %v291
    %v293 = vmul.f32 %v285, 0.0
    %v294 = vmul.f32 %v285, %v286
    %296 = vrot.lane.b32.xlu0 %v294, 64
    %v297 = vpop.permute.xlu0 %296
    %v299 = vadd.f32 %v293, %v297
    %v300 = vtanh.pop %v299
    %v301 = vmul.f32 %v292, %v300
    %303 = vrot.lane.b32.xlu0 %v301, 64
    %v304 = vpop.permute.xlu0 %303
    %v305 = vsel %vm203, %v304, 0
    %307 = vmatprep.subr.mxu0 %v188
    %308 = vmatpush1.msra.mxu0 %v187
    %309 = vmatprep.subr.mxu0 %v190
    %310 = vmatpush1.msra.mxu0 %v189
    %311 = vmatprep.subr.mxu0 %v192
    %312 = vmatpush1.msra.mxu0 %v191
    %313 = vmatprep.subr.mxu0 %v194
    %314 = vmatpush1.msra.mxu0 %v193
    %315 = vmatprep.subr.mxu0 %v196
    %316 = vmatpush1.msra.mxu0 %v195
    %317 = vmatprep.subr.mxu0 %v198
    %318 = vmatpush1.msra.mxu0 %v197
    %319 = vmatprep.subr.mxu0 %v200
    %320 = vmatpush1.msra.mxu0 %v199
    %321 = vmatprep.subr.mxu0 %v202
    %322 = vmatpush1.msra.mxu0 %v201
    %323 = vmatprep.subr.mxu0 0.0
    %324 = vmatpush1.msra.mxu0 0.0
    %325 = vmatprep.subr.mxu0 0.0
    %326 = vmatpush1.msra.mxu0 0.0
    %327 = vmatprep.subr.mxu0 0.0
    %328 = vmatpush1.msra.mxu0 0.0
    %329 = vmatprep.subr.mxu0 0.0
    %330 = vmatpush1.msra.mxu0 0.0
    %331 = vmatprep.subr.mxu0 0.0
    %332 = vmatpush1.msra.mxu0 0.0
    %333 = vmatprep.subr.mxu0 0.0
    %334 = vmatpush1.msra.mxu0 0.0
    %335 = vmatprep.subr.mxu0 0.0
    %336 = vmatpush1.msra.mxu0 0.0
    %337 = vmatprep.subr.mxu0 0.0
    %338 = vmatpush1.msra.mxu0 0.0
    %339 = vmatprep.subr.mxu0 0.0
    %340 = vmatpush1.msra.mxu0 0.0
    %341 = vmatprep.subr.mxu0 0.0
    %342 = vmatpush1.msra.mxu0 0.0
    %343 = vmatprep.subr.mxu0 0.0
    %344 = vmatpush1.msra.mxu0 0.0
    %345 = vmatprep.subr.mxu0 0.0
    %346 = vmatpush1.msra.mxu0 0.0
    %347 = vmatprep.subr.mxu0 0.0
    %348 = vmatpush1.msra.mxu0 0.0
    %349 = vmatprep.subr.mxu0 0.0
    %350 = vmatpush1.msra.mxu0 0.0
    %351 = vmatprep.subr.mxu0 0.0
    %352 = vmatpush1.msra.mxu0 0.0
    %353 = vmatprep.subr.mxu0 0.0
    %354 = vmatpush1.msra.mxu0 0.0
    %355 = vmatprep.subr.mxu0 0.0
    %356 = vmatpush1.msra.mxu0 0.0
    %357 = vmatprep.subr.mxu0 0.0
    %358 = vmatpush1.msra.mxu0 0.0
    %359 = vmatprep.subr.mxu0 0.0
    %360 = vmatpush1.msra.mxu0 0.0
    %361 = vmatprep.subr.mxu0 0.0
    %362 = vmatpush1.msra.mxu0 0.0
    %363 = vmatprep.subr.mxu0 0.0
    %364 = vmatpush1.msra.mxu0 0.0
    %365 = vmatprep.subr.mxu0 0.0
    %366 = vmatpush1.msra.mxu0 0.0
    %367 = vmatprep.subr.mxu0 0.0
    %368 = vmatpush1.msra.mxu0 0.0
    %369 = vmatprep.subr.mxu0 0.0
    %370 = vmatpush1.msra.mxu0 0.0
    %371 = vmatprep.mubr.f32.mxu0 0.0
    %372 = vmatmul.mubr.f32.gmra.mrb[0].mxu0 %v305
    %v373 = vpop.f32.mrb[0].mxu0
    %v374 = vadd.f32 0.0, %v373
    %v375 = vpop.f32.mrb[0].mxu0
    %v376 = vadd.f32 0.0, %v375
    %377 = vdwg.mxu0
    %v380 = vrot.slane %v374, 6
    %v381 = vrot.slane %v376, 6
    %v384 = vadd.f32 %v147, %v380
    %v385 = vadd.f32 %v149, %v381
    %v386 = vxor.u32 %v384, 2147483648
    %v387 = vmul.f32 %v386, 1.442695
    %v388 = vpow.pop %v387
    %v389 = vadd.f32 %v388, 1.0
    %v390 = vrcp.pop %v389
    %v391 = vmul.f32 1.0, %v390
    %v392 = vtanh.pop %v385
    %v393 = vxor.u32 %v385, 2147483648
    %v394 = vmul.f32 %v393, 1.442695
    %v395 = vpow.pop %v394
    %v396 = vadd.f32 %v395, 1.0
    %v397 = vrcp.pop %v396
    %v398 = vmul.f32 1.0, %v397
    %v400 = vrot.slane %v299, 6
    %v402 = vmul.f32 %v391, %v400
    %v403 = vmul.f32 %v391, %v392
    %405 = vrot.lane.b32.xlu0 %v403, 64
    %v406 = vpop.permute.xlu0 %405
    %v408 = vadd.f32 %v402, %v406
    %v409 = vtanh.pop %v408
    %v410 = vmul.f32 %v398, %v409
    %v412 = vrot.slane %v410, 2
    %413 = vrot.lane.b32.xlu0 %v412, 64
    %v414 = vpop.permute.xlu0 %413
    %v415 = vsel %vm203, %v414, 0
    %417 = vmatprep.subr.mxu0 %v188
    %418 = vmatpush1.msra.mxu0 %v187
    %419 = vmatprep.subr.mxu0 %v190
    %420 = vmatpush1.msra.mxu0 %v189
    %421 = vmatprep.subr.mxu0 %v192
    %422 = vmatpush1.msra.mxu0 %v191
    %423 = vmatprep.subr.mxu0 %v194
    %424 = vmatpush1.msra.mxu0 %v193
    %425 = vmatprep.subr.mxu0 %v196
    %426 = vmatpush1.msra.mxu0 %v195
    %427 = vmatprep.subr.mxu0 %v198
    %428 = vmatpush1.msra.mxu0 %v197
    %429 = vmatprep.subr.mxu0 %v200
    %430 = vmatpush1.msra.mxu0 %v199
    %431 = vmatprep.subr.mxu0 %v202
    %432 = vmatpush1.msra.mxu0 %v201
    %433 = vmatprep.subr.mxu0 0.0
    %434 = vmatpush1.msra.mxu0 0.0
    %435 = vmatprep.subr.mxu0 0.0
    %436 = vmatpush1.msra.mxu0 0.0
    %437 = vmatprep.subr.mxu0 0.0
    %438 = vmatpush1.msra.mxu0 0.0
    %439 = vmatprep.subr.mxu0 0.0
    %440 = vmatpush1.msra.mxu0 0.0
    %441 = vmatprep.subr.mxu0 0.0
    %442 = vmatpush1.msra.mxu0 0.0
    %443 = vmatprep.subr.mxu0 0.0
    %444 = vmatpush1.msra.mxu0 0.0
    %445 = vmatprep.subr.mxu0 0.0
    %446 = vmatpush1.msra.mxu0 0.0
    %447 = vmatprep.subr.mxu0 0.0
    %448 = vmatpush1.msra.mxu0 0.0
    %449 = vmatprep.subr.mxu0 0.0
    %450 = vmatpush1.msra.mxu0 0.0
    %451 = vmatprep.subr.mxu0 0.0
    %452 = vmatpush1.msra.mxu0 0.0
    %453 = vmatprep.subr.mxu0 0.0
    %454 = vmatpush1.msra.mxu0 0.0
    %455 = vmatprep.subr.mxu0 0.0
    %456 = vmatpush1.msra.mxu0 0.0
    %457 = vmatprep.subr.mxu0 0.0
    %458 = vmatpush1.msra.mxu0 0.0
    %459 = vmatprep.subr.mxu0 0.0
    %460 = vmatpush1.msra.mxu0 0.0
    %461 = vmatprep.subr.mxu0 0.0
    %462 = vmatpush1.msra.mxu0 0.0
    %463 = vmatprep.subr.mxu0 0.0
    %464 = vmatpush1.msra.mxu0 0.0
    %465 = vmatprep.subr.mxu0 0.0
    %466 = vmatpush1.msra.mxu0 0.0
    %467 = vmatprep.subr.mxu0 0.0
    %468 = vmatpush1.msra.mxu0 0.0
    %469 = vmatprep.subr.mxu0 0.0
    %470 = vmatpush1.msra.mxu0 0.0
    %471 = vmatprep.subr.mxu0 0.0
    %472 = vmatpush1.msra.mxu0 0.0
    %473 = vmatprep.subr.mxu0 0.0
    %474 = vmatpush1.msra.mxu0 0.0
    %475 = vmatprep.subr.mxu0 0.0
    %476 = vmatpush1.msra.mxu0 0.0
    %477 = vmatprep.subr.mxu0 0.0
    %478 = vmatpush1.msra.mxu0 0.0
    %479 = vmatprep.subr.mxu0 0.0
    %480 = vmatpush1.msra.mxu0 0.0
    %481 = vmatprep.mubr.f32.mxu0 0.0
    %482 = vmatmul.mubr.f32.gmra.mrb[0].mxu0 %v415
    %v483 = vpop.f32.mrb[0].mxu0
    %v484 = vadd.f32 0.0, %v483
    %v485 = vpop.f32.mrb[0].mxu0
    %v486 = vadd.f32 0.0, %v485
    %487 = vdwg.mxu0
    %v490 = vrot.slane %v484, 4
    %v491 = vrot.slane %v486, 4
    %v494 = vadd.f32 %v147, %v490
    %v495 = vadd.f32 %v149, %v491
    %v496 = vxor.u32 %v494, 2147483648
    %v497 = vmul.f32 %v496, 1.442695
    %v498 = vpow.pop %v497
    %v499 = vadd.f32 %v498, 1.0
    %v500 = vrcp.pop %v499
    %v501 = vmul.f32 1.0, %v500
    %v502 = vtanh.pop %v495
    %v503 = vxor.u32 %v495, 2147483648
    %v504 = vmul.f32 %v503, 1.442695
    %v505 = vpow.pop %v504
    %v506 = vadd.f32 %v505, 1.0
    %v507 = vrcp.pop %v506
    %v508 = vmul.f32 1.0, %v507
    %v510 = vrot.slane %v408, 6
    %v512 = vmul.f32 %v501, %v510
    %v513 = vmul.f32 %v501, %v502
    %515 = vrot.lane.b32.xlu0 %v513, 64
    %v516 = vpop.permute.xlu0 %515
    %v518 = vadd.f32 %v512, %v516
    %v519 = vtanh.pop %v518
    %v520 = vmul.f32 %v508, %v519
    %v522 = vrot.slane %v520, 4
    %523 = vrot.lane.b32.xlu0 %v522, 64
    %v524 = vpop.permute.xlu0 %523
    %v525 = vsel %vm203, %v524, 0
    %527 = vmatprep.subr.mxu0 %v188
    %528 = vmatpush1.msra.mxu0 %v187
    %529 = vmatprep.subr.mxu0 %v190
    %530 = vmatpush1.msra.mxu0 %v189
    %531 = vmatprep.subr.mxu0 %v192
    %532 = vmatpush1.msra.mxu0 %v191
    %533 = vmatprep.subr.mxu0 %v194
    %534 = vmatpush1.msra.mxu0 %v193
    %535 = vmatprep.subr.mxu0 %v196
    %536 = vmatpush1.msra.mxu0 %v195
    %537 = vmatprep.subr.mxu0 %v198
    %538 = vmatpush1.msra.mxu0 %v197
    %539 = vmatprep.subr.mxu0 %v200
    %540 = vmatpush1.msra.mxu0 %v199
    %541 = vmatprep.subr.mxu0 %v202
    %542 = vmatpush1.msra.mxu0 %v201
    %543 = vmatprep.subr.mxu0 0.0
    %544 = vmatpush1.msra.mxu0 0.0
    %545 = vmatprep.subr.mxu0 0.0
    %546 = vmatpush1.msra.mxu0 0.0
    %547 = vmatprep.subr.mxu0 0.0
    %548 = vmatpush1.msra.mxu0 0.0
    %549 = vmatprep.subr.mxu0 0.0
    %550 = vmatpush1.msra.mxu0 0.0
    %551 = vmatprep.subr.mxu0 0.0
    %552 = vmatpush1.msra.mxu0 0.0
    %553 = vmatprep.subr.mxu0 0.0
    %554 = vmatpush1.msra.mxu0 0.0
    %555 = vmatprep.subr.mxu0 0.0
    %556 = vmatpush1.msra.mxu0 0.0
    %557 = vmatprep.subr.mxu0 0.0
    %558 = vmatpush1.msra.mxu0 0.0
    %559 = vmatprep.subr.mxu0 0.0
    %560 = vmatpush1.msra.mxu0 0.0
    %561 = vmatprep.subr.mxu0 0.0
    %562 = vmatpush1.msra.mxu0 0.0
    %563 = vmatprep.subr.mxu0 0.0
    %564 = vmatpush1.msra.mxu0 0.0
    %565 = vmatprep.subr.mxu0 0.0
    %566 = vmatpush1.msra.mxu0 0.0
    %567 = vmatprep.subr.mxu0 0.0
    %568 = vmatpush1.msra.mxu0 0.0
    %569 = vmatprep.subr.mxu0 0.0
    %570 = vmatpush1.msra.mxu0 0.0
    %571 = vmatprep.subr.mxu0 0.0
    %572 = vmatpush1.msra.mxu0 0.0
    %573 = vmatprep.subr.mxu0 0.0
    %574 = vmatpush1.msra.mxu0 0.0
    %575 = vmatprep.subr.mxu0 0.0
    %576 = vmatpush1.msra.mxu0 0.0
    %577 = vmatprep.subr.mxu0 0.0
    %578 = vmatpush1.msra.mxu0 0.0
    %579 = vmatprep.subr.mxu0 0.0
    %580 = vmatpush1.msra.mxu0 0.0
    %581 = vmatprep.subr.mxu0 0.0
    %582 = vmatpush1.msra.mxu0 0.0
    %583 = vmatprep.subr.mxu0 0.0
    %584 = vmatpush1.msra.mxu0 0.0
    %585 = vmatprep.subr.mxu0 0.0
    %586 = vmatpush1.msra.mxu0 0.0
    %587 = vmatprep.subr.mxu0 0.0
    %588 = vmatpush1.msra.mxu0 0.0
    %589 = vmatprep.subr.mxu0 0.0
    %590 = vmatpush1.msra.mxu0 0.0
    %591 = vmatprep.mubr.f32.mxu0 0.0
    %592 = vmatmul.mubr.f32.gmra.mrb[0].mxu0 %v525
    %v593 = vpop.f32.mrb[0].mxu0
    %v594 = vadd.f32 0.0, %v593
    %v595 = vpop.f32.mrb[0].mxu0
    %v596 = vadd.f32 0.0, %v595
    %597 = vdwg.mxu0
    %v600 = vrot.slane %v594, 2
    %v601 = vrot.slane %v596, 2
    %v604 = vadd.f32 %v147, %v600
    %v605 = vadd.f32 %v149, %v601
    %v606 = vxor.u32 %v604, 2147483648
    %v607 = vmul.f32 %v606, 1.442695
    %v608 = vpow.pop %v607
    %v609 = vadd.f32 %v608, 1.0
    %v610 = vrcp.pop %v609
    %v611 = vmul.f32 1.0, %v610
    %v612 = vtanh.pop %v605
    %v613 = vxor.u32 %v605, 2147483648
    %v614 = vmul.f32 %v613, 1.442695
    %v615 = vpow.pop %v614
    %v616 = vadd.f32 %v615, 1.0
    %v617 = vrcp.pop %v616
    %v618 = vmul.f32 1.0, %v617
    %v620 = vrot.slane %v518, 6
    %v622 = vmul.f32 %v611, %v620
    %v623 = vmul.f32 %v611, %v612
    %625 = vrot.lane.b32.xlu0 %v623, 64
    %v626 = vpop.permute.xlu0 %625
    %v628 = vadd.f32 %v622, %v626
    %v629 = vtanh.pop %v628
    %v630 = vmul.f32 %v618, %v629
    %v632 = vrot.slane %v630, 6
    %633 = vrot.lane.b32.xlu0 %v632, 64
    %v634 = vpop.permute.xlu0 %633
    %v635 = vsel %vm203, %v634, 0
    %637 = vmatprep.subr.mxu0 %v188
    %638 = vmatpush1.msra.mxu0 %v187
    %639 = vmatprep.subr.mxu0 %v190
    %640 = vmatpush1.msra.mxu0 %v189
    %641 = vmatprep.subr.mxu0 %v192
    %642 = vmatpush1.msra.mxu0 %v191
    %643 = vmatprep.subr.mxu0 %v194
    %644 = vmatpush1.msra.mxu0 %v193
    %645 = vmatprep.subr.mxu0 %v196
    %646 = vmatpush1.msra.mxu0 %v195
    %647 = vmatprep.subr.mxu0 %v198
    %648 = vmatpush1.msra.mxu0 %v197
    %649 = vmatprep.subr.mxu0 %v200
    %650 = vmatpush1.msra.mxu0 %v199
    %651 = vmatprep.subr.mxu0 %v202
    %652 = vmatpush1.msra.mxu0 %v201
    %653 = vmatprep.subr.mxu0 0.0
    %654 = vmatpush1.msra.mxu0 0.0
    %655 = vmatprep.subr.mxu0 0.0
    %656 = vmatpush1.msra.mxu0 0.0
    %657 = vmatprep.subr.mxu0 0.0
    %658 = vmatpush1.msra.mxu0 0.0
    %659 = vmatprep.subr.mxu0 0.0
    %660 = vmatpush1.msra.mxu0 0.0
    %661 = vmatprep.subr.mxu0 0.0
    %662 = vmatpush1.msra.mxu0 0.0
    %663 = vmatprep.subr.mxu0 0.0
    %664 = vmatpush1.msra.mxu0 0.0
    %665 = vmatprep.subr.mxu0 0.0
    %666 = vmatpush1.msra.mxu0 0.0
    %667 = vmatprep.subr.mxu0 0.0
    %668 = vmatpush1.msra.mxu0 0.0
    %669 = vmatprep.subr.mxu0 0.0
    %670 = vmatpush1.msra.mxu0 0.0
    %671 = vmatprep.subr.mxu0 0.0
    %672 = vmatpush1.msra.mxu0 0.0
    %673 = vmatprep.subr.mxu0 0.0
    %674 = vmatpush1.msra.mxu0 0.0
    %675 = vmatprep.subr.mxu0 0.0
    %676 = vmatpush1.msra.mxu0 0.0
    %677 = vmatprep.subr.mxu0 0.0
    %678 = vmatpush1.msra.mxu0 0.0
    %679 = vmatprep.subr.mxu0 0.0
    %680 = vmatpush1.msra.mxu0 0.0
    %681 = vmatprep.subr.mxu0 0.0
    %682 = vmatpush1.msra.mxu0 0.0
    %683 = vmatprep.subr.mxu0 0.0
    %684 = vmatpush1.msra.mxu0 0.0
    %685 = vmatprep.subr.mxu0 0.0
    %686 = vmatpush1.msra.mxu0 0.0
    %687 = vmatprep.subr.mxu0 0.0
    %688 = vmatpush1.msra.mxu0 0.0
    %689 = vmatprep.subr.mxu0 0.0
    %690 = vmatpush1.msra.mxu0 0.0
    %691 = vmatprep.subr.mxu0 0.0
    %692 = vmatpush1.msra.mxu0 0.0
    %693 = vmatprep.subr.mxu0 0.0
    %694 = vmatpush1.msra.mxu0 0.0
    %695 = vmatprep.subr.mxu0 0.0
    %696 = vmatpush1.msra.mxu0 0.0
    %697 = vmatprep.subr.mxu0 0.0
    %698 = vmatpush1.msra.mxu0 0.0
    %699 = vmatprep.subr.mxu0 0.0
    %700 = vmatpush1.msra.mxu0 0.0
    %701 = vmatprep.mubr.f32.mxu0 0.0
    %702 = vmatmul.mubr.f32.gmra.mrb[0].mxu0 %v635
    %v703 = vpop.f32.mrb[0].mxu0
    %v704 = vadd.f32 0.0, %v703
    %v705 = vpop.f32.mrb[0].mxu0
    %v706 = vadd.f32 0.0, %v705
    %707 = vdwg.mxu0
    %v708 = vadd.f32 %v153, %v704
    %v709 = vadd.f32 %v155, %v706
    %v710 = vxor.u32 %v708, 2147483648
    %v711 = vmul.f32 %v710, 1.442695
    %v712 = vpow.pop %v711
    %v713 = vadd.f32 %v712, 1.0
    %v714 = vrcp.pop %v713
    %v715 = vmul.f32 1.0, %v714
    %v716 = vtanh.pop %v709
    %v717 = vxor.u32 %v709, 2147483648
    %v718 = vmul.f32 %v717, 1.442695
    %v719 = vpow.pop %v718
    %v720 = vadd.f32 %v719, 1.0
    %v721 = vrcp.pop %v720
    %v722 = vmul.f32 1.0, %v721
    %v724 = vrot.slane %v628, 6
    %v726 = vmul.f32 %v715, %v724
    %v727 = vmul.f32 %v715, %v716
    %729 = vrot.lane.b32.xlu0 %v727, 64
    %v730 = vpop.permute.xlu0 %729
    %v732 = vadd.f32 %v726, %v730
    %v733 = vtanh.pop %v732
    %v734 = vmul.f32 %v722, %v733
    %736 = vrot.lane.b32.xlu0 %v734, 64
    %v737 = vpop.permute.xlu0 %736
    %v738 = vsel %vm203, %v737, 0
    %740 = vmatprep.subr.mxu0 %v188
    %741 = vmatpush1.msra.mxu0 %v187
    %742 = vmatprep.subr.mxu0 %v190
    %743 = vmatpush1.msra.mxu0 %v189
    %744 = vmatprep.subr.mxu0 %v192
    %745 = vmatpush1.msra.mxu0 %v191
    %746 = vmatprep.subr.mxu0 %v194
    %747 = vmatpush1.msra.mxu0 %v193
    %748 = vmatprep.subr.mxu0 %v196
    %749 = vmatpush1.msra.mxu0 %v195
    %750 = vmatprep.subr.mxu0 %v198
    %751 = vmatpush1.msra.mxu0 %v197
    %752 = vmatprep.subr.mxu0 %v200
    %753 = vmatpush1.msra.mxu0 %v199
    %754 = vmatprep.subr.mxu0 %v202
    %755 = vmatpush1.msra.mxu0 %v201
    %756 = vmatprep.subr.mxu0 0.0
    %757 = vmatpush1.msra.mxu0 0.0
    %758 = vmatprep.subr.mxu0 0.0
    %759 = vmatpush1.msra.mxu0 0.0
    %760 = vmatprep.subr.mxu0 0.0
    %761 = vmatpush1.msra.mxu0 0.0
    %762 = vmatprep.subr.mxu0 0.0
    %763 = vmatpush1.msra.mxu0 0.0
    %764 = vmatprep.subr.mxu0 0.0
    %765 = vmatpush1.msra.mxu0 0.0
    %766 = vmatprep.subr.mxu0 0.0
    %767 = vmatpush1.msra.mxu0 0.0
    %768 = vmatprep.subr.mxu0 0.0
    %769 = vmatpush1.msra.mxu0 0.0
    %770 = vmatprep.subr.mxu0 0.0
    %771 = vmatpush1.msra.mxu0 0.0
    %772 = vmatprep.subr.mxu0 0.0
    %773 = vmatpush1.msra.mxu0 0.0
    %774 = vmatprep.subr.mxu0 0.0
    %775 = vmatpush1.msra.mxu0 0.0
    %776 = vmatprep.subr.mxu0 0.0
    %777 = vmatpush1.msra.mxu0 0.0
    %778 = vmatprep.subr.mxu0 0.0
    %779 = vmatpush1.msra.mxu0 0.0
    %780 = vmatprep.subr.mxu0 0.0
    %781 = vmatpush1.msra.mxu0 0.0
    %782 = vmatprep.subr.mxu0 0.0
    %783 = vmatpush1.msra.mxu0 0.0
    %784 = vmatprep.subr.mxu0 0.0
    %785 = vmatpush1.msra.mxu0 0.0
    %786 = vmatprep.subr.mxu0 0.0
    %787 = vmatpush1.msra.mxu0 0.0
    %788 = vmatprep.subr.mxu0 0.0
    %789 = vmatpush1.msra.mxu0 0.0
    %790 = vmatprep.subr.mxu0 0.0
    %791 = vmatpush1.msra.mxu0 0.0
    %792 = vmatprep.subr.mxu0 0.0
    %793 = vmatpush1.msra.mxu0 0.0
    %794 = vmatprep.subr.mxu0 0.0
    %795 = vmatpush1.msra.mxu0 0.0
    %796 = vmatprep.subr.mxu0 0.0
    %797 = vmatpush1.msra.mxu0 0.0
    %798 = vmatprep.subr.mxu0 0.0
    %799 = vmatpush1.msra.mxu0 0.0
    %800 = vmatprep.subr.mxu0 0.0
    %801 = vmatpush1.msra.mxu0 0.0
    %802 = vmatprep.subr.mxu0 0.0
    %803 = vmatpush1.msra.mxu0 0.0
    %804 = vmatprep.mubr.f32.mxu0 0.0
    %805 = vmatmul.mubr.f32.gmra.mrb[0].mxu0 %v738
    %v806 = vpop.f32.mrb[0].mxu0
    %v807 = vadd.f32 0.0, %v806
    %v808 = vpop.f32.mrb[0].mxu0
    %v809 = vadd.f32 0.0, %v808
    %810 = vdwg.mxu0
    %v813 = vrot.slane %v807, 6
    %v814 = vrot.slane %v809, 6
    %v817 = vadd.f32 %v153, %v813
    %v818 = vadd.f32 %v155, %v814
    %v819 = vxor.u32 %v817, 2147483648
    %v820 = vmul.f32 %v819, 1.442695
    %v821 = vpow.pop %v820
    %v822 = vadd.f32 %v821, 1.0
    %v823 = vrcp.pop %v822
    %v824 = vmul.f32 1.0, %v823
    %v825 = vtanh.pop %v818
    %v826 = vxor.u32 %v818, 2147483648
    %v827 = vmul.f32 %v826, 1.442695
    %v828 = vpow.pop %v827
    %v829 = vadd.f32 %v828, 1.0
    %v830 = vrcp.pop %v829
    %v831 = vmul.f32 1.0, %v830
    %v833 = vrot.slane %v732, 6
    %v835 = vmul.f32 %v824, %v833
    %v836 = vmul.f32 %v824, %v825
    %838 = vrot.lane.b32.xlu0 %v836, 64
    %v839 = vpop.permute.xlu0 %838
    %v841 = vadd.f32 %v835, %v839
    %v842 = vtanh.pop %v841
    %v843 = vmul.f32 %v831, %v842
    %v845 = vrot.slane %v843, 2
    %846 = vrot.lane.b32.xlu0 %v845, 64
    %v847 = vpop.permute.xlu0 %846
    %v848 = vsel %vm203, %v847, 0
    %850 = vmatprep.subr.mxu0 %v188
    %851 = vmatpush1.msra.mxu0 %v187
    %852 = vmatprep.subr.mxu0 %v190
    %853 = vmatpush1.msra.mxu0 %v189
    %854 = vmatprep.subr.mxu0 %v192
    %855 = vmatpush1.msra.mxu0 %v191
    %856 = vmatprep.subr.mxu0 %v194
    %857 = vmatpush1.msra.mxu0 %v193
    %858 = vmatprep.subr.mxu0 %v196
    %859 = vmatpush1.msra.mxu0 %v195
    %860 = vmatprep.subr.mxu0 %v198
    %861 = vmatpush1.msra.mxu0 %v197
    %862 = vmatprep.subr.mxu0 %v200
    %863 = vmatpush1.msra.mxu0 %v199
    %864 = vmatprep.subr.mxu0 %v202
    %865 = vmatpush1.msra.mxu0 %v201
    %866 = vmatprep.subr.mxu0 0.0
    %867 = vmatpush1.msra.mxu0 0.0
    %868 = vmatprep.subr.mxu0 0.0
    %869 = vmatpush1.msra.mxu0 0.0
    %870 = vmatprep.subr.mxu0 0.0
    %871 = vmatpush1.msra.mxu0 0.0
    %872 = vmatprep.subr.mxu0 0.0
    %873 = vmatpush1.msra.mxu0 0.0
    %874 = vmatprep.subr.mxu0 0.0
    %875 = vmatpush1.msra.mxu0 0.0
    %876 = vmatprep.subr.mxu0 0.0
    %877 = vmatpush1.msra.mxu0 0.0
    %878 = vmatprep.subr.mxu0 0.0
    %879 = vmatpush1.msra.mxu0 0.0
    %880 = vmatprep.subr.mxu0 0.0
    %881 = vmatpush1.msra.mxu0 0.0
    %882 = vmatprep.subr.mxu0 0.0
    %883 = vmatpush1.msra.mxu0 0.0
    %884 = vmatprep.subr.mxu0 0.0
    %885 = vmatpush1.msra.mxu0 0.0
    %886 = vmatprep.subr.mxu0 0.0
    %887 = vmatpush1.msra.mxu0 0.0
    %888 = vmatprep.subr.mxu0 0.0
    %889 = vmatpush1.msra.mxu0 0.0
    %890 = vmatprep.subr.mxu0 0.0
    %891 = vmatpush1.msra.mxu0 0.0
    %892 = vmatprep.subr.mxu0 0.0
    %893 = vmatpush1.msra.mxu0 0.0
    %894 = vmatprep.subr.mxu0 0.0
    %895 = vmatpush1.msra.mxu0 0.0
    %896 = vmatprep.subr.mxu0 0.0
    %897 = vmatpush1.msra.mxu0 0.0
    %898 = vmatprep.subr.mxu0 0.0
    %899 = vmatpush1.msra.mxu0 0.0
    %900 = vmatprep.subr.mxu0 0.0
    %901 = vmatpush1.msra.mxu0 0.0
    %902 = vmatprep.subr.mxu0 0.0
    %903 = vmatpush1.msra.mxu0 0.0
    %904 = vmatprep.subr.mxu0 0.0
    %905 = vmatpush1.msra.mxu0 0.0
    %906 = vmatprep.subr.mxu0 0.0
    %907 = vmatpush1.msra.mxu0 0.0
    %908 = vmatprep.subr.mxu0 0.0
    %909 = vmatpush1.msra.mxu0 0.0
    %910 = vmatprep.subr.mxu0 0.0
    %911 = vmatpush1.msra.mxu0 0.0
    %912 = vmatprep.subr.mxu0 0.0
    %913 = vmatpush1.msra.mxu0 0.0
    %914 = vmatprep.mubr.f32.mxu0 0.0
    %915 = vmatmul.mubr.f32.gmra.mrb[0].mxu0 %v848
    %v916 = vpop.f32.mrb[0].mxu0
    %v917 = vadd.f32 0.0, %v916
    %v918 = vpop.f32.mrb[0].mxu0
    %v919 = vadd.f32 0.0, %v918
    %920 = vdwg.mxu0
    %v923 = vrot.slane %v917, 4
    %v924 = vrot.slane %v919, 4
    %v927 = vadd.f32 %v153, %v923
    %v928 = vadd.f32 %v155, %v924
    %v929 = vxor.u32 %v927, 2147483648
    %v930 = vmul.f32 %v929, 1.442695
    %v931 = vpow.pop %v930
    %v932 = vadd.f32 %v931, 1.0
    %v933 = vrcp.pop %v932
    %v934 = vmul.f32 1.0, %v933
    %v935 = vtanh.pop %v928
    %v936 = vxor.u32 %v928, 2147483648
    %v937 = vmul.f32 %v936, 1.442695
    %v938 = vpow.pop %v937
    %v939 = vadd.f32 %v938, 1.0
    %v940 = vrcp.pop %v939
    %v941 = vmul.f32 1.0, %v940
    %v943 = vrot.slane %v841, 6
    %v945 = vmul.f32 %v934, %v943
    %v946 = vmul.f32 %v934, %v935
    %948 = vrot.lane.b32.xlu0 %v946, 64
    %v949 = vpop.permute.xlu0 %948
    %v951 = vadd.f32 %v945, %v949
    %v952 = vtanh.pop %v951
    %v953 = vmul.f32 %v941, %v952
    %v955 = vrot.slane %v953, 4
    %956 = vrot.lane.b32.xlu0 %v955, 64
    %v957 = vpop.permute.xlu0 %956
    %v958 = vsel %vm203, %v957, 0
    %960 = vmatprep.subr.mxu0 %v188
    %961 = vmatpush1.msra.mxu0 %v187
    %962 = vmatprep.subr.mxu0 %v190
    %963 = vmatpush1.msra.mxu0 %v189
    %964 = vmatprep.subr.mxu0 %v192
    %965 = vmatpush1.msra.mxu0 %v191
    %966 = vmatprep.subr.mxu0 %v194
    %967 = vmatpush1.msra.mxu0 %v193
    %968 = vmatprep.subr.mxu0 %v196
    %969 = vmatpush1.msra.mxu0 %v195
    %970 = vmatprep.subr.mxu0 %v198
    %971 = vmatpush1.msra.mxu0 %v197
    %972 = vmatprep.subr.mxu0 %v200
    %973 = vmatpush1.msra.mxu0 %v199
    %974 = vmatprep.subr.mxu0 %v202
    %975 = vmatpush1.msra.mxu0 %v201
    %976 = vmatprep.subr.mxu0 0.0
    %977 = vmatpush1.msra.mxu0 0.0
    %978 = vmatprep.subr.mxu0 0.0
    %979 = vmatpush1.msra.mxu0 0.0
    %980 = vmatprep.subr.mxu0 0.0
    %981 = vmatpush1.msra.mxu0 0.0
    %982 = vmatprep.subr.mxu0 0.0
    %983 = vmatpush1.msra.mxu0 0.0
    %984 = vmatprep.subr.mxu0 0.0
    %985 = vmatpush1.msra.mxu0 0.0
    %986 = vmatprep.subr.mxu0 0.0
    %987 = vmatpush1.msra.mxu0 0.0
    %988 = vmatprep.subr.mxu0 0.0
    %989 = vmatpush1.msra.mxu0 0.0
    %990 = vmatprep.subr.mxu0 0.0
    %991 = vmatpush1.msra.mxu0 0.0
    %992 = vmatprep.subr.mxu0 0.0
    %993 = vmatpush1.msra.mxu0 0.0
    %994 = vmatprep.subr.mxu0 0.0
    %995 = vmatpush1.msra.mxu0 0.0
    %996 = vmatprep.subr.mxu0 0.0
    %997 = vmatpush1.msra.mxu0 0.0
    %998 = vmatprep.subr.mxu0 0.0
    %999 = vmatpush1.msra.mxu0 0.0
    %1000 = vmatprep.subr.mxu0 0.0
    %1001 = vmatpush1.msra.mxu0 0.0
    %1002 = vmatprep.subr.mxu0 0.0
    %1003 = vmatpush1.msra.mxu0 0.0
    %1004 = vmatprep.subr.mxu0 0.0
    %1005 = vmatpush1.msra.mxu0 0.0
    %1006 = vmatprep.subr.mxu0 0.0
    %1007 = vmatpush1.msra.mxu0 0.0
    %1008 = vmatprep.subr.mxu0 0.0
    %1009 = vmatpush1.msra.mxu0 0.0
    %1010 = vmatprep.subr.mxu0 0.0
    %1011 = vmatpush1.msra.mxu0 0.0
    %1012 = vmatprep.subr.mxu0 0.0
    %1013 = vmatpush1.msra.mxu0 0.0
    %1014 = vmatprep.subr.mxu0 0.0
    %1015 = vmatpush1.msra.mxu0 0.0
    %1016 = vmatprep.subr.mxu0 0.0
    %1017 = vmatpush1.msra.mxu0 0.0
    %1018 = vmatprep.subr.mxu0 0.0
    %1019 = vmatpush1.msra.mxu0 0.0
    %1020 = vmatprep.subr.mxu0 0.0
    %1021 = vmatpush1.msra.mxu0 0.0
    %1022 = vmatprep.subr.mxu0 0.0
    %1023 = vmatpush1.msra.mxu0 0.0
    %1024 = vmatprep.mubr.f32.mxu0 0.0
    %1025 = vmatmul.mubr.f32.gmra.mrb[0].mxu0 %v958
    %v1026 = vpop.f32.mrb[0].mxu0
    %v1027 = vadd.f32 0.0, %v1026
    %v1028 = vpop.f32.mrb[0].mxu0
    %v1029 = vadd.f32 0.0, %v1028
    %1030 = vdwg.mxu0
    %v1033 = vrot.slane %v1027, 2
    %v1034 = vrot.slane %v1029, 2
    %v1037 = vadd.f32 %v153, %v1033
    %v1038 = vadd.f32 %v155, %v1034
    %v1039 = vxor.u32 %v1037, 2147483648
    %v1040 = vmul.f32 %v1039, 1.442695
    %v1041 = vpow.pop %v1040
    %v1042 = vadd.f32 %v1041, 1.0
    %v1043 = vrcp.pop %v1042
    %v1044 = vmul.f32 1.0, %v1043
    %v1045 = vtanh.pop %v1038
    %v1046 = vxor.u32 %v1038, 2147483648
    %v1047 = vmul.f32 %v1046, 1.442695
    %v1048 = vpow.pop %v1047
    %v1049 = vadd.f32 %v1048, 1.0
    %v1050 = vrcp.pop %v1049
    %v1051 = vmul.f32 1.0, %v1050
    %v1053 = vrot.slane %v951, 6
    %v1055 = vmul.f32 %v1044, %v1053
    %v1056 = vmul.f32 %v1044, %v1045
    %1058 = vrot.lane.b32.xlu0 %v1056, 64
    %v1059 = vpop.permute.xlu0 %1058
    %v1061 = vadd.f32 %v1055, %v1059
    %v1062 = vtanh.pop %v1061
    %v1063 = vmul.f32 %v1051, %v1062
    %v1065 = vrot.slane %v1063, 6
    %1066 = vrot.lane.b32.xlu0 %v1065, 64
    %v1067 = vpop.permute.xlu0 %1066
    %v1068 = vsel %vm203, %v1067, 0
    %1070 = vmatprep.subr.mxu0 %v188
    %1071 = vmatpush1.msra.mxu0 %v187
    %1072 = vmatprep.subr.mxu0 %v190
    %1073 = vmatpush1.msra.mxu0 %v189
    %1074 = vmatprep.subr.mxu0 %v192
    %1075 = vmatpush1.msra.mxu0 %v191
    %1076 = vmatprep.subr.mxu0 %v194
    %1077 = vmatpush1.msra.mxu0 %v193
    %1078 = vmatprep.subr.mxu0 %v196
    %1079 = vmatpush1.msra.mxu0 %v195
    %1080 = vmatprep.subr.mxu0 %v198
    %1081 = vmatpush1.msra.mxu0 %v197
    %1082 = vmatprep.subr.mxu0 %v200
    %1083 = vmatpush1.msra.mxu0 %v199
    %1084 = vmatprep.subr.mxu0 %v202
    %1085 = vmatpush1.msra.mxu0 %v201
    %1086 = vmatprep.subr.mxu0 0.0
    %1087 = vmatpush1.msra.mxu0 0.0
    %1088 = vmatprep.subr.mxu0 0.0
    %1089 = vmatpush1.msra.mxu0 0.0
    %1090 = vmatprep.subr.mxu0 0.0
    %1091 = vmatpush1.msra.mxu0 0.0
    %1092 = vmatprep.subr.mxu0 0.0
    %1093 = vmatpush1.msra.mxu0 0.0
    %1094 = vmatprep.subr.mxu0 0.0
    %1095 = vmatpush1.msra.mxu0 0.0
    %1096 = vmatprep.subr.mxu0 0.0
    %1097 = vmatpush1.msra.mxu0 0.0
    %1098 = vmatprep.subr.mxu0 0.0
    %1099 = vmatpush1.msra.mxu0 0.0
    %1100 = vmatprep.subr.mxu0 0.0
    %1101 = vmatpush1.msra.mxu0 0.0
    %1102 = vmatprep.subr.mxu0 0.0
    %1103 = vmatpush1.msra.mxu0 0.0
    %1104 = vmatprep.subr.mxu0 0.0
    %1105 = vmatpush1.msra.mxu0 0.0
    %1106 = vmatprep.subr.mxu0 0.0
    %1107 = vmatpush1.msra.mxu0 0.0
    %1108 = vmatprep.subr.mxu0 0.0
    %1109 = vmatpush1.msra.mxu0 0.0
    %1110 = vmatprep.subr.mxu0 0.0
    %1111 = vmatpush1.msra.mxu0 0.0
    %1112 = vmatprep.subr.mxu0 0.0
    %1113 = vmatpush1.msra.mxu0 0.0
    %1114 = vmatprep.subr.mxu0 0.0
    %1115 = vmatpush1.msra.mxu0 0.0
    %1116 = vmatprep.subr.mxu0 0.0
    %1117 = vmatpush1.msra.mxu0 0.0
    %1118 = vmatprep.subr.mxu0 0.0
    %1119 = vmatpush1.msra.mxu0 0.0
    %1120 = vmatprep.subr.mxu0 0.0
    %1121 = vmatpush1.msra.mxu0 0.0
    %1122 = vmatprep.subr.mxu0 0.0
    %1123 = vmatpush1.msra.mxu0 0.0
    %1124 = vmatprep.subr.mxu0 0.0
    %1125 = vmatpush1.msra.mxu0 0.0
    %1126 = vmatprep.subr.mxu0 0.0
    %1127 = vmatpush1.msra.mxu0 0.0
    %1128 = vmatprep.subr.mxu0 0.0
    %1129 = vmatpush1.msra.mxu0 0.0
    %1130 = vmatprep.subr.mxu0 0.0
    %1131 = vmatpush1.msra.mxu0 0.0
    %1132 = vmatprep.subr.mxu0 0.0
    %1133 = vmatpush1.msra.mxu0 0.0
    %1134 = vmatprep.mubr.f32.mxu0 0.0
    %1135 = vmatmul.mubr.f32.gmra.mrb[0].mxu0 %v1068
    %v1136 = vpop.f32.mrb[0].mxu0
    %v1137 = vadd.f32 0.0, %v1136
    %v1138 = vpop.f32.mrb[0].mxu0
    %v1139 = vadd.f32 0.0, %v1138
    %1140 = vdwg.mxu0
    %v1141 = vadd.f32 %v159, %v1137
    %v1142 = vadd.f32 %v161, %v1139
    %v1143 = vxor.u32 %v1141, 2147483648
    %v1144 = vmul.f32 %v1143, 1.442695
    %v1145 = vpow.pop %v1144
    %v1146 = vadd.f32 %v1145, 1.0
    %v1147 = vrcp.pop %v1146
    %v1148 = vmul.f32 1.0, %v1147
    %v1149 = vtanh.pop %v1142
    %v1150 = vxor.u32 %v1142, 2147483648
    %v1151 = vmul.f32 %v1150, 1.442695
    %v1152 = vpow.pop %v1151
    %v1153 = vadd.f32 %v1152, 1.0
    %v1154 = vrcp.pop %v1153
    %v1155 = vmul.f32 1.0, %v1154
    %v1157 = vrot.slane %v1061, 6
    %v1159 = vmul.f32 %v1148, %v1157
    %v1160 = vmul.f32 %v1148, %v1149
    %1162 = vrot.lane.b32.xlu0 %v1160, 64
    %v1163 = vpop.permute.xlu0 %1162
    %v1165 = vadd.f32 %v1159, %v1163
    %v1166 = vtanh.pop %v1165
    %v1167 = vmul.f32 %v1155, %v1166
    %1169 = vrot.lane.b32.xlu0 %v1167, 64
    %v1170 = vpop.permute.xlu0 %1169
    %v1171 = vsel %vm203, %v1170, 0
    %1173 = vmatprep.subr.mxu0 %v188
    %1174 = vmatpush1.msra.mxu0 %v187
    %1175 = vmatprep.subr.mxu0 %v190
    %1176 = vmatpush1.msra.mxu0 %v189
    %1177 = vmatprep.subr.mxu0 %v192
    %1178 = vmatpush1.msra.mxu0 %v191
    %1179 = vmatprep.subr.mxu0 %v194
    %1180 = vmatpush1.msra.mxu0 %v193
    %1181 = vmatprep.subr.mxu0 %v196
    %1182 = vmatpush1.msra.mxu0 %v195
    %1183 = vmatprep.subr.mxu0 %v198
    %1184 = vmatpush1.msra.mxu0 %v197
    %1185 = vmatprep.subr.mxu0 %v200
    %1186 = vmatpush1.msra.mxu0 %v199
    %1187 = vmatprep.subr.mxu0 %v202
    %1188 = vmatpush1.msra.mxu0 %v201
    %1189 = vmatprep.subr.mxu0 0.0
    %1190 = vmatpush1.msra.mxu0 0.0
    %1191 = vmatprep.subr.mxu0 0.0
    %1192 = vmatpush1.msra.mxu0 0.0
    %1193 = vmatprep.subr.mxu0 0.0
    %1194 = vmatpush1.msra.mxu0 0.0
    %1195 = vmatprep.subr.mxu0 0.0
    %1196 = vmatpush1.msra.mxu0 0.0
    %1197 = vmatprep.subr.mxu0 0.0
    %1198 = vmatpush1.msra.mxu0 0.0
    %1199 = vmatprep.subr.mxu0 0.0
    %1200 = vmatpush1.msra.mxu0 0.0
    %1201 = vmatprep.subr.mxu0 0.0
    %1202 = vmatpush1.msra.mxu0 0.0
    %1203 = vmatprep.subr.mxu0 0.0
    %1204 = vmatpush1.msra.mxu0 0.0
    %1205 = vmatprep.subr.mxu0 0.0
    %1206 = vmatpush1.msra.mxu0 0.0
    %1207 = vmatprep.subr.mxu0 0.0
    %1208 = vmatpush1.msra.mxu0 0.0
    %1209 = vmatprep.subr.mxu0 0.0
    %1210 = vmatpush1.msra.mxu0 0.0
    %1211 = vmatprep.subr.mxu0 0.0
    %1212 = vmatpush1.msra.mxu0 0.0
    %1213 = vmatprep.subr.mxu0 0.0
    %1214 = vmatpush1.msra.mxu0 0.0
    %1215 = vmatprep.subr.mxu0 0.0
    %1216 = vmatpush1.msra.mxu0 0.0
    %1217 = vmatprep.subr.mxu0 0.0
    %1218 = vmatpush1.msra.mxu0 0.0
    %1219 = vmatprep.subr.mxu0 0.0
    %1220 = vmatpush1.msra.mxu0 0.0
    %1221 = vmatprep.subr.mxu0 0.0
    %1222 = vmatpush1.msra.mxu0 0.0
    %1223 = vmatprep.subr.mxu0 0.0
    %1224 = vmatpush1.msra.mxu0 0.0
    %1225 = vmatprep.subr.mxu0 0.0
    %1226 = vmatpush1.msra.mxu0 0.0
    %1227 = vmatprep.subr.mxu0 0.0
    %1228 = vmatpush1.msra.mxu0 0.0
    %1229 = vmatprep.subr.mxu0 0.0
    %1230 = vmatpush1.msra.mxu0 0.0
    %1231 = vmatprep.subr.mxu0 0.0
    %1232 = vmatpush1.msra.mxu0 0.0
    %1233 = vmatprep.subr.mxu0 0.0
    %1234 = vmatpush1.msra.mxu0 0.0
    %1235 = vmatprep.subr.mxu0 0.0
    %1236 = vmatpush1.msra.mxu0 0.0
    %1237 = vmatprep.mubr.f32.mxu0 0.0
    %1238 = vmatmul.mubr.f32.gmra.mrb[0].mxu0 %v1171
    %v1239 = vpop.f32.mrb[0].mxu0
    %v1240 = vadd.f32 0.0, %v1239
    %v1241 = vpop.f32.mrb[0].mxu0
    %v1242 = vadd.f32 0.0, %v1241
    %1243 = vdwg.mxu0
    %v1246 = vrot.slane %v1240, 6
    %v1247 = vrot.slane %v1242, 6
    %v1250 = vadd.f32 %v159, %v1246
    %v1251 = vadd.f32 %v161, %v1247
    %v1252 = vxor.u32 %v1250, 2147483648
    %v1253 = vmul.f32 %v1252, 1.442695
    %v1254 = vpow.pop %v1253
    %v1255 = vadd.f32 %v1254, 1.0
    %v1256 = vrcp.pop %v1255
    %v1257 = vmul.f32 1.0, %v1256
    %v1258 = vtanh.pop %v1251
    %v1259 = vxor.u32 %v1251, 2147483648
    %v1260 = vmul.f32 %v1259, 1.442695
    %v1261 = vpow.pop %v1260
    %v1262 = vadd.f32 %v1261, 1.0
    %v1263 = vrcp.pop %v1262
    %v1264 = vmul.f32 1.0, %v1263
    %v1266 = vrot.slane %v1165, 6
    %v1268 = vmul.f32 %v1257, %v1266
    %v1269 = vmul.f32 %v1257, %v1258
    %1271 = vrot.lane.b32.xlu0 %v1269, 64
    %v1272 = vpop.permute.xlu0 %1271
    %v1274 = vadd.f32 %v1268, %v1272
    %v1275 = vtanh.pop %v1274
    %v1276 = vmul.f32 %v1264, %v1275
    %v1278 = vrot.slane %v1276, 2
    %1279 = vrot.lane.b32.xlu0 %v1278, 64
    %v1280 = vpop.permute.xlu0 %1279
    %v1281 = vsel %vm203, %v1280, 0
    %1283 = vmatprep.subr.mxu0 %v188
    %1284 = vmatpush1.msra.mxu0 %v187
    %1285 = vmatprep.subr.mxu0 %v190
    %1286 = vmatpush1.msra.mxu0 %v189
    %1287 = vmatprep.subr.mxu0 %v192
    %1288 = vmatpush1.msra.mxu0 %v191
    %1289 = vmatprep.subr.mxu0 %v194
    %1290 = vmatpush1.msra.mxu0 %v193
    %1291 = vmatprep.subr.mxu0 %v196
    %1292 = vmatpush1.msra.mxu0 %v195
    %1293 = vmatprep.subr.mxu0 %v198
    %1294 = vmatpush1.msra.mxu0 %v197
    %1295 = vmatprep.subr.mxu0 %v200
    %1296 = vmatpush1.msra.mxu0 %v199
    %1297 = vmatprep.subr.mxu0 %v202
    %1298 = vmatpush1.msra.mxu0 %v201
    %1299 = vmatprep.subr.mxu0 0.0
    %1300 = vmatpush1.msra.mxu0 0.0
    %1301 = vmatprep.subr.mxu0 0.0
    %1302 = vmatpush1.msra.mxu0 0.0
    %1303 = vmatprep.subr.mxu0 0.0
    %1304 = vmatpush1.msra.mxu0 0.0
    %1305 = vmatprep.subr.mxu0 0.0
    %1306 = vmatpush1.msra.mxu0 0.0
    %1307 = vmatprep.subr.mxu0 0.0
    %1308 = vmatpush1.msra.mxu0 0.0
    %1309 = vmatprep.subr.mxu0 0.0
    %1310 = vmatpush1.msra.mxu0 0.0
    %1311 = vmatprep.subr.mxu0 0.0
    %1312 = vmatpush1.msra.mxu0 0.0
    %1313 = vmatprep.subr.mxu0 0.0
    %1314 = vmatpush1.msra.mxu0 0.0
    %1315 = vmatprep.subr.mxu0 0.0
    %1316 = vmatpush1.msra.mxu0 0.0
    %1317 = vmatprep.subr.mxu0 0.0
    %1318 = vmatpush1.msra.mxu0 0.0
    %1319 = vmatprep.subr.mxu0 0.0
    %1320 = vmatpush1.msra.mxu0 0.0
    %1321 = vmatprep.subr.mxu0 0.0
    %1322 = vmatpush1.msra.mxu0 0.0
    %1323 = vmatprep.subr.mxu0 0.0
    %1324 = vmatpush1.msra.mxu0 0.0
    %1325 = vmatprep.subr.mxu0 0.0
    %1326 = vmatpush1.msra.mxu0 0.0
    %1327 = vmatprep.subr.mxu0 0.0
    %1328 = vmatpush1.msra.mxu0 0.0
    %1329 = vmatprep.subr.mxu0 0.0
    %1330 = vmatpush1.msra.mxu0 0.0
    %1331 = vmatprep.subr.mxu0 0.0
    %1332 = vmatpush1.msra.mxu0 0.0
    %1333 = vmatprep.subr.mxu0 0.0
    %1334 = vmatpush1.msra.mxu0 0.0
    %1335 = vmatprep.subr.mxu0 0.0
    %1336 = vmatpush1.msra.mxu0 0.0
    %1337 = vmatprep.subr.mxu0 0.0
    %1338 = vmatpush1.msra.mxu0 0.0
    %1339 = vmatprep.subr.mxu0 0.0
    %1340 = vmatpush1.msra.mxu0 0.0
    %1341 = vmatprep.subr.mxu0 0.0
    %1342 = vmatpush1.msra.mxu0 0.0
    %1343 = vmatprep.subr.mxu0 0.0
    %1344 = vmatpush1.msra.mxu0 0.0
    %1345 = vmatprep.subr.mxu0 0.0
    %1346 = vmatpush1.msra.mxu0 0.0
    %1347 = vmatprep.mubr.f32.mxu0 0.0
    %1348 = vmatmul.mubr.f32.gmra.mrb[0].mxu0 %v1281
    %v1349 = vpop.f32.mrb[0].mxu0
    %v1350 = vadd.f32 0.0, %v1349
    %v1351 = vpop.f32.mrb[0].mxu0
    %v1352 = vadd.f32 0.0, %v1351
    %1353 = vdwg.mxu0
    %v1356 = vrot.slane %v1350, 4
    %v1357 = vrot.slane %v1352, 4
    %v1360 = vadd.f32 %v159, %v1356
    %v1361 = vadd.f32 %v161, %v1357
    %v1362 = vxor.u32 %v1360, 2147483648
    %v1363 = vmul.f32 %v1362, 1.442695
    %v1364 = vpow.pop %v1363
    %v1365 = vadd.f32 %v1364, 1.0
    %v1366 = vrcp.pop %v1365
    %v1367 = vmul.f32 1.0, %v1366
    %v1368 = vtanh.pop %v1361
    %v1369 = vxor.u32 %v1361, 2147483648
    %v1370 = vmul.f32 %v1369, 1.442695
    %v1371 = vpow.pop %v1370
    %v1372 = vadd.f32 %v1371, 1.0
    %v1373 = vrcp.pop %v1372
    %v1374 = vmul.f32 1.0, %v1373
    %v1376 = vrot.slane %v1274, 6
    %v1378 = vmul.f32 %v1367, %v1376
    %v1379 = vmul.f32 %v1367, %v1368
    %1381 = vrot.lane.b32.xlu0 %v1379, 64
    %v1382 = vpop.permute.xlu0 %1381
    %v1384 = vadd.f32 %v1378, %v1382
    %v1385 = vtanh.pop %v1384
    %v1386 = vmul.f32 %v1374, %v1385
    %v1388 = vrot.slane %v1386, 4
    %1389 = vrot.lane.b32.xlu0 %v1388, 64
    %v1390 = vpop.permute.xlu0 %1389
    %v1391 = vsel %vm203, %v1390, 0
    %1393 = vmatprep.subr.mxu0 %v188
    %1394 = vmatpush1.msra.mxu0 %v187
    %1395 = vmatprep.subr.mxu0 %v190
    %1396 = vmatpush1.msra.mxu0 %v189
    %1397 = vmatprep.subr.mxu0 %v192
    %1398 = vmatpush1.msra.mxu0 %v191
    %1399 = vmatprep.subr.mxu0 %v194
    %1400 = vmatpush1.msra.mxu0 %v193
    %1401 = vmatprep.subr.mxu0 %v196
    %1402 = vmatpush1.msra.mxu0 %v195
    %1403 = vmatprep.subr.mxu0 %v198
    %1404 = vmatpush1.msra.mxu0 %v197
    %1405 = vmatprep.subr.mxu0 %v200
    %1406 = vmatpush1.msra.mxu0 %v199
    %1407 = vmatprep.subr.mxu0 %v202
    %1408 = vmatpush1.msra.mxu0 %v201
    %1409 = vmatprep.subr.mxu0 0.0
    %1410 = vmatpush1.msra.mxu0 0.0
    %1411 = vmatprep.subr.mxu0 0.0
    %1412 = vmatpush1.msra.mxu0 0.0
    %1413 = vmatprep.subr.mxu0 0.0
    %1414 = vmatpush1.msra.mxu0 0.0
    %1415 = vmatprep.subr.mxu0 0.0
    %1416 = vmatpush1.msra.mxu0 0.0
    %1417 = vmatprep.subr.mxu0 0.0
    %1418 = vmatpush1.msra.mxu0 0.0
    %1419 = vmatprep.subr.mxu0 0.0
    %1420 = vmatpush1.msra.mxu0 0.0
    %1421 = vmatprep.subr.mxu0 0.0
    %1422 = vmatpush1.msra.mxu0 0.0
    %1423 = vmatprep.subr.mxu0 0.0
    %1424 = vmatpush1.msra.mxu0 0.0
    %1425 = vmatprep.subr.mxu0 0.0
    %1426 = vmatpush1.msra.mxu0 0.0
    %1427 = vmatprep.subr.mxu0 0.0
    %1428 = vmatpush1.msra.mxu0 0.0
    %1429 = vmatprep.subr.mxu0 0.0
    %1430 = vmatpush1.msra.mxu0 0.0
    %1431 = vmatprep.subr.mxu0 0.0
    %1432 = vmatpush1.msra.mxu0 0.0
    %1433 = vmatprep.subr.mxu0 0.0
    %1434 = vmatpush1.msra.mxu0 0.0
    %1435 = vmatprep.subr.mxu0 0.0
    %1436 = vmatpush1.msra.mxu0 0.0
    %1437 = vmatprep.subr.mxu0 0.0
    %1438 = vmatpush1.msra.mxu0 0.0
    %1439 = vmatprep.subr.mxu0 0.0
    %1440 = vmatpush1.msra.mxu0 0.0
    %1441 = vmatprep.subr.mxu0 0.0
    %1442 = vmatpush1.msra.mxu0 0.0
    %1443 = vmatprep.subr.mxu0 0.0
    %1444 = vmatpush1.msra.mxu0 0.0
    %1445 = vmatprep.subr.mxu0 0.0
    %1446 = vmatpush1.msra.mxu0 0.0
    %1447 = vmatprep.subr.mxu0 0.0
    %1448 = vmatpush1.msra.mxu0 0.0
    %1449 = vmatprep.subr.mxu0 0.0
    %1450 = vmatpush1.msra.mxu0 0.0
    %1451 = vmatprep.subr.mxu0 0.0
    %1452 = vmatpush1.msra.mxu0 0.0
    %1453 = vmatprep.subr.mxu0 0.0
    %1454 = vmatpush1.msra.mxu0 0.0
    %1455 = vmatprep.subr.mxu0 0.0
    %1456 = vmatpush1.msra.mxu0 0.0
    %1457 = vmatprep.mubr.f32.mxu0 0.0
    %1458 = vmatmul.mubr.f32.gmra.mrb[0].mxu0 %v1391
    %v1459 = vpop.f32.mrb[0].mxu0
    %v1460 = vadd.f32 0.0, %v1459
    %v1461 = vpop.f32.mrb[0].mxu0
    %v1462 = vadd.f32 0.0, %v1461
    %1463 = vdwg.mxu0
    %v1466 = vrot.slane %v1460, 2
    %v1467 = vrot.slane %v1462, 2
    %v1470 = vadd.f32 %v159, %v1466
    %v1471 = vadd.f32 %v161, %v1467
    %v1472 = vxor.u32 %v1470, 2147483648
    %v1473 = vmul.f32 %v1472, 1.442695
    %v1474 = vpow.pop %v1473
    %v1475 = vadd.f32 %v1474, 1.0
    %v1476 = vrcp.pop %v1475
    %v1477 = vmul.f32 1.0, %v1476
    %v1478 = vtanh.pop %v1471
    %v1479 = vxor.u32 %v1471, 2147483648
    %v1480 = vmul.f32 %v1479, 1.442695
    %v1481 = vpow.pop %v1480
    %v1482 = vadd.f32 %v1481, 1.0
    %v1483 = vrcp.pop %v1482
    %v1484 = vmul.f32 1.0, %v1483
    %v1486 = vrot.slane %v1384, 6
    %v1488 = vmul.f32 %v1477, %v1486
    %v1489 = vmul.f32 %v1477, %v1478
    %1491 = vrot.lane.b32.xlu0 %v1489, 64
    %v1492 = vpop.permute.xlu0 %1491
    %v1494 = vadd.f32 %v1488, %v1492
    %v1495 = vtanh.pop %v1494
    %v1496 = vmul.f32 %v1484, %v1495
    %v1498 = vrot.slane %v1496, 6
    %1499 = vrot.lane.b32.xlu0 %v1498, 64
    %v1500 = vpop.permute.xlu0 %1499
    %v1501 = vsel %vm203, %v1500, 0
    %1503 = vmatprep.subr.mxu0 %v188
    %1504 = vmatpush1.msra.mxu0 %v187
    %1505 = vmatprep.subr.mxu0 %v190
    %1506 = vmatpush1.msra.mxu0 %v189
    %1507 = vmatprep.subr.mxu0 %v192
    %1508 = vmatpush1.msra.mxu0 %v191
    %1509 = vmatprep.subr.mxu0 %v194
    %1510 = vmatpush1.msra.mxu0 %v193
    %1511 = vmatprep.subr.mxu0 %v196
    %1512 = vmatpush1.msra.mxu0 %v195
    %1513 = vmatprep.subr.mxu0 %v198
    %1514 = vmatpush1.msra.mxu0 %v197
    %1515 = vmatprep.subr.mxu0 %v200
    %1516 = vmatpush1.msra.mxu0 %v199
    %1517 = vmatprep.subr.mxu0 %v202
    %1518 = vmatpush1.msra.mxu0 %v201
    %1519 = vmatprep.subr.mxu0 0.0
    %1520 = vmatpush1.msra.mxu0 0.0
    %1521 = vmatprep.subr.mxu0 0.0
    %1522 = vmatpush1.msra.mxu0 0.0
    %1523 = vmatprep.subr.mxu0 0.0
    %1524 = vmatpush1.msra.mxu0 0.0
    %1525 = vmatprep.subr.mxu0 0.0
    %1526 = vmatpush1.msra.mxu0 0.0
    %1527 = vmatprep.subr.mxu0 0.0
    %1528 = vmatpush1.msra.mxu0 0.0
    %1529 = vmatprep.subr.mxu0 0.0
    %1530 = vmatpush1.msra.mxu0 0.0
    %1531 = vmatprep.subr.mxu0 0.0
    %1532 = vmatpush1.msra.mxu0 0.0
    %1533 = vmatprep.subr.mxu0 0.0
    %1534 = vmatpush1.msra.mxu0 0.0
    %1535 = vmatprep.subr.mxu0 0.0
    %1536 = vmatpush1.msra.mxu0 0.0
    %1537 = vmatprep.subr.mxu0 0.0
    %1538 = vmatpush1.msra.mxu0 0.0
    %1539 = vmatprep.subr.mxu0 0.0
    %1540 = vmatpush1.msra.mxu0 0.0
    %1541 = vmatprep.subr.mxu0 0.0
    %1542 = vmatpush1.msra.mxu0 0.0
    %1543 = vmatprep.subr.mxu0 0.0
    %1544 = vmatpush1.msra.mxu0 0.0
    %1545 = vmatprep.subr.mxu0 0.0
    %1546 = vmatpush1.msra.mxu0 0.0
    %1547 = vmatprep.subr.mxu0 0.0
    %1548 = vmatpush1.msra.mxu0 0.0
    %1549 = vmatprep.subr.mxu0 0.0
    %1550 = vmatpush1.msra.mxu0 0.0
    %1551 = vmatprep.subr.mxu0 0.0
    %1552 = vmatpush1.msra.mxu0 0.0
    %1553 = vmatprep.subr.mxu0 0.0
    %1554 = vmatpush1.msra.mxu0 0.0
    %1555 = vmatprep.subr.mxu0 0.0
    %1556 = vmatpush1.msra.mxu0 0.0
    %1557 = vmatprep.subr.mxu0 0.0
    %1558 = vmatpush1.msra.mxu0 0.0
    %1559 = vmatprep.subr.mxu0 0.0
    %1560 = vmatpush1.msra.mxu0 0.0
    %1561 = vmatprep.subr.mxu0 0.0
    %1562 = vmatpush1.msra.mxu0 0.0
    %1563 = vmatprep.subr.mxu0 0.0
    %1564 = vmatpush1.msra.mxu0 0.0
    %1565 = vmatprep.subr.mxu0 0.0
    %1566 = vmatpush1.msra.mxu0 0.0
    %1567 = vmatprep.mubr.f32.mxu0 0.0
    %1568 = vmatmul.mubr.f32.gmra.mrb[0].mxu0 %v1501
    %v1569 = vpop.f32.mrb[0].mxu0
    %v1570 = vadd.f32 0.0, %v1569
    %v1571 = vpop.f32.mrb[0].mxu0
    %v1572 = vadd.f32 0.0, %v1571
    %1573 = vdwg.mxu0
    %v1574 = vadd.f32 %v165, %v1570
    %v1575 = vadd.f32 %v167, %v1572
    %v1576 = vxor.u32 %v1574, 2147483648
    %v1577 = vmul.f32 %v1576, 1.442695
    %v1578 = vpow.pop %v1577
    %v1579 = vadd.f32 %v1578, 1.0
    %v1580 = vrcp.pop %v1579
    %v1581 = vmul.f32 1.0, %v1580
    %v1582 = vtanh.pop %v1575
    %v1583 = vxor.u32 %v1575, 2147483648
    %v1584 = vmul.f32 %v1583, 1.442695
    %v1585 = vpow.pop %v1584
    %v1586 = vadd.f32 %v1585, 1.0
    %v1587 = vrcp.pop %v1586
    %v1588 = vmul.f32 1.0, %v1587
    %v1590 = vrot.slane %v1494, 6
    %v1592 = vmul.f32 %v1581, %v1590
    %v1593 = vmul.f32 %v1581, %v1582
    %1595 = vrot.lane.b32.xlu0 %v1593, 64
    %v1596 = vpop.permute.xlu0 %1595
    %v1598 = vadd.f32 %v1592, %v1596
    %v1599 = vtanh.pop %v1598
    %v1600 = vmul.f32 %v1588, %v1599
    %1602 = vrot.lane.b32.xlu0 %v1600, 64
    %v1603 = vpop.permute.xlu0 %1602
    %v1604 = vsel %vm203, %v1603, 0
    %1606 = vmatprep.subr.mxu0 %v188
    %1607 = vmatpush1.msra.mxu0 %v187
    %1608 = vmatprep.subr.mxu0 %v190
    %1609 = vmatpush1.msra.mxu0 %v189
    %1610 = vmatprep.subr.mxu0 %v192
    %1611 = vmatpush1.msra.mxu0 %v191
    %1612 = vmatprep.subr.mxu0 %v194
    %1613 = vmatpush1.msra.mxu0 %v193
    %1614 = vmatprep.subr.mxu0 %v196
    %1615 = vmatpush1.msra.mxu0 %v195
    %1616 = vmatprep.subr.mxu0 %v198
    %1617 = vmatpush1.msra.mxu0 %v197
    %1618 = vmatprep.subr.mxu0 %v200
    %1619 = vmatpush1.msra.mxu0 %v199
    %1620 = vmatprep.subr.mxu0 %v202
    %1621 = vmatpush1.msra.mxu0 %v201
    %1622 = vmatprep.subr.mxu0 0.0
    %1623 = vmatpush1.msra.mxu0 0.0
    %1624 = vmatprep.subr.mxu0 0.0
    %1625 = vmatpush1.msra.mxu0 0.0
    %1626 = vmatprep.subr.mxu0 0.0
    %1627 = vmatpush1.msra.mxu0 0.0
    %1628 = vmatprep.subr.mxu0 0.0
    %1629 = vmatpush1.msra.mxu0 0.0
    %1630 = vmatprep.subr.mxu0 0.0
    %1631 = vmatpush1.msra.mxu0 0.0
    %1632 = vmatprep.subr.mxu0 0.0
    %1633 = vmatpush1.msra.mxu0 0.0
    %1634 = vmatprep.subr.mxu0 0.0
    %1635 = vmatpush1.msra.mxu0 0.0
    %1636 = vmatprep.subr.mxu0 0.0
    %1637 = vmatpush1.msra.mxu0 0.0
    %1638 = vmatprep.subr.mxu0 0.0
    %1639 = vmatpush1.msra.mxu0 0.0
    %1640 = vmatprep.subr.mxu0 0.0
    %1641 = vmatpush1.msra.mxu0 0.0
    %1642 = vmatprep.subr.mxu0 0.0
    %1643 = vmatpush1.msra.mxu0 0.0
    %1644 = vmatprep.subr.mxu0 0.0
    %1645 = vmatpush1.msra.mxu0 0.0
    %1646 = vmatprep.subr.mxu0 0.0
    %1647 = vmatpush1.msra.mxu0 0.0
    %1648 = vmatprep.subr.mxu0 0.0
    %1649 = vmatpush1.msra.mxu0 0.0
    %1650 = vmatprep.subr.mxu0 0.0
    %1651 = vmatpush1.msra.mxu0 0.0
    %1652 = vmatprep.subr.mxu0 0.0
    %1653 = vmatpush1.msra.mxu0 0.0
    %1654 = vmatprep.subr.mxu0 0.0
    %1655 = vmatpush1.msra.mxu0 0.0
    %1656 = vmatprep.subr.mxu0 0.0
    %1657 = vmatpush1.msra.mxu0 0.0
    %1658 = vmatprep.subr.mxu0 0.0
    %1659 = vmatpush1.msra.mxu0 0.0
    %1660 = vmatprep.subr.mxu0 0.0
    %1661 = vmatpush1.msra.mxu0 0.0
    %1662 = vmatprep.subr.mxu0 0.0
    %1663 = vmatpush1.msra.mxu0 0.0
    %1664 = vmatprep.subr.mxu0 0.0
    %1665 = vmatpush1.msra.mxu0 0.0
    %1666 = vmatprep.subr.mxu0 0.0
    %1667 = vmatpush1.msra.mxu0 0.0
    %1668 = vmatprep.subr.mxu0 0.0
    %1669 = vmatpush1.msra.mxu0 0.0
    %1670 = vmatprep.mubr.f32.mxu0 0.0
    %1671 = vmatmul.mubr.f32.gmra.mrb[0].mxu0 %v1604
    %v1672 = vpop.f32.mrb[0].mxu0
    %v1673 = vadd.f32 0.0, %v1672
    %v1674 = vpop.f32.mrb[0].mxu0
    %v1675 = vadd.f32 0.0, %v1674
    %1676 = vdwg.mxu0
    %v1679 = vrot.slane %v1673, 6
    %v1680 = vrot.slane %v1675, 6
    %v1683 = vadd.f32 %v165, %v1679
    %v1684 = vadd.f32 %v167, %v1680
    %v1685 = vxor.u32 %v1683, 2147483648
    %v1686 = vmul.f32 %v1685, 1.442695
    %v1687 = vpow.pop %v1686
    %v1688 = vadd.f32 %v1687, 1.0
    %v1689 = vrcp.pop %v1688
    %v1690 = vmul.f32 1.0, %v1689
    %v1691 = vtanh.pop %v1684
    %v1692 = vxor.u32 %v1684, 2147483648
    %v1693 = vmul.f32 %v1692, 1.442695
    %v1694 = vpow.pop %v1693
    %v1695 = vadd.f32 %v1694, 1.0
    %v1696 = vrcp.pop %v1695
    %v1697 = vmul.f32 1.0, %v1696
    %v1699 = vrot.slane %v1598, 6
    %v1701 = vmul.f32 %v1690, %v1699
    %v1702 = vmul.f32 %v1690, %v1691
    %1704 = vrot.lane.b32.xlu0 %v1702, 64
    %v1705 = vpop.permute.xlu0 %1704
    %v1707 = vadd.f32 %v1701, %v1705
    %v1708 = vtanh.pop %v1707
    %v1709 = vmul.f32 %v1697, %v1708
    %v1711 = vrot.slane %v1709, 2
    %1712 = vrot.lane.b32.xlu0 %v1711, 64
    %v1713 = vpop.permute.xlu0 %1712
    %v1714 = vsel %vm203, %v1713, 0
    %1716 = vmatprep.subr.mxu0 %v188
    %1717 = vmatpush1.msra.mxu0 %v187
    %1718 = vmatprep.subr.mxu0 %v190
    %1719 = vmatpush1.msra.mxu0 %v189
    %1720 = vmatprep.subr.mxu0 %v192
    %1721 = vmatpush1.msra.mxu0 %v191
    %1722 = vmatprep.subr.mxu0 %v194
    %1723 = vmatpush1.msra.mxu0 %v193
    %1724 = vmatprep.subr.mxu0 %v196
    %1725 = vmatpush1.msra.mxu0 %v195
    %1726 = vmatprep.subr.mxu0 %v198
    %1727 = vmatpush1.msra.mxu0 %v197
    %1728 = vmatprep.subr.mxu0 %v200
    %1729 = vmatpush1.msra.mxu0 %v199
    %1730 = vmatprep.subr.mxu0 %v202
    %1731 = vmatpush1.msra.mxu0 %v201
    %1732 = vmatprep.subr.mxu0 0.0
    %1733 = vmatpush1.msra.mxu0 0.0
    %1734 = vmatprep.subr.mxu0 0.0
    %1735 = vmatpush1.msra.mxu0 0.0
    %1736 = vmatprep.subr.mxu0 0.0
    %1737 = vmatpush1.msra.mxu0 0.0
    %1738 = vmatprep.subr.mxu0 0.0
    %1739 = vmatpush1.msra.mxu0 0.0
    %1740 = vmatprep.subr.mxu0 0.0
    %1741 = vmatpush1.msra.mxu0 0.0
    %1742 = vmatprep.subr.mxu0 0.0
    %1743 = vmatpush1.msra.mxu0 0.0
    %1744 = vmatprep.subr.mxu0 0.0
    %1745 = vmatpush1.msra.mxu0 0.0
    %1746 = vmatprep.subr.mxu0 0.0
    %1747 = vmatpush1.msra.mxu0 0.0
    %1748 = vmatprep.subr.mxu0 0.0
    %1749 = vmatpush1.msra.mxu0 0.0
    %1750 = vmatprep.subr.mxu0 0.0
    %1751 = vmatpush1.msra.mxu0 0.0
    %1752 = vmatprep.subr.mxu0 0.0
    %1753 = vmatpush1.msra.mxu0 0.0
    %1754 = vmatprep.subr.mxu0 0.0
    %1755 = vmatpush1.msra.mxu0 0.0
    %1756 = vmatprep.subr.mxu0 0.0
    %1757 = vmatpush1.msra.mxu0 0.0
    %1758 = vmatprep.subr.mxu0 0.0
    %1759 = vmatpush1.msra.mxu0 0.0
    %1760 = vmatprep.subr.mxu0 0.0
    %1761 = vmatpush1.msra.mxu0 0.0
    %1762 = vmatprep.subr.mxu0 0.0
    %1763 = vmatpush1.msra.mxu0 0.0
    %1764 = vmatprep.subr.mxu0 0.0
    %1765 = vmatpush1.msra.mxu0 0.0
    %1766 = vmatprep.subr.mxu0 0.0
    %1767 = vmatpush1.msra.mxu0 0.0
    %1768 = vmatprep.subr.mxu0 0.0
    %1769 = vmatpush1.msra.mxu0 0.0
    %1770 = vmatprep.subr.mxu0 0.0
    %1771 = vmatpush1.msra.mxu0 0.0
    %1772 = vmatprep.subr.mxu0 0.0
    %1773 = vmatpush1.msra.mxu0 0.0
    %1774 = vmatprep.subr.mxu0 0.0
    %1775 = vmatpush1.msra.mxu0 0.0
    %1776 = vmatprep.subr.mxu0 0.0
    %1777 = vmatpush1.msra.mxu0 0.0
    %1778 = vmatprep.subr.mxu0 0.0
    %1779 = vmatpush1.msra.mxu0 0.0
    %1780 = vmatprep.mubr.f32.mxu0 0.0
    %1781 = vmatmul.mubr.f32.gmra.mrb[0].mxu0 %v1714
    %v1782 = vpop.f32.mrb[0].mxu0
    %v1783 = vadd.f32 0.0, %v1782
    %v1784 = vpop.f32.mrb[0].mxu0
    %v1785 = vadd.f32 0.0, %v1784
    %1786 = vdwg.mxu0
    %v1789 = vrot.slane %v1783, 4
    %v1790 = vrot.slane %v1785, 4
    %v1793 = vadd.f32 %v165, %v1789
    %v1794 = vadd.f32 %v167, %v1790
    %v1795 = vxor.u32 %v1793, 2147483648
    %v1796 = vmul.f32 %v1795, 1.442695
    %v1797 = vpow.pop %v1796
    %v1798 = vadd.f32 %v1797, 1.0
    %v1799 = vrcp.pop %v1798
    %v1800 = vmul.f32 1.0, %v1799
    %v1801 = vtanh.pop %v1794
    %v1802 = vxor.u32 %v1794, 2147483648
    %v1803 = vmul.f32 %v1802, 1.442695
    %v1804 = vpow.pop %v1803
    %v1805 = vadd.f32 %v1804, 1.0
    %v1806 = vrcp.pop %v1805
    %v1807 = vmul.f32 1.0, %v1806
    %v1809 = vrot.slane %v1707, 6
    %v1811 = vmul.f32 %v1800, %v1809
    %v1812 = vmul.f32 %v1800, %v1801
    %1814 = vrot.lane.b32.xlu0 %v1812, 64
    %v1815 = vpop.permute.xlu0 %1814
    %v1817 = vadd.f32 %v1811, %v1815
    %v1818 = vtanh.pop %v1817
    %v1819 = vmul.f32 %v1807, %v1818
    %v1821 = vrot.slane %v1819, 4
    %1822 = vrot.lane.b32.xlu0 %v1821, 64
    %v1823 = vpop.permute.xlu0 %1822
    %v1824 = vsel %vm203, %v1823, 0
    %1826 = vmatprep.subr.mxu0 %v188
    %1827 = vmatpush1.msra.mxu0 %v187
    %1828 = vmatprep.subr.mxu0 %v190
    %1829 = vmatpush1.msra.mxu0 %v189
    %1830 = vmatprep.subr.mxu0 %v192
    %1831 = vmatpush1.msra.mxu0 %v191
    %1832 = vmatprep.subr.mxu0 %v194
    %1833 = vmatpush1.msra.mxu0 %v193
    %1834 = vmatprep.subr.mxu0 %v196
    %1835 = vmatpush1.msra.mxu0 %v195
    %1836 = vmatprep.subr.mxu0 %v198
    %1837 = vmatpush1.msra.mxu0 %v197
    %1838 = vmatprep.subr.mxu0 %v200
    %1839 = vmatpush1.msra.mxu0 %v199
    %1840 = vmatprep.subr.mxu0 %v202
    %1841 = vmatpush1.msra.mxu0 %v201
    %1842 = vmatprep.subr.mxu0 0.0
    %1843 = vmatpush1.msra.mxu0 0.0
    %1844 = vmatprep.subr.mxu0 0.0
    %1845 = vmatpush1.msra.mxu0 0.0
    %1846 = vmatprep.subr.mxu0 0.0
    %1847 = vmatpush1.msra.mxu0 0.0
    %1848 = vmatprep.subr.mxu0 0.0
    %1849 = vmatpush1.msra.mxu0 0.0
    %1850 = vmatprep.subr.mxu0 0.0
    %1851 = vmatpush1.msra.mxu0 0.0
    %1852 = vmatprep.subr.mxu0 0.0
    %1853 = vmatpush1.msra.mxu0 0.0
    %1854 = vmatprep.subr.mxu0 0.0
    %1855 = vmatpush1.msra.mxu0 0.0
    %1856 = vmatprep.subr.mxu0 0.0
    %1857 = vmatpush1.msra.mxu0 0.0
    %1858 = vmatprep.subr.mxu0 0.0
    %1859 = vmatpush1.msra.mxu0 0.0
    %1860 = vmatprep.subr.mxu0 0.0
    %1861 = vmatpush1.msra.mxu0 0.0
    %1862 = vmatprep.subr.mxu0 0.0
    %1863 = vmatpush1.msra.mxu0 0.0
    %1864 = vmatprep.subr.mxu0 0.0
    %1865 = vmatpush1.msra.mxu0 0.0
    %1866 = vmatprep.subr.mxu0 0.0
    %1867 = vmatpush1.msra.mxu0 0.0
    %1868 = vmatprep.subr.mxu0 0.0
    %1869 = vmatpush1.msra.mxu0 0.0
    %1870 = vmatprep.subr.mxu0 0.0
    %1871 = vmatpush1.msra.mxu0 0.0
    %1872 = vmatprep.subr.mxu0 0.0
    %1873 = vmatpush1.msra.mxu0 0.0
    %1874 = vmatprep.subr.mxu0 0.0
    %1875 = vmatpush1.msra.mxu0 0.0
    %1876 = vmatprep.subr.mxu0 0.0
    %1877 = vmatpush1.msra.mxu0 0.0
    %1878 = vmatprep.subr.mxu0 0.0
    %1879 = vmatpush1.msra.mxu0 0.0
    %1880 = vmatprep.subr.mxu0 0.0
    %1881 = vmatpush1.msra.mxu0 0.0
    %1882 = vmatprep.subr.mxu0 0.0
    %1883 = vmatpush1.msra.mxu0 0.0
    %1884 = vmatprep.subr.mxu0 0.0
    %1885 = vmatpush1.msra.mxu0 0.0
    %1886 = vmatprep.subr.mxu0 0.0
    %1887 = vmatpush1.msra.mxu0 0.0
    %1888 = vmatprep.subr.mxu0 0.0
    %1889 = vmatpush1.msra.mxu0 0.0
    %1890 = vmatprep.mubr.f32.mxu0 0.0
    %1891 = vmatmul.mubr.f32.gmra.mrb[0].mxu0 %v1824
    %v1892 = vpop.f32.mrb[0].mxu0
    %v1893 = vadd.f32 0.0, %v1892
    %v1894 = vpop.f32.mrb[0].mxu0
    %v1895 = vadd.f32 0.0, %v1894
    %1896 = vdwg.mxu0
    %v1899 = vrot.slane %v1893, 2
    %v1900 = vrot.slane %v1895, 2
    %v1903 = vadd.f32 %v165, %v1899
    %v1904 = vadd.f32 %v167, %v1900
    %v1905 = vxor.u32 %v1903, 2147483648
    %v1906 = vmul.f32 %v1905, 1.442695
    %v1907 = vpow.pop %v1906
    %v1908 = vadd.f32 %v1907, 1.0
    %v1909 = vrcp.pop %v1908
    %v1910 = vmul.f32 1.0, %v1909
    %v1911 = vtanh.pop %v1904
    %v1912 = vxor.u32 %v1904, 2147483648
    %v1913 = vmul.f32 %v1912, 1.442695
    %v1914 = vpow.pop %v1913
    %v1915 = vadd.f32 %v1914, 1.0
    %v1916 = vrcp.pop %v1915
    %v1917 = vmul.f32 1.0, %v1916
    %v1919 = vrot.slane %v1817, 6
    %v1921 = vmul.f32 %v1910, %v1919
    %v1922 = vmul.f32 %v1910, %v1911
    %1924 = vrot.lane.b32.xlu0 %v1922, 64
    %v1925 = vpop.permute.xlu0 %1924
    %v1927 = vadd.f32 %v1921, %v1925
    %v1928 = vtanh.pop %v1927
    %v1929 = vmul.f32 %v1917, %v1928
    %v1931 = vrot.slane %v1929, 6
    %1932 = vrot.lane.b32.xlu0 %v1931, 64
    %v1933 = vpop.permute.xlu0 %1932
    %v1934 = vsel %vm203, %v1933, 0
    %1936 = vmatprep.subr.mxu0 %v188
    %1937 = vmatpush1.msra.mxu0 %v187
    %1938 = vmatprep.subr.mxu0 %v190
    %1939 = vmatpush1.msra.mxu0 %v189
    %1940 = vmatprep.subr.mxu0 %v192
    %1941 = vmatpush1.msra.mxu0 %v191
    %1942 = vmatprep.subr.mxu0 %v194
    %1943 = vmatpush1.msra.mxu0 %v193
    %1944 = vmatprep.subr.mxu0 %v196
    %1945 = vmatpush1.msra.mxu0 %v195
    %1946 = vmatprep.subr.mxu0 %v198
    %1947 = vmatpush1.msra.mxu0 %v197
    %1948 = vmatprep.subr.mxu0 %v200
    %1949 = vmatpush1.msra.mxu0 %v199
    %1950 = vmatprep.subr.mxu0 %v202
    %1951 = vmatpush1.msra.mxu0 %v201
    %1952 = vmatprep.subr.mxu0 0.0
    %1953 = vmatpush1.msra.mxu0 0.0
    %1954 = vmatprep.subr.mxu0 0.0
    %1955 = vmatpush1.msra.mxu0 0.0
    %1956 = vmatprep.subr.mxu0 0.0
    %1957 = vmatpush1.msra.mxu0 0.0
    %1958 = vmatprep.subr.mxu0 0.0
    %1959 = vmatpush1.msra.mxu0 0.0
    %1960 = vmatprep.subr.mxu0 0.0
    %1961 = vmatpush1.msra.mxu0 0.0
    %1962 = vmatprep.subr.mxu0 0.0
    %1963 = vmatpush1.msra.mxu0 0.0
    %1964 = vmatprep.subr.mxu0 0.0
    %1965 = vmatpush1.msra.mxu0 0.0
    %1966 = vmatprep.subr.mxu0 0.0
    %1967 = vmatpush1.msra.mxu0 0.0
    %1968 = vmatprep.subr.mxu0 0.0
    %1969 = vmatpush1.msra.mxu0 0.0
    %1970 = vmatprep.subr.mxu0 0.0
    %1971 = vmatpush1.msra.mxu0 0.0
    %1972 = vmatprep.subr.mxu0 0.0
    %1973 = vmatpush1.msra.mxu0 0.0
    %1974 = vmatprep.subr.mxu0 0.0
    %1975 = vmatpush1.msra.mxu0 0.0
    %1976 = vmatprep.subr.mxu0 0.0
    %1977 = vmatpush1.msra.mxu0 0.0
    %1978 = vmatprep.subr.mxu0 0.0
    %1979 = vmatpush1.msra.mxu0 0.0
    %1980 = vmatprep.subr.mxu0 0.0
    %1981 = vmatpush1.msra.mxu0 0.0
    %1982 = vmatprep.subr.mxu0 0.0
    %1983 = vmatpush1.msra.mxu0 0.0
    %1984 = vmatprep.subr.mxu0 0.0
    %1985 = vmatpush1.msra.mxu0 0.0
    %1986 = vmatprep.subr.mxu0 0.0
    %1987 = vmatpush1.msra.mxu0 0.0
    %1988 = vmatprep.subr.mxu0 0.0
    %1989 = vmatpush1.msra.mxu0 0.0
    %1990 = vmatprep.subr.mxu0 0.0
    %1991 = vmatpush1.msra.mxu0 0.0
    %1992 = vmatprep.subr.mxu0 0.0
    %1993 = vmatpush1.msra.mxu0 0.0
    %1994 = vmatprep.subr.mxu0 0.0
    %1995 = vmatpush1.msra.mxu0 0.0
    %1996 = vmatprep.subr.mxu0 0.0
    %1997 = vmatpush1.msra.mxu0 0.0
    %1998 = vmatprep.subr.mxu0 0.0
    %1999 = vmatpush1.msra.mxu0 0.0
    %2000 = vmatprep.mubr.f32.mxu0 0.0
    %2001 = vmatmul.mubr.f32.gmra.mrb[0].mxu0 %v1934
    %v2002 = vpop.f32.mrb[0].mxu0
    %v2003 = vadd.f32 0.0, %v2002
    %v2004 = vpop.f32.mrb[0].mxu0
    %v2005 = vadd.f32 0.0, %v2004
    %2006 = vdwg.mxu0
    %v2007 = vadd.f32 %v171, %v2003
    %v2008 = vadd.f32 %v173, %v2005
    %v2009 = vxor.u32 %v2007, 2147483648
    %v2010 = vmul.f32 %v2009, 1.442695
    %v2011 = vpow.pop %v2010
    %v2012 = vadd.f32 %v2011, 1.0
    %v2013 = vrcp.pop %v2012
    %v2014 = vmul.f32 1.0, %v2013
    %v2015 = vtanh.pop %v2008
    %v2016 = vxor.u32 %v2008, 2147483648
    %v2017 = vmul.f32 %v2016, 1.442695
    %v2018 = vpow.pop %v2017
    %v2019 = vadd.f32 %v2018, 1.0
    %v2020 = vrcp.pop %v2019
    %v2021 = vmul.f32 1.0, %v2020
    %v2023 = vrot.slane %v1927, 6
    %v2025 = vmul.f32 %v2014, %v2023
    %v2026 = vmul.f32 %v2014, %v2015
    %2028 = vrot.lane.b32.xlu0 %v2026, 64
    %v2029 = vpop.permute.xlu0 %2028
    %v2031 = vadd.f32 %v2025, %v2029
    %v2032 = vtanh.pop %v2031
    %v2033 = vmul.f32 %v2021, %v2032
    %2035 = vrot.lane.b32.xlu0 %v2033, 64
    %v2036 = vpop.permute.xlu0 %2035
    %v2037 = vsel %vm203, %v2036, 0
    %2039 = vmatprep.subr.mxu0 %v188
    %2040 = vmatpush1.msra.mxu0 %v187
    %2041 = vmatprep.subr.mxu0 %v190
    %2042 = vmatpush1.msra.mxu0 %v189
    %2043 = vmatprep.subr.mxu0 %v192
    %2044 = vmatpush1.msra.mxu0 %v191
    %2045 = vmatprep.subr.mxu0 %v194
    %2046 = vmatpush1.msra.mxu0 %v193
    %2047 = vmatprep.subr.mxu0 %v196
    %2048 = vmatpush1.msra.mxu0 %v195
    %2049 = vmatprep.subr.mxu0 %v198
    %2050 = vmatpush1.msra.mxu0 %v197
    %2051 = vmatprep.subr.mxu0 %v200
    %2052 = vmatpush1.msra.mxu0 %v199
    %2053 = vmatprep.subr.mxu0 %v202
    %2054 = vmatpush1.msra.mxu0 %v201
    %2055 = vmatprep.subr.mxu0 0.0
    %2056 = vmatpush1.msra.mxu0 0.0
    %2057 = vmatprep.subr.mxu0 0.0
    %2058 = vmatpush1.msra.mxu0 0.0
    %2059 = vmatprep.subr.mxu0 0.0
    %2060 = vmatpush1.msra.mxu0 0.0
    %2061 = vmatprep.subr.mxu0 0.0
    %2062 = vmatpush1.msra.mxu0 0.0
    %2063 = vmatprep.subr.mxu0 0.0
    %2064 = vmatpush1.msra.mxu0 0.0
    %2065 = vmatprep.subr.mxu0 0.0
    %2066 = vmatpush1.msra.mxu0 0.0
    %2067 = vmatprep.subr.mxu0 0.0
    %2068 = vmatpush1.msra.mxu0 0.0
    %2069 = vmatprep.subr.mxu0 0.0
    %2070 = vmatpush1.msra.mxu0 0.0
    %2071 = vmatprep.subr.mxu0 0.0
    %2072 = vmatpush1.msra.mxu0 0.0
    %2073 = vmatprep.subr.mxu0 0.0
    %2074 = vmatpush1.msra.mxu0 0.0
    %2075 = vmatprep.subr.mxu0 0.0
    %2076 = vmatpush1.msra.mxu0 0.0
    %2077 = vmatprep.subr.mxu0 0.0
    %2078 = vmatpush1.msra.mxu0 0.0
    %2079 = vmatprep.subr.mxu0 0.0
    %2080 = vmatpush1.msra.mxu0 0.0
    %2081 = vmatprep.subr.mxu0 0.0
    %2082 = vmatpush1.msra.mxu0 0.0
    %2083 = vmatprep.subr.mxu0 0.0
    %2084 = vmatpush1.msra.mxu0 0.0
    %2085 = vmatprep.subr.mxu0 0.0
    %2086 = vmatpush1.msra.mxu0 0.0
    %2087 = vmatprep.subr.mxu0 0.0
    %2088 = vmatpush1.msra.mxu0 0.0
    %2089 = vmatprep.subr.mxu0 0.0
    %2090 = vmatpush1.msra.mxu0 0.0
    %2091 = vmatprep.subr.mxu0 0.0
    %2092 = vmatpush1.msra.mxu0 0.0
    %2093 = vmatprep.subr.mxu0 0.0
    %2094 = vmatpush1.msra.mxu0 0.0
    %2095 = vmatprep.subr.mxu0 0.0
    %2096 = vmatpush1.msra.mxu0 0.0
    %2097 = vmatprep.subr.mxu0 0.0
    %2098 = vmatpush1.msra.mxu0 0.0
    %2099 = vmatprep.subr.mxu0 0.0
    %2100 = vmatpush1.msra.mxu0 0.0
    %2101 = vmatprep.subr.mxu0 0.0
    %2102 = vmatpush1.msra.mxu0 0.0
    %2103 = vmatprep.mubr.f32.mxu0 0.0
    %2104 = vmatmul.mubr.f32.gmra.mrb[0].mxu0 %v2037
    %v2105 = vpop.f32.mrb[0].mxu0
    %v2106 = vadd.f32 0.0, %v2105
    %v2107 = vpop.f32.mrb[0].mxu0
    %v2108 = vadd.f32 0.0, %v2107
    %2109 = vdwg.mxu0
    %v2112 = vrot.slane %v2106, 6
    %v2113 = vrot.slane %v2108, 6
    %v2116 = vadd.f32 %v171, %v2112
    %v2117 = vadd.f32 %v173, %v2113
    %v2118 = vxor.u32 %v2116, 2147483648
    %v2119 = vmul.f32 %v2118, 1.442695
    %v2120 = vpow.pop %v2119
    %v2121 = vadd.f32 %v2120, 1.0
    %v2122 = vrcp.pop %v2121
    %v2123 = vmul.f32 1.0, %v2122
    %v2124 = vtanh.pop %v2117
    %v2125 = vxor.u32 %v2117, 2147483648
    %v2126 = vmul.f32 %v2125, 1.442695
    %v2127 = vpow.pop %v2126
    %v2128 = vadd.f32 %v2127, 1.0
    %v2129 = vrcp.pop %v2128
    %v2130 = vmul.f32 1.0, %v2129
    %v2132 = vrot.slane %v2031, 6
    %v2134 = vmul.f32 %v2123, %v2132
    %v2135 = vmul.f32 %v2123, %v2124
    %2137 = vrot.lane.b32.xlu0 %v2135, 64
    %v2138 = vpop.permute.xlu0 %2137
    %v2140 = vadd.f32 %v2134, %v2138
    %v2141 = vtanh.pop %v2140
    %v2142 = vmul.f32 %v2130, %v2141
    %v2144 = vrot.slane %v2142, 2
    %2145 = vrot.lane.b32.xlu0 %v2144, 64
    %v2146 = vpop.permute.xlu0 %2145
    %v2147 = vsel %vm203, %v2146, 0
    %2149 = vmatprep.subr.mxu0 %v188
    %2150 = vmatpush1.msra.mxu0 %v187
    %2151 = vmatprep.subr.mxu0 %v190
    %2152 = vmatpush1.msra.mxu0 %v189
    %2153 = vmatprep.subr.mxu0 %v192
    %2154 = vmatpush1.msra.mxu0 %v191
    %2155 = vmatprep.subr.mxu0 %v194
    %2156 = vmatpush1.msra.mxu0 %v193
    %2157 = vmatprep.subr.mxu0 %v196
    %2158 = vmatpush1.msra.mxu0 %v195
    %2159 = vmatprep.subr.mxu0 %v198
    %2160 = vmatpush1.msra.mxu0 %v197
    %2161 = vmatprep.subr.mxu0 %v200
    %2162 = vmatpush1.msra.mxu0 %v199
    %2163 = vmatprep.subr.mxu0 %v202
    %2164 = vmatpush1.msra.mxu0 %v201
    %2165 = vmatprep.subr.mxu0 0.0
    %2166 = vmatpush1.msra.mxu0 0.0
    %2167 = vmatprep.subr.mxu0 0.0
    %2168 = vmatpush1.msra.mxu0 0.0
    %2169 = vmatprep.subr.mxu0 0.0
    %2170 = vmatpush1.msra.mxu0 0.0
    %2171 = vmatprep.subr.mxu0 0.0
    %2172 = vmatpush1.msra.mxu0 0.0
    %2173 = vmatprep.subr.mxu0 0.0
    %2174 = vmatpush1.msra.mxu0 0.0
    %2175 = vmatprep.subr.mxu0 0.0
    %2176 = vmatpush1.msra.mxu0 0.0
    %2177 = vmatprep.subr.mxu0 0.0
    %2178 = vmatpush1.msra.mxu0 0.0
    %2179 = vmatprep.subr.mxu0 0.0
    %2180 = vmatpush1.msra.mxu0 0.0
    %2181 = vmatprep.subr.mxu0 0.0
    %2182 = vmatpush1.msra.mxu0 0.0
    %2183 = vmatprep.subr.mxu0 0.0
    %2184 = vmatpush1.msra.mxu0 0.0
    %2185 = vmatprep.subr.mxu0 0.0
    %2186 = vmatpush1.msra.mxu0 0.0
    %2187 = vmatprep.subr.mxu0 0.0
    %2188 = vmatpush1.msra.mxu0 0.0
    %2189 = vmatprep.subr.mxu0 0.0
    %2190 = vmatpush1.msra.mxu0 0.0
    %2191 = vmatprep.subr.mxu0 0.0
    %2192 = vmatpush1.msra.mxu0 0.0
    %2193 = vmatprep.subr.mxu0 0.0
    %2194 = vmatpush1.msra.mxu0 0.0
    %2195 = vmatprep.subr.mxu0 0.0
    %2196 = vmatpush1.msra.mxu0 0.0
    %2197 = vmatprep.subr.mxu0 0.0
    %2198 = vmatpush1.msra.mxu0 0.0
    %2199 = vmatprep.subr.mxu0 0.0
    %2200 = vmatpush1.msra.mxu0 0.0
    %2201 = vmatprep.subr.mxu0 0.0
    %2202 = vmatpush1.msra.mxu0 0.0
    %2203 = vmatprep.subr.mxu0 0.0
    %2204 = vmatpush1.msra.mxu0 0.0
    %2205 = vmatprep.subr.mxu0 0.0
    %2206 = vmatpush1.msra.mxu0 0.0
    %2207 = vmatprep.subr.mxu0 0.0
    %2208 = vmatpush1.msra.mxu0 0.0
    %2209 = vmatprep.subr.mxu0 0.0
    %2210 = vmatpush1.msra.mxu0 0.0
    %2211 = vmatprep.subr.mxu0 0.0
    %2212 = vmatpush1.msra.mxu0 0.0
    %2213 = vmatprep.mubr.f32.mxu0 0.0
    %2214 = vmatmul.mubr.f32.gmra.mrb[0].mxu0 %v2147
    %v2215 = vpop.f32.mrb[0].mxu0
    %v2216 = vadd.f32 0.0, %v2215
    %v2217 = vpop.f32.mrb[0].mxu0
    %v2218 = vadd.f32 0.0, %v2217
    %2219 = vdwg.mxu0
    %v2222 = vrot.slane %v2216, 4
    %v2223 = vrot.slane %v2218, 4
    %v2226 = vadd.f32 %v171, %v2222
    %v2227 = vadd.f32 %v173, %v2223
    %v2228 = vxor.u32 %v2226, 2147483648
    %v2229 = vmul.f32 %v2228, 1.442695
    %v2230 = vpow.pop %v2229
    %v2231 = vadd.f32 %v2230, 1.0
    %v2232 = vrcp.pop %v2231
    %v2233 = vmul.f32 1.0, %v2232
    %v2234 = vtanh.pop %v2227
    %v2235 = vxor.u32 %v2227, 2147483648
    %v2236 = vmul.f32 %v2235, 1.442695
    %v2237 = vpow.pop %v2236
    %v2238 = vadd.f32 %v2237, 1.0
    %v2239 = vrcp.pop %v2238
    %v2240 = vmul.f32 1.0, %v2239
    %v2242 = vrot.slane %v2140, 6
    %v2244 = vmul.f32 %v2233, %v2242
    %v2245 = vmul.f32 %v2233, %v2234
    %2247 = vrot.lane.b32.xlu0 %v2245, 64
    %v2248 = vpop.permute.xlu0 %2247
    %v2250 = vadd.f32 %v2244, %v2248
    %v2251 = vtanh.pop %v2250
    %v2252 = vmul.f32 %v2240, %v2251
    %v2254 = vrot.slane %v2252, 4
    %2255 = vrot.lane.b32.xlu0 %v2254, 64
    %v2256 = vpop.permute.xlu0 %2255
    %v2257 = vsel %vm203, %v2256, 0
    %2259 = vmatprep.subr.mxu0 %v188
    %2260 = vmatpush1.msra.mxu0 %v187
    %2261 = vmatprep.subr.mxu0 %v190
    %2262 = vmatpush1.msra.mxu0 %v189
    %2263 = vmatprep.subr.mxu0 %v192
    %2264 = vmatpush1.msra.mxu0 %v191
    %2265 = vmatprep.subr.mxu0 %v194
    %2266 = vmatpush1.msra.mxu0 %v193
    %2267 = vmatprep.subr.mxu0 %v196
    %2268 = vmatpush1.msra.mxu0 %v195
    %2269 = vmatprep.subr.mxu0 %v198
    %2270 = vmatpush1.msra.mxu0 %v197
    %2271 = vmatprep.subr.mxu0 %v200
    %2272 = vmatpush1.msra.mxu0 %v199
    %2273 = vmatprep.subr.mxu0 %v202
    %2274 = vmatpush1.msra.mxu0 %v201
    %2275 = vmatprep.subr.mxu0 0.0
    %2276 = vmatpush1.msra.mxu0 0.0
    %2277 = vmatprep.subr.mxu0 0.0
    %2278 = vmatpush1.msra.mxu0 0.0
    %2279 = vmatprep.subr.mxu0 0.0
    %2280 = vmatpush1.msra.mxu0 0.0
    %2281 = vmatprep.subr.mxu0 0.0
    %2282 = vmatpush1.msra.mxu0 0.0
    %2283 = vmatprep.subr.mxu0 0.0
    %2284 = vmatpush1.msra.mxu0 0.0
    %2285 = vmatprep.subr.mxu0 0.0
    %2286 = vmatpush1.msra.mxu0 0.0
    %2287 = vmatprep.subr.mxu0 0.0
    %2288 = vmatpush1.msra.mxu0 0.0
    %2289 = vmatprep.subr.mxu0 0.0
    %2290 = vmatpush1.msra.mxu0 0.0
    %2291 = vmatprep.subr.mxu0 0.0
    %2292 = vmatpush1.msra.mxu0 0.0
    %2293 = vmatprep.subr.mxu0 0.0
    %2294 = vmatpush1.msra.mxu0 0.0
    %2295 = vmatprep.subr.mxu0 0.0
    %2296 = vmatpush1.msra.mxu0 0.0
    %2297 = vmatprep.subr.mxu0 0.0
    %2298 = vmatpush1.msra.mxu0 0.0
    %2299 = vmatprep.subr.mxu0 0.0
    %2300 = vmatpush1.msra.mxu0 0.0
    %2301 = vmatprep.subr.mxu0 0.0
    %2302 = vmatpush1.msra.mxu0 0.0
    %2303 = vmatprep.subr.mxu0 0.0
    %2304 = vmatpush1.msra.mxu0 0.0
    %2305 = vmatprep.subr.mxu0 0.0
    %2306 = vmatpush1.msra.mxu0 0.0
    %2307 = vmatprep.subr.mxu0 0.0
    %2308 = vmatpush1.msra.mxu0 0.0
    %2309 = vmatprep.subr.mxu0 0.0
    %2310 = vmatpush1.msra.mxu0 0.0
    %2311 = vmatprep.subr.mxu0 0.0
    %2312 = vmatpush1.msra.mxu0 0.0
    %2313 = vmatprep.subr.mxu0 0.0
    %2314 = vmatpush1.msra.mxu0 0.0
    %2315 = vmatprep.subr.mxu0 0.0
    %2316 = vmatpush1.msra.mxu0 0.0
    %2317 = vmatprep.subr.mxu0 0.0
    %2318 = vmatpush1.msra.mxu0 0.0
    %2319 = vmatprep.subr.mxu0 0.0
    %2320 = vmatpush1.msra.mxu0 0.0
    %2321 = vmatprep.subr.mxu0 0.0
    %2322 = vmatpush1.msra.mxu0 0.0
    %2323 = vmatprep.mubr.f32.mxu0 0.0
    %2324 = vmatmul.mubr.f32.gmra.mrb[0].mxu0 %v2257
    %v2325 = vpop.f32.mrb[0].mxu0
    %v2326 = vadd.f32 0.0, %v2325
    %v2327 = vpop.f32.mrb[0].mxu0
    %v2328 = vadd.f32 0.0, %v2327
    %2329 = vdwg.mxu0
    %v2332 = vrot.slane %v2326, 2
    %v2333 = vrot.slane %v2328, 2
    %v2336 = vadd.f32 %v171, %v2332
    %v2337 = vadd.f32 %v173, %v2333
    %v2338 = vxor.u32 %v2336, 2147483648
    %v2339 = vmul.f32 %v2338, 1.442695
    %v2340 = vpow.pop %v2339
    %v2341 = vadd.f32 %v2340, 1.0
    %v2342 = vrcp.pop %v2341
    %v2343 = vmul.f32 1.0, %v2342
    %v2344 = vtanh.pop %v2337
    %v2345 = vxor.u32 %v2337, 2147483648
    %v2346 = vmul.f32 %v2345, 1.442695
    %v2347 = vpow.pop %v2346
    %v2348 = vadd.f32 %v2347, 1.0
    %v2349 = vrcp.pop %v2348
    %v2350 = vmul.f32 1.0, %v2349
    %v2352 = vrot.slane %v2250, 6
    %v2354 = vmul.f32 %v2343, %v2352
    %v2355 = vmul.f32 %v2343, %v2344
    %2357 = vrot.lane.b32.xlu0 %v2355, 64
    %v2358 = vpop.permute.xlu0 %2357
    %v2360 = vadd.f32 %v2354, %v2358
    %v2361 = vtanh.pop %v2360
    %v2362 = vmul.f32 %v2350, %v2361
    %v2364 = vrot.slane %v2362, 6
    %2365 = vrot.lane.b32.xlu0 %v2364, 64
    %v2366 = vpop.permute.xlu0 %2365
    %v2367 = vsel %vm203, %v2366, 0
    %2369 = vmatprep.subr.mxu0 %v188
    %2370 = vmatpush1.msra.mxu0 %v187
    %2371 = vmatprep.subr.mxu0 %v190
    %2372 = vmatpush1.msra.mxu0 %v189
    %2373 = vmatprep.subr.mxu0 %v192
    %2374 = vmatpush1.msra.mxu0 %v191
    %2375 = vmatprep.subr.mxu0 %v194
    %2376 = vmatpush1.msra.mxu0 %v193
    %2377 = vmatprep.subr.mxu0 %v196
    %2378 = vmatpush1.msra.mxu0 %v195
    %2379 = vmatprep.subr.mxu0 %v198
    %2380 = vmatpush1.msra.mxu0 %v197
    %2381 = vmatprep.subr.mxu0 %v200
    %2382 = vmatpush1.msra.mxu0 %v199
    %2383 = vmatprep.subr.mxu0 %v202
    %2384 = vmatpush1.msra.mxu0 %v201
    %2385 = vmatprep.subr.mxu0 0.0
    %2386 = vmatpush1.msra.mxu0 0.0
    %2387 = vmatprep.subr.mxu0 0.0
    %2388 = vmatpush1.msra.mxu0 0.0
    %2389 = vmatprep.subr.mxu0 0.0
    %2390 = vmatpush1.msra.mxu0 0.0
    %2391 = vmatprep.subr.mxu0 0.0
    %2392 = vmatpush1.msra.mxu0 0.0
    %2393 = vmatprep.subr.mxu0 0.0
    %2394 = vmatpush1.msra.mxu0 0.0
    %2395 = vmatprep.subr.mxu0 0.0
    %2396 = vmatpush1.msra.mxu0 0.0
    %2397 = vmatprep.subr.mxu0 0.0
    %2398 = vmatpush1.msra.mxu0 0.0
    %2399 = vmatprep.subr.mxu0 0.0
    %2400 = vmatpush1.msra.mxu0 0.0
    %2401 = vmatprep.subr.mxu0 0.0
    %2402 = vmatpush1.msra.mxu0 0.0
    %2403 = vmatprep.subr.mxu0 0.0
    %2404 = vmatpush1.msra.mxu0 0.0
    %2405 = vmatprep.subr.mxu0 0.0
    %2406 = vmatpush1.msra.mxu0 0.0
    %2407 = vmatprep.subr.mxu0 0.0
    %2408 = vmatpush1.msra.mxu0 0.0
    %2409 = vmatprep.subr.mxu0 0.0
    %2410 = vmatpush1.msra.mxu0 0.0
    %2411 = vmatprep.subr.mxu0 0.0
    %2412 = vmatpush1.msra.mxu0 0.0
    %2413 = vmatprep.subr.mxu0 0.0
    %2414 = vmatpush1.msra.mxu0 0.0
    %2415 = vmatprep.subr.mxu0 0.0
    %2416 = vmatpush1.msra.mxu0 0.0
    %2417 = vmatprep.subr.mxu0 0.0
    %2418 = vmatpush1.msra.mxu0 0.0
    %2419 = vmatprep.subr.mxu0 0.0
    %2420 = vmatpush1.msra.mxu0 0.0
    %2421 = vmatprep.subr.mxu0 0.0
    %2422 = vmatpush1.msra.mxu0 0.0
    %2423 = vmatprep.subr.mxu0 0.0
    %2424 = vmatpush1.msra.mxu0 0.0
    %2425 = vmatprep.subr.mxu0 0.0
    %2426 = vmatpush1.msra.mxu0 0.0
    %2427 = vmatprep.subr.mxu0 0.0
    %2428 = vmatpush1.msra.mxu0 0.0
    %2429 = vmatprep.subr.mxu0 0.0
    %2430 = vmatpush1.msra.mxu0 0.0
    %2431 = vmatprep.subr.mxu0 0.0
    %2432 = vmatpush1.msra.mxu0 0.0
    %2433 = vmatprep.mubr.f32.mxu0 0.0
    %2434 = vmatmul.mubr.f32.gmra.mrb[0].mxu0 %v2367
    %v2435 = vpop.f32.mrb[0].mxu0
    %v2436 = vadd.f32 0.0, %v2435
    %v2437 = vpop.f32.mrb[0].mxu0
    %v2438 = vadd.f32 0.0, %v2437
    %2439 = vdwg.mxu0
    %v2440 = vadd.f32 %v177, %v2436
    %v2441 = vadd.f32 %v179, %v2438
    %v2442 = vxor.u32 %v2440, 2147483648
    %v2443 = vmul.f32 %v2442, 1.442695
    %v2444 = vpow.pop %v2443
    %v2445 = vadd.f32 %v2444, 1.0
    %v2446 = vrcp.pop %v2445
    %v2447 = vmul.f32 1.0, %v2446
    %v2448 = vtanh.pop %v2441
    %v2449 = vxor.u32 %v2441, 2147483648
    %v2450 = vmul.f32 %v2449, 1.442695
    %v2451 = vpow.pop %v2450
    %v2452 = vadd.f32 %v2451, 1.0
    %v2453 = vrcp.pop %v2452
    %v2454 = vmul.f32 1.0, %v2453
    %v2456 = vrot.slane %v2360, 6
    %v2458 = vmul.f32 %v2447, %v2456
    %v2459 = vmul.f32 %v2447, %v2448
    %2461 = vrot.lane.b32.xlu0 %v2459, 64
    %v2462 = vpop.permute.xlu0 %2461
    %v2464 = vadd.f32 %v2458, %v2462
    %v2465 = vtanh.pop %v2464
    %v2466 = vmul.f32 %v2454, %v2465
    %2468 = vrot.lane.b32.xlu0 %v2466, 64
    %v2469 = vpop.permute.xlu0 %2468
    %v2470 = vsel %vm203, %v2469, 0
    %2472 = vmatprep.subr.mxu0 %v188
    %2473 = vmatpush1.msra.mxu0 %v187
    %2474 = vmatprep.subr.mxu0 %v190
    %2475 = vmatpush1.msra.mxu0 %v189
    %2476 = vmatprep.subr.mxu0 %v192
    %2477 = vmatpush1.msra.mxu0 %v191
    %2478 = vmatprep.subr.mxu0 %v194
    %2479 = vmatpush1.msra.mxu0 %v193
    %2480 = vmatprep.subr.mxu0 %v196
    %2481 = vmatpush1.msra.mxu0 %v195
    %2482 = vmatprep.subr.mxu0 %v198
    %2483 = vmatpush1.msra.mxu0 %v197
    %2484 = vmatprep.subr.mxu0 %v200
    %2485 = vmatpush1.msra.mxu0 %v199
    %2486 = vmatprep.subr.mxu0 %v202
    %2487 = vmatpush1.msra.mxu0 %v201
    %2488 = vmatprep.subr.mxu0 0.0
    %2489 = vmatpush1.msra.mxu0 0.0
    %2490 = vmatprep.subr.mxu0 0.0
    %2491 = vmatpush1.msra.mxu0 0.0
    %2492 = vmatprep.subr.mxu0 0.0
    %2493 = vmatpush1.msra.mxu0 0.0
    %2494 = vmatprep.subr.mxu0 0.0
    %2495 = vmatpush1.msra.mxu0 0.0
    %2496 = vmatprep.subr.mxu0 0.0
    %2497 = vmatpush1.msra.mxu0 0.0
    %2498 = vmatprep.subr.mxu0 0.0
    %2499 = vmatpush1.msra.mxu0 0.0
    %2500 = vmatprep.subr.mxu0 0.0
    %2501 = vmatpush1.msra.mxu0 0.0
    %2502 = vmatprep.subr.mxu0 0.0
    %2503 = vmatpush1.msra.mxu0 0.0
    %2504 = vmatprep.subr.mxu0 0.0
    %2505 = vmatpush1.msra.mxu0 0.0
    %2506 = vmatprep.subr.mxu0 0.0
    %2507 = vmatpush1.msra.mxu0 0.0
    %2508 = vmatprep.subr.mxu0 0.0
    %2509 = vmatpush1.msra.mxu0 0.0
    %2510 = vmatprep.subr.mxu0 0.0
    %2511 = vmatpush1.msra.mxu0 0.0
    %2512 = vmatprep.subr.mxu0 0.0
    %2513 = vmatpush1.msra.mxu0 0.0
    %2514 = vmatprep.subr.mxu0 0.0
    %2515 = vmatpush1.msra.mxu0 0.0
    %2516 = vmatprep.subr.mxu0 0.0
    %2517 = vmatpush1.msra.mxu0 0.0
    %2518 = vmatprep.subr.mxu0 0.0
    %2519 = vmatpush1.msra.mxu0 0.0
    %2520 = vmatprep.subr.mxu0 0.0
    %2521 = vmatpush1.msra.mxu0 0.0
    %2522 = vmatprep.subr.mxu0 0.0
    %2523 = vmatpush1.msra.mxu0 0.0
    %2524 = vmatprep.subr.mxu0 0.0
    %2525 = vmatpush1.msra.mxu0 0.0
    %2526 = vmatprep.subr.mxu0 0.0
    %2527 = vmatpush1.msra.mxu0 0.0
    %2528 = vmatprep.subr.mxu0 0.0
    %2529 = vmatpush1.msra.mxu0 0.0
    %2530 = vmatprep.subr.mxu0 0.0
    %2531 = vmatpush1.msra.mxu0 0.0
    %2532 = vmatprep.subr.mxu0 0.0
    %2533 = vmatpush1.msra.mxu0 0.0
    %2534 = vmatprep.subr.mxu0 0.0
    %2535 = vmatpush1.msra.mxu0 0.0
    %2536 = vmatprep.mubr.f32.mxu0 0.0
    %2537 = vmatmul.mubr.f32.gmra.mrb[0].mxu0 %v2470
    %v2538 = vpop.f32.mrb[0].mxu0
    %v2539 = vadd.f32 0.0, %v2538
    %v2540 = vpop.f32.mrb[0].mxu0
    %v2541 = vadd.f32 0.0, %v2540
    %2542 = vdwg.mxu0
    %v2545 = vrot.slane %v2539, 6
    %v2546 = vrot.slane %v2541, 6
    %v2549 = vadd.f32 %v177, %v2545
    %v2550 = vadd.f32 %v179, %v2546
    %v2551 = vxor.u32 %v2549, 2147483648
    %v2552 = vmul.f32 %v2551, 1.442695
    %v2553 = vpow.pop %v2552
    %v2554 = vadd.f32 %v2553, 1.0
    %v2555 = vrcp.pop %v2554
    %v2556 = vmul.f32 1.0, %v2555
    %v2557 = vtanh.pop %v2550
    %v2558 = vxor.u32 %v2550, 2147483648
    %v2559 = vmul.f32 %v2558, 1.442695
    %v2560 = vpow.pop %v2559
    %v2561 = vadd.f32 %v2560, 1.0
    %v2562 = vrcp.pop %v2561
    %v2563 = vmul.f32 1.0, %v2562
    %v2565 = vrot.slane %v2464, 6
    %v2567 = vmul.f32 %v2556, %v2565
    %v2568 = vmul.f32 %v2556, %v2557
    %2570 = vrot.lane.b32.xlu0 %v2568, 64
    %v2571 = vpop.permute.xlu0 %2570
    %v2573 = vadd.f32 %v2567, %v2571
    %v2574 = vtanh.pop %v2573
    %v2575 = vmul.f32 %v2563, %v2574
    %v2577 = vrot.slane %v2575, 2
    %2578 = vrot.lane.b32.xlu0 %v2577, 64
    %v2579 = vpop.permute.xlu0 %2578
    %v2580 = vsel %vm203, %v2579, 0
    %2582 = vmatprep.subr.mxu0 %v188
    %2583 = vmatpush1.msra.mxu0 %v187
    %2584 = vmatprep.subr.mxu0 %v190
    %2585 = vmatpush1.msra.mxu0 %v189
    %2586 = vmatprep.subr.mxu0 %v192
    %2587 = vmatpush1.msra.mxu0 %v191
    %2588 = vmatprep.subr.mxu0 %v194
    %2589 = vmatpush1.msra.mxu0 %v193
    %2590 = vmatprep.subr.mxu0 %v196
    %2591 = vmatpush1.msra.mxu0 %v195
    %2592 = vmatprep.subr.mxu0 %v198
    %2593 = vmatpush1.msra.mxu0 %v197
    %2594 = vmatprep.subr.mxu0 %v200
    %2595 = vmatpush1.msra.mxu0 %v199
    %2596 = vmatprep.subr.mxu0 %v202
    %2597 = vmatpush1.msra.mxu0 %v201
    %2598 = vmatprep.subr.mxu0 0.0
    %2599 = vmatpush1.msra.mxu0 0.0
    %2600 = vmatprep.subr.mxu0 0.0
    %2601 = vmatpush1.msra.mxu0 0.0
    %2602 = vmatprep.subr.mxu0 0.0
    %2603 = vmatpush1.msra.mxu0 0.0
    %2604 = vmatprep.subr.mxu0 0.0
    %2605 = vmatpush1.msra.mxu0 0.0
    %2606 = vmatprep.subr.mxu0 0.0
    %2607 = vmatpush1.msra.mxu0 0.0
    %2608 = vmatprep.subr.mxu0 0.0
    %2609 = vmatpush1.msra.mxu0 0.0
    %2610 = vmatprep.subr.mxu0 0.0
    %2611 = vmatpush1.msra.mxu0 0.0
    %2612 = vmatprep.subr.mxu0 0.0
    %2613 = vmatpush1.msra.mxu0 0.0
    %2614 = vmatprep.subr.mxu0 0.0
    %2615 = vmatpush1.msra.mxu0 0.0
    %2616 = vmatprep.subr.mxu0 0.0
    %2617 = vmatpush1.msra.mxu0 0.0
    %2618 = vmatprep.subr.mxu0 0.0
    %2619 = vmatpush1.msra.mxu0 0.0
    %2620 = vmatprep.subr.mxu0 0.0
    %2621 = vmatpush1.msra.mxu0 0.0
    %2622 = vmatprep.subr.mxu0 0.0
    %2623 = vmatpush1.msra.mxu0 0.0
    %2624 = vmatprep.subr.mxu0 0.0
    %2625 = vmatpush1.msra.mxu0 0.0
    %2626 = vmatprep.subr.mxu0 0.0
    %2627 = vmatpush1.msra.mxu0 0.0
    %2628 = vmatprep.subr.mxu0 0.0
    %2629 = vmatpush1.msra.mxu0 0.0
    %2630 = vmatprep.subr.mxu0 0.0
    %2631 = vmatpush1.msra.mxu0 0.0
    %2632 = vmatprep.subr.mxu0 0.0
    %2633 = vmatpush1.msra.mxu0 0.0
    %2634 = vmatprep.subr.mxu0 0.0
    %2635 = vmatpush1.msra.mxu0 0.0
    %2636 = vmatprep.subr.mxu0 0.0
    %2637 = vmatpush1.msra.mxu0 0.0
    %2638 = vmatprep.subr.mxu0 0.0
    %2639 = vmatpush1.msra.mxu0 0.0
    %2640 = vmatprep.subr.mxu0 0.0
    %2641 = vmatpush1.msra.mxu0 0.0
    %2642 = vmatprep.subr.mxu0 0.0
    %2643 = vmatpush1.msra.mxu0 0.0
    %2644 = vmatprep.subr.mxu0 0.0
    %2645 = vmatpush1.msra.mxu0 0.0
    %2646 = vmatprep.mubr.f32.mxu0 0.0
    %2647 = vmatmul.mubr.f32.gmra.mrb[0].mxu0 %v2580
    %v2648 = vpop.f32.mrb[0].mxu0
    %v2649 = vadd.f32 0.0, %v2648
    %v2650 = vpop.f32.mrb[0].mxu0
    %v2651 = vadd.f32 0.0, %v2650
    %2652 = vdwg.mxu0
    %v2655 = vrot.slane %v2649, 4
    %v2656 = vrot.slane %v2651, 4
    %v2659 = vadd.f32 %v177, %v2655
    %v2660 = vadd.f32 %v179, %v2656
    %v2661 = vxor.u32 %v2659, 2147483648
    %v2662 = vmul.f32 %v2661, 1.442695
    %v2663 = vpow.pop %v2662
    %v2664 = vadd.f32 %v2663, 1.0
    %v2665 = vrcp.pop %v2664
    %v2666 = vmul.f32 1.0, %v2665
    %v2667 = vtanh.pop %v2660
    %v2668 = vxor.u32 %v2660, 2147483648
    %v2669 = vmul.f32 %v2668, 1.442695
    %v2670 = vpow.pop %v2669
    %v2671 = vadd.f32 %v2670, 1.0
    %v2672 = vrcp.pop %v2671
    %v2673 = vmul.f32 1.0, %v2672
    %v2675 = vrot.slane %v2573, 6
    %v2677 = vmul.f32 %v2666, %v2675
    %v2678 = vmul.f32 %v2666, %v2667
    %2680 = vrot.lane.b32.xlu0 %v2678, 64
    %v2681 = vpop.permute.xlu0 %2680
    %v2683 = vadd.f32 %v2677, %v2681
    %v2684 = vtanh.pop %v2683
    %v2685 = vmul.f32 %v2673, %v2684
    %v2687 = vrot.slane %v2685, 4
    %2688 = vrot.lane.b32.xlu0 %v2687, 64
    %v2689 = vpop.permute.xlu0 %2688
    %v2690 = vsel %vm203, %v2689, 0
    %2692 = vmatprep.subr.mxu0 %v188
    %2693 = vmatpush1.msra.mxu0 %v187
    %2694 = vmatprep.subr.mxu0 %v190
    %2695 = vmatpush1.msra.mxu0 %v189
    %2696 = vmatprep.subr.mxu0 %v192
    %2697 = vmatpush1.msra.mxu0 %v191
    %2698 = vmatprep.subr.mxu0 %v194
    %2699 = vmatpush1.msra.mxu0 %v193
    %2700 = vmatprep.subr.mxu0 %v196
    %2701 = vmatpush1.msra.mxu0 %v195
    %2702 = vmatprep.subr.mxu0 %v198
    %2703 = vmatpush1.msra.mxu0 %v197
    %2704 = vmatprep.subr.mxu0 %v200
    %2705 = vmatpush1.msra.mxu0 %v199
    %2706 = vmatprep.subr.mxu0 %v202
    %2707 = vmatpush1.msra.mxu0 %v201
    %2708 = vmatprep.subr.mxu0 0.0
    %2709 = vmatpush1.msra.mxu0 0.0
    %2710 = vmatprep.subr.mxu0 0.0
    %2711 = vmatpush1.msra.mxu0 0.0
    %2712 = vmatprep.subr.mxu0 0.0
    %2713 = vmatpush1.msra.mxu0 0.0
    %2714 = vmatprep.subr.mxu0 0.0
    %2715 = vmatpush1.msra.mxu0 0.0
    %2716 = vmatprep.subr.mxu0 0.0
    %2717 = vmatpush1.msra.mxu0 0.0
    %2718 = vmatprep.subr.mxu0 0.0
    %2719 = vmatpush1.msra.mxu0 0.0
    %2720 = vmatprep.subr.mxu0 0.0
    %2721 = vmatpush1.msra.mxu0 0.0
    %2722 = vmatprep.subr.mxu0 0.0
    %2723 = vmatpush1.msra.mxu0 0.0
    %2724 = vmatprep.subr.mxu0 0.0
    %2725 = vmatpush1.msra.mxu0 0.0
    %2726 = vmatprep.subr.mxu0 0.0
    %2727 = vmatpush1.msra.mxu0 0.0
    %2728 = vmatprep.subr.mxu0 0.0
    %2729 = vmatpush1.msra.mxu0 0.0
    %2730 = vmatprep.subr.mxu0 0.0
    %2731 = vmatpush1.msra.mxu0 0.0
    %2732 = vmatprep.subr.mxu0 0.0
    %2733 = vmatpush1.msra.mxu0 0.0
    %2734 = vmatprep.subr.mxu0 0.0
    %2735 = vmatpush1.msra.mxu0 0.0
    %2736 = vmatprep.subr.mxu0 0.0
    %2737 = vmatpush1.msra.mxu0 0.0
    %2738 = vmatprep.subr.mxu0 0.0
    %2739 = vmatpush1.msra.mxu0 0.0
    %2740 = vmatprep.subr.mxu0 0.0
    %2741 = vmatpush1.msra.mxu0 0.0
    %2742 = vmatprep.subr.mxu0 0.0
    %2743 = vmatpush1.msra.mxu0 0.0
    %2744 = vmatprep.subr.mxu0 0.0
    %2745 = vmatpush1.msra.mxu0 0.0
    %2746 = vmatprep.subr.mxu0 0.0
    %2747 = vmatpush1.msra.mxu0 0.0
    %2748 = vmatprep.subr.mxu0 0.0
    %2749 = vmatpush1.msra.mxu0 0.0
    %2750 = vmatprep.subr.mxu0 0.0
    %2751 = vmatpush1.msra.mxu0 0.0
    %2752 = vmatprep.subr.mxu0 0.0
    %2753 = vmatpush1.msra.mxu0 0.0
    %2754 = vmatprep.subr.mxu0 0.0
    %2755 = vmatpush1.msra.mxu0 0.0
    %2756 = vmatprep.mubr.f32.mxu0 0.0
    %2757 = vmatmul.mubr.f32.gmra.mrb[0].mxu0 %v2690
    %v2758 = vpop.f32.mrb[0].mxu0
    %v2759 = vadd.f32 0.0, %v2758
    %v2760 = vpop.f32.mrb[0].mxu0
    %v2761 = vadd.f32 0.0, %v2760
    %2762 = vdwg.mxu0
    %v2765 = vrot.slane %v2759, 2
    %v2766 = vrot.slane %v2761, 2
    %v2769 = vadd.f32 %v177, %v2765
    %v2770 = vadd.f32 %v179, %v2766
    %v2771 = vxor.u32 %v2769, 2147483648
    %v2772 = vmul.f32 %v2771, 1.442695
    %v2773 = vpow.pop %v2772
    %v2774 = vadd.f32 %v2773, 1.0
    %v2775 = vrcp.pop %v2774
    %v2776 = vmul.f32 1.0, %v2775
    %v2777 = vtanh.pop %v2770
    %v2778 = vxor.u32 %v2770, 2147483648
    %v2779 = vmul.f32 %v2778, 1.442695
    %v2780 = vpow.pop %v2779
    %v2781 = vadd.f32 %v2780, 1.0
    %v2782 = vrcp.pop %v2781
    %v2783 = vmul.f32 1.0, %v2782
    %v2785 = vrot.slane %v2683, 6
    %v2787 = vmul.f32 %v2776, %v2785
    %v2788 = vmul.f32 %v2776, %v2777
    %2790 = vrot.lane.b32.xlu0 %v2788, 64
    %v2791 = vpop.permute.xlu0 %2790
    %v2793 = vadd.f32 %v2787, %v2791
    %v2794 = vtanh.pop %v2793
    %v2795 = vmul.f32 %v2783, %v2794
    %v2797 = vrot.slane %v2795, 6
    %2798 = vrot.lane.b32.xlu0 %v2797, 64
    %v2799 = vpop.permute.xlu0 %2798
    %v2800 = vsel %vm203, %v2799, 0
    %2802 = vmatprep.subr.mxu0 %v188
    %2803 = vmatpush1.msra.mxu0 %v187
    %2804 = vmatprep.subr.mxu0 %v190
    %2805 = vmatpush1.msra.mxu0 %v189
    %2806 = vmatprep.subr.mxu0 %v192
    %2807 = vmatpush1.msra.mxu0 %v191
    %2808 = vmatprep.subr.mxu0 %v194
    %2809 = vmatpush1.msra.mxu0 %v193
    %2810 = vmatprep.subr.mxu0 %v196
    %2811 = vmatpush1.msra.mxu0 %v195
    %2812 = vmatprep.subr.mxu0 %v198
    %2813 = vmatpush1.msra.mxu0 %v197
    %2814 = vmatprep.subr.mxu0 %v200
    %2815 = vmatpush1.msra.mxu0 %v199
    %2816 = vmatprep.subr.mxu0 %v202
    %2817 = vmatpush1.msra.mxu0 %v201
    %2818 = vmatprep.subr.mxu0 0.0
    %2819 = vmatpush1.msra.mxu0 0.0
    %2820 = vmatprep.subr.mxu0 0.0
    %2821 = vmatpush1.msra.mxu0 0.0
    %2822 = vmatprep.subr.mxu0 0.0
    %2823 = vmatpush1.msra.mxu0 0.0
    %2824 = vmatprep.subr.mxu0 0.0
    %2825 = vmatpush1.msra.mxu0 0.0
    %2826 = vmatprep.subr.mxu0 0.0
    %2827 = vmatpush1.msra.mxu0 0.0
    %2828 = vmatprep.subr.mxu0 0.0
    %2829 = vmatpush1.msra.mxu0 0.0
    %2830 = vmatprep.subr.mxu0 0.0
    %2831 = vmatpush1.msra.mxu0 0.0
    %2832 = vmatprep.subr.mxu0 0.0
    %2833 = vmatpush1.msra.mxu0 0.0
    %2834 = vmatprep.subr.mxu0 0.0
    %2835 = vmatpush1.msra.mxu0 0.0
    %2836 = vmatprep.subr.mxu0 0.0
    %2837 = vmatpush1.msra.mxu0 0.0
    %2838 = vmatprep.subr.mxu0 0.0
    %2839 = vmatpush1.msra.mxu0 0.0
    %2840 = vmatprep.subr.mxu0 0.0
    %2841 = vmatpush1.msra.mxu0 0.0
    %2842 = vmatprep.subr.mxu0 0.0
    %2843 = vmatpush1.msra.mxu0 0.0
    %2844 = vmatprep.subr.mxu0 0.0
    %2845 = vmatpush1.msra.mxu0 0.0
    %2846 = vmatprep.subr.mxu0 0.0
    %2847 = vmatpush1.msra.mxu0 0.0
    %2848 = vmatprep.subr.mxu0 0.0
    %2849 = vmatpush1.msra.mxu0 0.0
    %2850 = vmatprep.subr.mxu0 0.0
    %2851 = vmatpush1.msra.mxu0 0.0
    %2852 = vmatprep.subr.mxu0 0.0
    %2853 = vmatpush1.msra.mxu0 0.0
    %2854 = vmatprep.subr.mxu0 0.0
    %2855 = vmatpush1.msra.mxu0 0.0
    %2856 = vmatprep.subr.mxu0 0.0
    %2857 = vmatpush1.msra.mxu0 0.0
    %2858 = vmatprep.subr.mxu0 0.0
    %2859 = vmatpush1.msra.mxu0 0.0
    %2860 = vmatprep.subr.mxu0 0.0
    %2861 = vmatpush1.msra.mxu0 0.0
    %2862 = vmatprep.subr.mxu0 0.0
    %2863 = vmatpush1.msra.mxu0 0.0
    %2864 = vmatprep.subr.mxu0 0.0
    %2865 = vmatpush1.msra.mxu0 0.0
    %2866 = vmatprep.mubr.f32.mxu0 0.0
    %2867 = vmatmul.mubr.f32.gmra.mrb[0].mxu0 %v2800
    %v2868 = vpop.f32.mrb[0].mxu0
    %v2869 = vadd.f32 0.0, %v2868
    %v2870 = vpop.f32.mrb[0].mxu0
    %v2871 = vadd.f32 0.0, %v2870
    %2872 = vdwg.mxu0
    %v2873 = vadd.f32 %v183, %v2869
    %v2874 = vadd.f32 %v185, %v2871
    %v2875 = vxor.u32 %v2873, 2147483648
    %v2876 = vmul.f32 %v2875, 1.442695
    %v2877 = vpow.pop %v2876
    %v2878 = vadd.f32 %v2877, 1.0
    %v2879 = vrcp.pop %v2878
    %v2880 = vmul.f32 1.0, %v2879
    %v2881 = vtanh.pop %v2874
    %v2882 = vxor.u32 %v2874, 2147483648
    %v2883 = vmul.f32 %v2882, 1.442695
    %v2884 = vpow.pop %v2883
    %v2885 = vadd.f32 %v2884, 1.0
    %v2886 = vrcp.pop %v2885
    %v2887 = vmul.f32 1.0, %v2886
    %v2889 = vrot.slane %v2793, 6
    %v2891 = vmul.f32 %v2880, %v2889
    %v2892 = vmul.f32 %v2880, %v2881
    %2894 = vrot.lane.b32.xlu0 %v2892, 64
    %v2895 = vpop.permute.xlu0 %2894
    %v2897 = vadd.f32 %v2891, %v2895
    %v2898 = vtanh.pop %v2897
    %v2899 = vmul.f32 %v2887, %v2898
    %2901 = vrot.lane.b32.xlu0 %v2899, 64
    %v2902 = vpop.permute.xlu0 %2901
    %v2903 = vsel %vm203, %v2902, 0
    %2905 = vmatprep.subr.mxu0 %v188
    %2906 = vmatpush1.msra.mxu0 %v187
    %2907 = vmatprep.subr.mxu0 %v190
    %2908 = vmatpush1.msra.mxu0 %v189
    %2909 = vmatprep.subr.mxu0 %v192
    %2910 = vmatpush1.msra.mxu0 %v191
    %2911 = vmatprep.subr.mxu0 %v194
    %2912 = vmatpush1.msra.mxu0 %v193
    %2913 = vmatprep.subr.mxu0 %v196
    %2914 = vmatpush1.msra.mxu0 %v195
    %2915 = vmatprep.subr.mxu0 %v198
    %2916 = vmatpush1.msra.mxu0 %v197
    %2917 = vmatprep.subr.mxu0 %v200
    %2918 = vmatpush1.msra.mxu0 %v199
    %2919 = vmatprep.subr.mxu0 %v202
    %2920 = vmatpush1.msra.mxu0 %v201
    %2921 = vmatprep.subr.mxu0 0.0
    %2922 = vmatpush1.msra.mxu0 0.0
    %2923 = vmatprep.subr.mxu0 0.0
    %2924 = vmatpush1.msra.mxu0 0.0
    %2925 = vmatprep.subr.mxu0 0.0
    %2926 = vmatpush1.msra.mxu0 0.0
    %2927 = vmatprep.subr.mxu0 0.0
    %2928 = vmatpush1.msra.mxu0 0.0
    %2929 = vmatprep.subr.mxu0 0.0
    %2930 = vmatpush1.msra.mxu0 0.0
    %2931 = vmatprep.subr.mxu0 0.0
    %2932 = vmatpush1.msra.mxu0 0.0
    %2933 = vmatprep.subr.mxu0 0.0
    %2934 = vmatpush1.msra.mxu0 0.0
    %2935 = vmatprep.subr.mxu0 0.0
    %2936 = vmatpush1.msra.mxu0 0.0
    %2937 = vmatprep.subr.mxu0 0.0
    %2938 = vmatpush1.msra.mxu0 0.0
    %2939 = vmatprep.subr.mxu0 0.0
    %2940 = vmatpush1.msra.mxu0 0.0
    %2941 = vmatprep.subr.mxu0 0.0
    %2942 = vmatpush1.msra.mxu0 0.0
    %2943 = vmatprep.subr.mxu0 0.0
    %2944 = vmatpush1.msra.mxu0 0.0
    %2945 = vmatprep.subr.mxu0 0.0
    %2946 = vmatpush1.msra.mxu0 0.0
    %2947 = vmatprep.subr.mxu0 0.0
    %2948 = vmatpush1.msra.mxu0 0.0
    %2949 = vmatprep.subr.mxu0 0.0
    %2950 = vmatpush1.msra.mxu0 0.0
    %2951 = vmatprep.subr.mxu0 0.0
    %2952 = vmatpush1.msra.mxu0 0.0
    %2953 = vmatprep.subr.mxu0 0.0
    %2954 = vmatpush1.msra.mxu0 0.0
    %2955 = vmatprep.subr.mxu0 0.0
    %2956 = vmatpush1.msra.mxu0 0.0
    %2957 = vmatprep.subr.mxu0 0.0
    %2958 = vmatpush1.msra.mxu0 0.0
    %2959 = vmatprep.subr.mxu0 0.0
    %2960 = vmatpush1.msra.mxu0 0.0
    %2961 = vmatprep.subr.mxu0 0.0
    %2962 = vmatpush1.msra.mxu0 0.0
    %2963 = vmatprep.subr.mxu0 0.0
    %2964 = vmatpush1.msra.mxu0 0.0
    %2965 = vmatprep.subr.mxu0 0.0
    %2966 = vmatpush1.msra.mxu0 0.0
    %2967 = vmatprep.subr.mxu0 0.0
    %2968 = vmatpush1.msra.mxu0 0.0
    %2969 = vmatprep.mubr.f32.mxu0 0.0
    %2970 = vmatmul.mubr.f32.gmra.mrb[0].mxu0 %v2903
    %v2971 = vpop.f32.mrb[0].mxu0
    %v2972 = vadd.f32 0.0, %v2971
    %v2973 = vpop.f32.mrb[0].mxu0
    %v2974 = vadd.f32 0.0, %v2973
    %2975 = vdwg.mxu0
    %v2978 = vrot.slane %v2972, 6
    %v2979 = vrot.slane %v2974, 6
    %v2982 = vadd.f32 %v183, %v2978
    %v2983 = vadd.f32 %v185, %v2979
    %v2984 = vxor.u32 %v2982, 2147483648
    %v2985 = vmul.f32 %v2984, 1.442695
    %v2986 = vpow.pop %v2985
    %v2987 = vadd.f32 %v2986, 1.0
    %v2988 = vrcp.pop %v2987
    %v2989 = vmul.f32 1.0, %v2988
    %v2990 = vtanh.pop %v2983
    %v2991 = vxor.u32 %v2983, 2147483648
    %v2992 = vmul.f32 %v2991, 1.442695
    %v2993 = vpow.pop %v2992
    %v2994 = vadd.f32 %v2993, 1.0
    %v2995 = vrcp.pop %v2994
    %v2996 = vmul.f32 1.0, %v2995
    %v2998 = vrot.slane %v2897, 6
    %v3000 = vmul.f32 %v2989, %v2998
    %v3001 = vmul.f32 %v2989, %v2990
    %3003 = vrot.lane.b32.xlu0 %v3001, 64
    %v3004 = vpop.permute.xlu0 %3003
    %v3006 = vadd.f32 %v3000, %v3004
    %v3007 = vtanh.pop %v3006
    %v3008 = vmul.f32 %v2996, %v3007
    %v3010 = vrot.slane %v3008, 2
    %3011 = vrot.lane.b32.xlu0 %v3010, 64
    %v3012 = vpop.permute.xlu0 %3011
    %v3013 = vsel %vm203, %v3012, 0
    %3015 = vmatprep.subr.mxu0 %v188
    %3016 = vmatpush1.msra.mxu0 %v187
    %3017 = vmatprep.subr.mxu0 %v190
    %3018 = vmatpush1.msra.mxu0 %v189
    %3019 = vmatprep.subr.mxu0 %v192
    %3020 = vmatpush1.msra.mxu0 %v191
    %3021 = vmatprep.subr.mxu0 %v194
    %3022 = vmatpush1.msra.mxu0 %v193
    %3023 = vmatprep.subr.mxu0 %v196
    %3024 = vmatpush1.msra.mxu0 %v195
    %3025 = vmatprep.subr.mxu0 %v198
    %3026 = vmatpush1.msra.mxu0 %v197
    %3027 = vmatprep.subr.mxu0 %v200
    %3028 = vmatpush1.msra.mxu0 %v199
    %3029 = vmatprep.subr.mxu0 %v202
    %3030 = vmatpush1.msra.mxu0 %v201
    %3031 = vmatprep.subr.mxu0 0.0
    %3032 = vmatpush1.msra.mxu0 0.0
    %3033 = vmatprep.subr.mxu0 0.0
    %3034 = vmatpush1.msra.mxu0 0.0
    %3035 = vmatprep.subr.mxu0 0.0
    %3036 = vmatpush1.msra.mxu0 0.0
    %3037 = vmatprep.subr.mxu0 0.0
    %3038 = vmatpush1.msra.mxu0 0.0
    %3039 = vmatprep.subr.mxu0 0.0
    %3040 = vmatpush1.msra.mxu0 0.0
    %3041 = vmatprep.subr.mxu0 0.0
    %3042 = vmatpush1.msra.mxu0 0.0
    %3043 = vmatprep.subr.mxu0 0.0
    %3044 = vmatpush1.msra.mxu0 0.0
    %3045 = vmatprep.subr.mxu0 0.0
    %3046 = vmatpush1.msra.mxu0 0.0
    %3047 = vmatprep.subr.mxu0 0.0
    %3048 = vmatpush1.msra.mxu0 0.0
    %3049 = vmatprep.subr.mxu0 0.0
    %3050 = vmatpush1.msra.mxu0 0.0
    %3051 = vmatprep.subr.mxu0 0.0
    %3052 = vmatpush1.msra.mxu0 0.0
    %3053 = vmatprep.subr.mxu0 0.0
    %3054 = vmatpush1.msra.mxu0 0.0
    %3055 = vmatprep.subr.mxu0 0.0
    %3056 = vmatpush1.msra.mxu0 0.0
    %3057 = vmatprep.subr.mxu0 0.0
    %3058 = vmatpush1.msra.mxu0 0.0
    %3059 = vmatprep.subr.mxu0 0.0
    %3060 = vmatpush1.msra.mxu0 0.0
    %3061 = vmatprep.subr.mxu0 0.0
    %3062 = vmatpush1.msra.mxu0 0.0
    %3063 = vmatprep.subr.mxu0 0.0
    %3064 = vmatpush1.msra.mxu0 0.0
    %3065 = vmatprep.subr.mxu0 0.0
    %3066 = vmatpush1.msra.mxu0 0.0
    %3067 = vmatprep.subr.mxu0 0.0
    %3068 = vmatpush1.msra.mxu0 0.0
    %3069 = vmatprep.subr.mxu0 0.0
    %3070 = vmatpush1.msra.mxu0 0.0
    %3071 = vmatprep.subr.mxu0 0.0
    %3072 = vmatpush1.msra.mxu0 0.0
    %3073 = vmatprep.subr.mxu0 0.0
    %3074 = vmatpush1.msra.mxu0 0.0
    %3075 = vmatprep.subr.mxu0 0.0
    %3076 = vmatpush1.msra.mxu0 0.0
    %3077 = vmatprep.subr.mxu0 0.0
    %3078 = vmatpush1.msra.mxu0 0.0
    %3079 = vmatprep.mubr.f32.mxu0 0.0
    %3080 = vmatmul.mubr.f32.gmra.mrb[0].mxu0 %v3013
    %v3081 = vpop.f32.mrb[0].mxu0
    %v3082 = vadd.f32 0.0, %v3081
    %v3083 = vpop.f32.mrb[0].mxu0
    %v3084 = vadd.f32 0.0, %v3083
    %3085 = vdwg.mxu0
    %v3088 = vrot.slane %v3082, 4
    %v3089 = vrot.slane %v3084, 4
    %v3092 = vadd.f32 %v183, %v3088
    %v3093 = vadd.f32 %v185, %v3089
    %v3094 = vxor.u32 %v3092, 2147483648
    %v3095 = vmul.f32 %v3094, 1.442695
    %v3096 = vpow.pop %v3095
    %v3097 = vadd.f32 %v3096, 1.0
    %v3098 = vrcp.pop %v3097
    %v3099 = vmul.f32 1.0, %v3098
    %v3100 = vtanh.pop %v3093
    %v3101 = vxor.u32 %v3093, 2147483648
    %v3102 = vmul.f32 %v3101, 1.442695
    %v3103 = vpow.pop %v3102
    %v3104 = vadd.f32 %v3103, 1.0
    %v3105 = vrcp.pop %v3104
    %v3106 = vmul.f32 1.0, %v3105
    %v3108 = vrot.slane %v3006, 6
    %v3110 = vmul.f32 %v3099, %v3108
    %v3111 = vmul.f32 %v3099, %v3100
    %3113 = vrot.lane.b32.xlu0 %v3111, 64
    %v3114 = vpop.permute.xlu0 %3113
    %v3116 = vadd.f32 %v3110, %v3114
    %v3117 = vtanh.pop %v3116
    %v3118 = vmul.f32 %v3106, %v3117
    %v3120 = vrot.slane %v3118, 4
    %3121 = vrot.lane.b32.xlu0 %v3120, 64
    %v3122 = vpop.permute.xlu0 %3121
    %v3123 = vsel %vm203, %v3122, 0
    %3125 = vmatprep.subr.mxu0 %v188
    %3126 = vmatpush1.msra.mxu0 %v187
    %3127 = vmatprep.subr.mxu0 %v190
    %3128 = vmatpush1.msra.mxu0 %v189
    %3129 = vmatprep.subr.mxu0 %v192
    %3130 = vmatpush1.msra.mxu0 %v191
    %3131 = vmatprep.subr.mxu0 %v194
    %3132 = vmatpush1.msra.mxu0 %v193
    %3133 = vmatprep.subr.mxu0 %v196
    %3134 = vmatpush1.msra.mxu0 %v195
    %3135 = vmatprep.subr.mxu0 %v198
    %3136 = vmatpush1.msra.mxu0 %v197
    %3137 = vmatprep.subr.mxu0 %v200
    %3138 = vmatpush1.msra.mxu0 %v199
    %3139 = vmatprep.subr.mxu0 %v202
    %3140 = vmatpush1.msra.mxu0 %v201
    %3141 = vmatprep.subr.mxu0 0.0
    %3142 = vmatpush1.msra.mxu0 0.0
    %3143 = vmatprep.subr.mxu0 0.0
    %3144 = vmatpush1.msra.mxu0 0.0
    %3145 = vmatprep.subr.mxu0 0.0
    %3146 = vmatpush1.msra.mxu0 0.0
    %3147 = vmatprep.subr.mxu0 0.0
    %3148 = vmatpush1.msra.mxu0 0.0
    %3149 = vmatprep.subr.mxu0 0.0
    %3150 = vmatpush1.msra.mxu0 0.0
    %3151 = vmatprep.subr.mxu0 0.0
    %3152 = vmatpush1.msra.mxu0 0.0
    %3153 = vmatprep.subr.mxu0 0.0
    %3154 = vmatpush1.msra.mxu0 0.0
    %3155 = vmatprep.subr.mxu0 0.0
    %3156 = vmatpush1.msra.mxu0 0.0
    %3157 = vmatprep.subr.mxu0 0.0
    %3158 = vmatpush1.msra.mxu0 0.0
    %3159 = vmatprep.subr.mxu0 0.0
    %3160 = vmatpush1.msra.mxu0 0.0
    %3161 = vmatprep.subr.mxu0 0.0
    %3162 = vmatpush1.msra.mxu0 0.0
    %3163 = vmatprep.subr.mxu0 0.0
    %3164 = vmatpush1.msra.mxu0 0.0
    %3165 = vmatprep.subr.mxu0 0.0
    %3166 = vmatpush1.msra.mxu0 0.0
    %3167 = vmatprep.subr.mxu0 0.0
    %3168 = vmatpush1.msra.mxu0 0.0
    %3169 = vmatprep.subr.mxu0 0.0
    %3170 = vmatpush1.msra.mxu0 0.0
    %3171 = vmatprep.subr.mxu0 0.0
    %3172 = vmatpush1.msra.mxu0 0.0
    %3173 = vmatprep.subr.mxu0 0.0
    %3174 = vmatpush1.msra.mxu0 0.0
    %3175 = vmatprep.subr.mxu0 0.0
    %3176 = vmatpush1.msra.mxu0 0.0
    %3177 = vmatprep.subr.mxu0 0.0
    %3178 = vmatpush1.msra.mxu0 0.0
    %3179 = vmatprep.subr.mxu0 0.0
    %3180 = vmatpush1.msra.mxu0 0.0
    %3181 = vmatprep.subr.mxu0 0.0
    %3182 = vmatpush1.msra.mxu0 0.0
    %3183 = vmatprep.subr.mxu0 0.0
    %3184 = vmatpush1.msra.mxu0 0.0
    %3185 = vmatprep.subr.mxu0 0.0
    %3186 = vmatpush1.msra.mxu0 0.0
    %3187 = vmatprep.subr.mxu0 0.0
    %3188 = vmatpush1.msra.mxu0 0.0
    %3189 = vmatprep.mubr.f32.mxu0 0.0
    %3190 = vmatmul.mubr.f32.gmra.mrb[0].mxu0 %v3123
    %v3191 = vpop.f32.mrb[0].mxu0
    %v3192 = vadd.f32 0.0, %v3191
    %v3193 = vpop.f32.mrb[0].mxu0
    %v3194 = vadd.f32 0.0, %v3193
    %3195 = vdwg.mxu0
    %v3198 = vrot.slane %v3192, 2
    %v3199 = vrot.slane %v3194, 2
    %v3202 = vadd.f32 %v183, %v3198
    %v3203 = vadd.f32 %v185, %v3199
    %v3204 = vxor.u32 %v3202, 2147483648
    %v3205 = vmul.f32 %v3204, 1.442695
    %v3206 = vpow.pop %v3205
    %v3207 = vadd.f32 %v3206, 1.0
    %v3208 = vrcp.pop %v3207
    %v3209 = vmul.f32 1.0, %v3208
    %v3210 = vtanh.pop %v3203
    %v3211 = vxor.u32 %v3203, 2147483648
    %v3212 = vmul.f32 %v3211, 1.442695
    %v3213 = vpow.pop %v3212
    %v3214 = vadd.f32 %v3213, 1.0
    %v3215 = vrcp.pop %v3214
    %v3216 = vmul.f32 1.0, %v3215
    %v3218 = vrot.slane %v3116, 6
    %v3220 = vmul.f32 %v3209, %v3218
    %v3221 = vmul.f32 %v3209, %v3210
    %3223 = vrot.lane.b32.xlu0 %v3221, 64
    %v3224 = vpop.permute.xlu0 %3223
    %v3226 = vadd.f32 %v3220, %v3224
    %v3227 = vtanh.pop %v3226
    %v3228 = vmul.f32 %v3216, %v3227
    %v3229 = vld [vmem:[%s4] sm:$0xff]
    %v3230 = vld [vmem:[%s4 + $0x8] sm:$0xff]
    %v3231 = vld [vmem:[%s4 + $0x10] sm:$0xff]
    %v3232 = vld [vmem:[%s4 + $0x18] sm:$0xff]
    %v3233 = vld [vmem:[%s4 + $0x20] sm:$0xff]
    %v3234 = vld [vmem:[%s4 + $0x28] sm:$0xff]
    %v3235 = vld [vmem:[%s4 + $0x30] sm:$0xff]
    %v3236 = vld [vmem:[%s4 + $0x38] sm:$0xff]
    %v3237 = vld [vmem:[%s5] sm:$0x1]
    %v3239 = vlaneseq
    %v3240 = vshrl.u32 %v3239, 7
    %v3241 = vsub.s32 0, %v3240
    %v3242 = vrot.slane %v3237, %v3241
    %v3245 = vrot.slane %v3228, 6
    %3246 = vrot.lane.b32.xlu0 %v3245, 64
    %v3247 = vpop.permute.xlu0 %3246
    %v3248 = vsel %vm203, %v3247, 0
    %3250 = vmatprep.subr.mxu0 0.0
    %3251 = vmatpush1.msra.mxu0 %v3229
    %3252 = vmatprep.subr.mxu0 0.0
    %3253 = vmatpush1.msra.mxu0 %v3230
    %3254 = vmatprep.subr.mxu0 0.0
    %3255 = vmatpush1.msra.mxu0 %v3231
    %3256 = vmatprep.subr.mxu0 0.0
    %3257 = vmatpush1.msra.mxu0 %v3232
    %3258 = vmatprep.subr.mxu0 0.0
    %3259 = vmatpush1.msra.mxu0 %v3233
    %3260 = vmatprep.subr.mxu0 0.0
    %3261 = vmatpush1.msra.mxu0 %v3234
    %3262 = vmatprep.subr.mxu0 0.0
    %3263 = vmatpush1.msra.mxu0 %v3235
    %3264 = vmatprep.subr.mxu0 0.0
    %3265 = vmatpush1.msra.mxu0 %v3236
    %3266 = vmatprep.subr.mxu0 0.0
    %3267 = vmatpush1.msra.mxu0 0.0
    %3268 = vmatprep.subr.mxu0 0.0
    %3269 = vmatpush1.msra.mxu0 0.0
    %3270 = vmatprep.subr.mxu0 0.0
    %3271 = vmatpush1.msra.mxu0 0.0
    %3272 = vmatprep.subr.mxu0 0.0
    %3273 = vmatpush1.msra.mxu0 0.0
    %3274 = vmatprep.subr.mxu0 0.0
    %3275 = vmatpush1.msra.mxu0 0.0
    %3276 = vmatprep.subr.mxu0 0.0
    %3277 = vmatpush1.msra.mxu0 0.0
    %3278 = vmatprep.subr.mxu0 0.0
    %3279 = vmatpush1.msra.mxu0 0.0
    %3280 = vmatprep.subr.mxu0 0.0
    %3281 = vmatpush1.msra.mxu0 0.0
    %3282 = vmatprep.subr.mxu0 0.0
    %3283 = vmatpush1.msra.mxu0 0.0
    %3284 = vmatprep.subr.mxu0 0.0
    %3285 = vmatpush1.msra.mxu0 0.0
    %3286 = vmatprep.subr.mxu0 0.0
    %3287 = vmatpush1.msra.mxu0 0.0
    %3288 = vmatprep.subr.mxu0 0.0
    %3289 = vmatpush1.msra.mxu0 0.0
    %3290 = vmatprep.subr.mxu0 0.0
    %3291 = vmatpush1.msra.mxu0 0.0
    %3292 = vmatprep.subr.mxu0 0.0
    %3293 = vmatpush1.msra.mxu0 0.0
    %3294 = vmatprep.subr.mxu0 0.0
    %3295 = vmatpush1.msra.mxu0 0.0
    %3296 = vmatprep.subr.mxu0 0.0
    %3297 = vmatpush1.msra.mxu0 0.0
    %3298 = vmatprep.subr.mxu0 0.0
    %3299 = vmatpush1.msra.mxu0 0.0
    %3300 = vmatprep.subr.mxu0 0.0
    %3301 = vmatpush1.msra.mxu0 0.0
    %3302 = vmatprep.subr.mxu0 0.0
    %3303 = vmatpush1.msra.mxu0 0.0
    %3304 = vmatprep.subr.mxu0 0.0
    %3305 = vmatpush1.msra.mxu0 0.0
    %3306 = vmatprep.subr.mxu0 0.0
    %3307 = vmatpush1.msra.mxu0 0.0
    %3308 = vmatprep.subr.mxu0 0.0
    %3309 = vmatpush1.msra.mxu0 0.0
    %3310 = vmatprep.subr.mxu0 0.0
    %3311 = vmatpush1.msra.mxu0 0.0
    %3312 = vmatprep.subr.mxu0 0.0
    %3313 = vmatpush1.msra.mxu0 0.0
    %3314 = vmatprep.mubr.f32.mxu0 0.0
    %3315 = vmatmul.mubr.f32.gmra.mrb[0].mxu0 %v3248
    %v3316 = vpop.f32.mrb[0].mxu0
    %v3317 = vadd.f32 %v3242, %v3316
    %v3318 = vpop.f32.mrb[0].mxu0
    %3319 = vdwg.mxu0
    %3320 = vst [vmem:[#allocation2] sm:$0x3] %v3317
    // Predicated region
    $region26: #{lstm_forward.1} parent=1 // pred_check
      _
    $region27: #{lstm_forward.1} parent=1 // pred_check_branch
      %3322 = sbr.rel (0) target = $region29
    $region28: #{lstm_forward.1} parent=1 // pred_region
      %s3324 = ssub.s32 32, 32
      %3325 = vsyncadd [#allocation3], %s3324
      %s3327 = sshll.u32 [#allocation2], 4
      %s3328 = int_to_ptr.vmem [resolvable:$true] %s3327
      %3330 = dma.vmem_to_hbm [thread:$0]  %s3328, 32, %s6, [#allocation3]
    $region29: #{lstm_forward.1} parent=1 // pred_fallthru
      _
    // Predicated region
    $region30: #{lstm_forward.1} parent=1 // pred_check
      _
    $region31: #{lstm_forward.1} parent=1 // pred_check_branch
      %3332 = sbr.rel (0) target = $region33
    $region32: #{lstm_forward.1} parent=1 // pred_region
      %3333 = dma.done [#allocation3], 32
    $region33: #{lstm_forward.1} parent=1 // pred_fallthru
      _
    %3334 = vsyncpa [#allocation3], 1

</llo_original>
